<compile_context>
chip_gen: v7x
topology: tpu7x:2x2x1
jax: 0.10.0
libtpu: 0.0.40
codegen_flags: <defaults>
</compile_context>

<pallas_src>
import jax
import jax.numpy as jnp
from jax.experimental import pallas as pl
from jax.experimental.pallas import tpu as pltpu

HID = 128          # LSTM hidden size
MID = 32           # classifier intermediate width (Linear(128, 32))
C1 = 32            # conv1 out channels (PyTorch)
C1P = 128          # conv1 out channels padded to a full lane width
C2 = 64            # conv2 out channels
K_CONV = 4
STRIDE = 2
PAD = 1


def conv_out(n):
    return (n + 2 * PAD - K_CONV) // STRIDE + 1


# ----------------------------------------------------------------------------
# Pallas kernels
# ----------------------------------------------------------------------------
def _matmul_bias_relu_kernel(x_ref, w_ref, b_ref, o_ref):
    # o = relu(x @ w + b); grid over M rows, weight/bias blocks are constant-index
    # so they are DMA'd only once.
    w = w_ref[...]
    y = jnp.dot(x_ref[...].astype(w.dtype), w, preferred_element_type=jnp.float32)
    o_ref[...] = jnp.maximum(y + b_ref[...], 0.0)


def _fused_lstm_head_kernel(x_ref, w0_ref, b0_ref, w1_ref, b1_ref,
                            fc1w_ref, fc1b_ref, fc2w_ref, fc2b_ref,
                            o_ref, g0_acc):
    # Layer-0 input matmul is K-tiled over the grid; everything downstream
    # (layer-0 nonlinearity, layer-1 cell, MLP head, softmax(dim=0)) runs once on
    # the last grid step.  Zero initial (h, c) => the recurrent h0 @ w_hh term and
    # the forget-gate contribution f*c0 are identically zero, so neither is
    # computed (and w_hh is never loaded).  PyTorch gate order is (i, f, g, o).
    k = pl.program_id(0)

    @pl.when(k == 0)
    def _():
        g0_acc[...] = jnp.zeros_like(g0_acc)

    w0 = w0_ref[...]
    g0_acc[...] += jnp.dot(x_ref[...].astype(w0.dtype), w0,
                           preferred_element_type=jnp.float32)

    @pl.when(k == pl.num_programs(0) - 1)
    def _():
        gates0 = g0_acc[...] + b0_ref[...]
        i0 = jax.nn.sigmoid(gates0[:, 0 * HID:1 * HID])
        g0 = jnp.tanh(gates0[:, 2 * HID:3 * HID])
        o0 = jax.nn.sigmoid(gates0[:, 3 * HID:4 * HID])
        h1 = o0 * jnp.tanh(i0 * g0)                       # c0 = 0 -> c = i*g

        # TODO(synk): nn.LSTM inter-layer dropout=0.2 is train-mode stochastic;
        # implemented here as eval-mode identity.
        w1 = w1_ref[...]
        gates1 = (jnp.dot(h1.astype(w1.dtype), w1, preferred_element_type=jnp.float32)
                  + b1_ref[...])
        i1 = jax.nn.sigmoid(gates1[:, 0 * HID:1 * HID])
        g1 = jnp.tanh(gates1[:, 2 * HID:3 * HID])
        o1 = jax.nn.sigmoid(gates1[:, 3 * HID:4 * HID])
        h2 = o1 * jnp.tanh(i1 * g1)                       # == hidden[0][-1]

        # classifier: ReLU -> Linear(128,32) -> ReLU -> Linear(32,out) -> Softmax(dim=0)
        x = jnp.maximum(h2, 0.0)
        fc1w = fc1w_ref[...]
        y = jnp.maximum(jnp.dot(x.astype(fc1w.dtype), fc1w,
                                preferred_element_type=jnp.float32) + fc1b_ref[...], 0.0)
        fc2w = fc2w_ref[...]
        z = (jnp.dot(y.astype(fc2w.dtype), fc2w, preferred_element_type=jnp.float32)
             + fc2b_ref[...])
        z = z - jnp.max(z, axis=0, keepdims=True)         # softmax over dim=0 (batch)
        e = jnp.exp(z)
        o_ref[...] = e * pl.reciprocal(jnp.sum(e, axis=0, keepdims=True), approx=False)


# ----------------------------------------------------------------------------
# Pallas wrappers
# ----------------------------------------------------------------------------
def _pick_tm(M, target=512):
    """Largest divisor of M (multiple of 8) <= target; M itself if small."""
    if M <= target:
        return M
    for cand in range((target // 8) * 8, 7, -8):
        if M % cand == 0:
            return cand
    return target   # falls back to Pallas partial-block masking on the last tile


def matmul_bias_relu(x, w, b, *, tm_target=512):
    # Conv-as-matmul.  Conv1's Cout is padded to 128 lanes (see prepare_params) so
    # its output stores are unmasked/lane-dense; conv2 keeps N=64 (padding it would
    # double the downstream l0_wih stream).
    M, K = x.shape
    N = w.shape[1]
    tm = _pick_tm(M, tm_target)
    return pl.pallas_call(
        _matmul_bias_relu_kernel,
        out_shape=jax.ShapeDtypeStruct((M, N), jnp.float32),
        grid=(pl.cdiv(M, tm),),
        in_specs=[pl.BlockSpec((tm, K), lambda i: (i, 0)),
                  pl.BlockSpec((K, N), lambda i: (0, 0)),
                  pl.BlockSpec((1, N), lambda i: (0, 0))],
        out_specs=pl.BlockSpec((tm, N), lambda i: (i, 0)),
        compiler_params=pltpu.CompilerParams(dimension_semantics=("parallel",)),
    )(x, w, b)


def _pick_tk(K, itemsize, budget_bytes, nbuf=3):
    """Choose the layer-0 K tile so `nbuf` in-flight w0 blocks fit `budget_bytes`.
    Returns (tk, K_padded).  Prefers an exact multiple-of-128 divisor of K; if none
    exists it falls back to a 128-multiple tile with K zero-padded (never tk=K)."""
    max_tk = budget_bytes // (nbuf * 4 * HID * itemsize)
    max_tk = max(128, (max_tk // 128) * 128)
    if K <= max_tk:
        return K, K
    for cand in range(max_tk, 127, -128):
        if K % cand == 0:
            return cand, K
    tk = max_tk
    return tk, pl.cdiv(K, tk) * tk


def lstm_head(feat, w0, b0, w1, b1, fc1w, fc1b, fc2w, fc2b, *,
              w0_stream_budget=12 << 20):
    """Fused LSTM layer 0 (K-tiled) + LSTM layer 1 + classifier + softmax(dim=0)."""
    B, K = feat.shape
    out = fc2w.shape[1]
    w_itemsize = jnp.dtype(w0.dtype).itemsize

    tk, Kp = _pick_tk(K, w_itemsize, w0_stream_budget)
    if Kp != K:
        # Guarded fallback path: zero-padded rows/cols contribute 0 to the gates.
        feat = jnp.pad(feat, ((0, 0), (0, Kp - K)))
        w0 = jnp.pad(w0, ((0, Kp - K), (0, 0)))
    nsteps = Kp // tk
    nbuf = 3 if nsteps >= 3 else 2

    # Keep >= 2-3 weight DMAs in flight so per-step overhead never gaps the HBM stream.
    w0_spec_kwargs = {"pipeline_mode": pl.Buffered(3)} if nsteps >= 3 else {}
    w0_spec = pl.BlockSpec((tk, 4 * HID), lambda k: (k, 0), **w0_spec_kwargs)

    # Explicit VMEM limit sized from the tiles (v5e default scoped VMEM is only
    # 16 MiB; v7x physical is 64 MiB, so cap with headroom).
    vmem_bytes = (nbuf * tk * 4 * HID * w_itemsize                       # w0 stream
                  + 2 * B * tk * jnp.dtype(feat.dtype).itemsize          # feat stream
                  + 2 * (HID * 4 * HID + HID * MID + MID * out) * w_itemsize
                  + B * 4 * HID * 4                                      # gate scratch
                  + (8 << 20))                                           # margin
    vmem_bytes = int(min(max(vmem_bytes, 32 << 20), 48 << 20))

    return pl.pallas_call(
        _fused_lstm_head_kernel,
        out_shape=jax.ShapeDtypeStruct((B, out), jnp.float32),
        grid=(nsteps,),
        in_specs=[
            pl.BlockSpec((B, tk), lambda k: (0, k)),            # feat (K-tiled)
            w0_spec,                                            # l0 w_ih (K-tiled)
            pl.BlockSpec((1, 4 * HID), lambda k: (0, 0)),       # l0 bias
            pl.BlockSpec((HID, 4 * HID), lambda k: (0, 0)),     # l1 w_ih
            pl.BlockSpec((1, 4 * HID), lambda k: (0, 0)),       # l1 bias
            pl.BlockSpec((HID, MID), lambda k: (0, 0)),         # fc1 w
            pl.BlockSpec((1, MID), lambda k: (0, 0)),           # fc1 b
            pl.BlockSpec((MID, out), lambda k: (0, 0)),         # fc2 w
            pl.BlockSpec((1, out), lambda k: (0, 0)),           # fc2 b
        ],
        out_specs=pl.BlockSpec((B, out), lambda k: (0, 0)),
        scratch_shapes=[pltpu.VMEM((B, 4 * HID), jnp.float32)],  # layer-0 gate accumulator
        compiler_params=pltpu.CompilerParams(
            dimension_semantics=("arbitrary",),
            vmem_limit_bytes=vmem_bytes),
    )(feat, w0, b0, w1, b1, fc1w, fc1b, fc2w, fc2b)
    # TODO(synk): on v7x the pure-reduction grid runs on one TC; splitting the K
    # reduction across both cores (or keeping the bf16 l0_wih VMEM-resident across
    # repeated rollout calls via cross-call DMA futures) is a further ~2x on the
    # dominant stream if a single TC doesn't already saturate HBM.


# ----------------------------------------------------------------------------
# Glue: NHWC im2col, one-time parameter preparation, forward
# ----------------------------------------------------------------------------
def im2col_nhwc(x, k, stride, pad):
    """x: (B, H, W, C) -> patches (B*Ho*Wo, k*k*C), column order (kh, kw, c)."""
    B, H, W, C = x.shape
    xp = jnp.pad(x, ((0, 0), (pad, pad), (pad, pad), (0, 0)))
    Ho = (H + 2 * pad - k) // stride + 1
    Wo = (W + 2 * pad - k) // stride + 1
    cols = []
    for i in range(k):
        for j in range(k):
            cols.append(xp[:, i:i + stride * Ho:stride, j:j + stride * Wo:stride, :])
    patches = jnp.stack(cols, axis=3)                      # (B, Ho, Wo, k*k, C)
    return patches.reshape(B * Ho * Wo, k * k * C), Ho, Wo


def init_torch_params(key, in_channels, feat_size, output_size):
    """PyTorch-layout synthetic parameters (same layout as the nn.Module)."""
    ks = jax.random.split(key, 12)

    def rnd(k, shape, fan_in):
        return jax.random.normal(k, shape, jnp.float32) / jnp.sqrt(jnp.float32(fan_in))

    p = {}
    p["c1_w"] = rnd(ks[0], (C1, in_channels, 4, 4), in_channels * 16)
    p["c1_b"] = rnd(ks[1], (C1,), in_channels * 16)
    p["c2_w"] = rnd(ks[2], (C2, C1, 4, 4), C1 * 16)
    p["c2_b"] = rnd(ks[3], (C2,), C1 * 16)
    p["l0_wih"] = rnd(ks[4], (4 * HID, feat_size), feat_size)
    p["l0_bih"] = jnp.zeros((4 * HID,), jnp.float32)
    p["l0_bhh"] = jnp.zeros((4 * HID,), jnp.float32)
    p["l1_wih"] = rnd(ks[6], (4 * HID, HID), HID)
    p["l1_bih"] = jnp.zeros((4 * HID,), jnp.float32)
    p["l1_bhh"] = jnp.zeros((4 * HID,), jnp.float32)
    p["fc1_w"] = rnd(ks[8], (MID, HID), HID)
    p["fc1_b"] = rnd(ks[9], (MID,), HID)
    p["fc2_w"] = rnd(ks[10], (output_size, MID), MID)
    p["fc2_b"] = rnd(ks[11], (output_size,), MID)
    # Note: w_hh (both layers) and the forget-gate contribution are dead work given
    # zero initial state, so they are intentionally not materialized at all.
    return p


def prepare_params(p, H, W, matmul_dtype=jnp.bfloat16):
    """One-time conversion to kernel-ready layout: pre-transposed, im2col/NHWC row
    permutation applied, biases combined & reshaped to (1, N), conv1 Cout padded to
    a full 128-lane width (absorbed as zero rows in conv2's weight).  matmul_dtype
    defaults to bf16 (halves HBM traffic on the dominant l0_wih stream; all matmuls
    still accumulate in f32).  Biases stay f32."""
    H1, W1 = conv_out(H), conv_out(W)
    H2, W2 = conv_out(H1), conv_out(W1)

    kp = {}
    # conv1: (Cout=32, Cin, 4, 4) -> (kh*kw*Cin, 32) -> pad columns to 128 lanes.
    w1 = p["c1_w"].transpose(2, 3, 1, 0).reshape(-1, C1)
    kp["c1_w"] = jnp.pad(w1, ((0, 0), (0, C1P - C1))).astype(matmul_dtype)
    kp["c1_b"] = jnp.pad(p["c1_b"], (0, C1P - C1)).reshape(1, -1)        # f32
    # conv2: (64, 32, 4, 4) -> (kh, kw, Cin, Cout); pad Cin 32->128 with zero rows
    # (matches the padded conv1 output channels), then flatten to (kh*kw*128, 64).
    w2 = p["c2_w"].transpose(2, 3, 1, 0)                                  # (4,4,32,64)
    w2 = jnp.pad(w2, ((0, 0), (0, 0), (0, C1P - C1), (0, 0)))             # (4,4,128,64)
    kp["c2_w"] = w2.reshape(-1, C2).astype(matmul_dtype)
    kp["c2_b"] = p["c2_b"].reshape(1, -1)

    # l0_wih columns index PyTorch's NCHW flatten order (c, h, w); permute rows once
    # so the kernel consumes the NHWC flatten (h, w, c) directly -> no activation
    # transposes in the forward.
    perm = jnp.arange(C2 * H2 * W2).reshape(C2, H2, W2).transpose(1, 2, 0).reshape(-1)
    kp["l0_wih"] = p["l0_wih"].T[perm, :].astype(matmul_dtype)            # (feat, 4*HID)
    kp["l0_b"] = (p["l0_bih"] + p["l0_bhh"]).reshape(1, -1)
    kp["l1_wih"] = p["l1_wih"].T.astype(matmul_dtype)                     # (HID, 4*HID)
    kp["l1_b"] = (p["l1_bih"] + p["l1_bhh"]).reshape(1, -1)
    kp["fc1_w"] = p["fc1_w"].T.astype(matmul_dtype)
    kp["fc1_b"] = p["fc1_b"].reshape(1, -1)
    kp["fc2_w"] = p["fc2_w"].T.astype(matmul_dtype)
    kp["fc2_b"] = p["fc2_b"].reshape(1, -1)
    return kp


@jax.jit
def smol_actor_forward(x, kp):
    """x: (B, C, H, W) float32 (NCHW, PyTorch convention)."""
    B = x.shape[0]
    x = x.transpose(0, 2, 3, 1)                              # single tiny NCHW->NHWC transpose

    # conv1 + ReLU (NHWC im2col + Pallas matmul kernel); output is lane-dense (128 ch)
    p1, H1, W1 = im2col_nhwc(x, K_CONV, STRIDE, PAD)
    y1 = matmul_bias_relu(p1, kp["c1_w"], kp["c1_b"])        # (B*H1*W1, 128)

    # conv2 + ReLU (stay NHWC — no layout transposes; padded channels hit zero rows)
    p2, H2, W2 = im2col_nhwc(y1.reshape(B, H1, W1, C1P), K_CONV, STRIDE, PAD)
    y2 = matmul_bias_relu(p2, kp["c2_w"], kp["c2_b"])        # (B*H2*W2, 64)

    feat = y2.reshape(B, H2 * W2 * C2)                       # NHWC flatten (l0_wih pre-permuted)

    # Fused: LSTM layer 0 (K-tiled, VMEM-budget-derived tk) + LSTM layer 1 +
    # classifier + softmax(dim=0).
    return lstm_head(feat, kp["l0_wih"], kp["l0_b"], kp["l1_wih"], kp["l1_b"],
                     kp["fc1_w"], kp["fc1_b"], kp["fc2_w"], kp["fc2_b"])


if __name__ == "__main__":
    key = jax.random.PRNGKey(0)
    k_x, k_p = jax.random.split(key)

    B, C, H, W = 2, 4, 16, 16              # small NCHW input
    output_size = 8
    H2 = conv_out(conv_out(H))
    W2 = conv_out(conv_out(W))
    feat_size = C2 * H2 * W2               # 1024 (module hard-codes 19200 for its real input)

    x = jax.random.normal(k_x, (B, C, H, W), jnp.float32)
    torch_params = init_torch_params(k_p, C, feat_size, output_size)
    kparams = prepare_params(torch_params, H, W)   # one-time, outside the jitted forward

    out = smol_actor_forward(x, kparams)
    out = jax.block_until_ready(out)

    assert out.shape == (B, output_size)
    # softmax(dim=0): each column sums to 1 over the batch axis
    assert bool(jnp.allclose(jnp.sum(out, axis=0), 1.0, atol=1e-5))
    print("KERNEL_OK")
</pallas_src>

<mosaic_0001>
module attributes {stable_mosaic.version = 11 : i64} {
  func.func @_matmul_bias_relu_kernel(%arg0: i32, %arg1: memref<128x64xf32, #tpu.memory_space<vmem>>, %arg2: memref<64x128xbf16, #tpu.memory_space<vmem>>, %arg3: memref<1x128xf32, #tpu.memory_space<vmem>>, %arg4: memref<128x128xf32, #tpu.memory_space<vmem>>) attributes {dimension_semantics = [#tpu.dimension_semantics<parallel>], iteration_bounds = array<i64: 1>, scalar_prefetch = 0 : i64, scratch_operands = 0 : i64, tpu.core_type = #tpu.core_type<tc>, window_params = [{transform_indices = @transform_0, window_bounds = array<i64: 128, 64>}, {pipeline_mode = #tpu.pipeline_mode<synchronous>, transform_indices = @transform_1, window_bounds = array<i64: 64, 128>}, {pipeline_mode = #tpu.pipeline_mode<synchronous>, transform_indices = @transform_2, window_bounds = array<i64: 1, 128>}, {transform_indices = @transform_3, window_bounds = array<i64: 128, 128>}]} {
    %c0 = arith.constant 0 : index
    %c0_0 = arith.constant 0 : index
    %0 = vector.load %arg2[%c0, %c0_0] : memref<64x128xbf16, #tpu.memory_space<vmem>>, vector<64x128xbf16>
    %c0_1 = arith.constant 0 : index
    %c0_2 = arith.constant 0 : index
    %1 = vector.load %arg1[%c0_1, %c0_2] : memref<128x64xf32, #tpu.memory_space<vmem>>, vector<128x64xf32>
    %2 = arith.truncf %1 : vector<128x64xf32> to vector<128x64xbf16>
    %cst = arith.constant dense<0.000000e+00> : vector<128x128xf32>
    %3 = tpu.matmul %2, %0, %cst {dimension_numbers = #tpu.dot_dimension_numbers<[1], [0], [0], [1], [0, 0, 1, 1], [], []>} : vector<128x64xbf16>, vector<64x128xbf16>, vector<128x128xf32> -> vector<128x128xf32>
    %c0_3 = arith.constant 0 : index
    %c0_4 = arith.constant 0 : index
    %4 = vector.load %arg3[%c0_3, %c0_4] : memref<1x128xf32, #tpu.memory_space<vmem>>, vector<1x128xf32>
    %5 = vector.broadcast %4 : vector<1x128xf32> to vector<128x128xf32>
    %6 = arith.addf %3, %5 : vector<128x128xf32>
    %cst_5 = arith.constant 0.000000e+00 : f32
    %7 = vector.broadcast %cst_5 : f32 to vector<128x128xf32>
    %8 = arith.maximumf %6, %7 : vector<128x128xf32>
    %c0_6 = arith.constant 0 : index
    %c0_7 = arith.constant 0 : index
    %9 = vector.load %arg4[%c0_6, %c0_7] : memref<128x128xf32, #tpu.memory_space<vmem>>, vector<128x128xf32>
    tpu.vector_store %arg4[%c0_6, %c0_7], %8 {strides = array<i32>} : memref<128x128xf32, #tpu.memory_space<vmem>>, vector<128x128xf32>,
    return
  }
  func.func @transform_0(%arg0: i32) -> (i32, i32) {
    %c0_i32 = arith.constant 0 : i32
    %c0_i32_0 = arith.constant 0 : i32
    return %arg0, %c0_i32 : i32, i32
  }
  func.func @transform_1(%arg0: i32) -> (i32, i32) {
    %c0_i32 = arith.constant 0 : i32
    %c0_i32_0 = arith.constant 0 : i32
    %c0_i32_1 = arith.constant 0 : i32
    return %c0_i32, %c0_i32_0 : i32, i32
  }
  func.func @transform_2(%arg0: i32) -> (i32, i32) {
    %c0_i32 = arith.constant 0 : i32
    %c0_i32_0 = arith.constant 0 : i32
    %c0_i32_1 = arith.constant 0 : i32
    return %c0_i32, %c0_i32_0 : i32, i32
  }
  func.func @transform_3(%arg0: i32) -> (i32, i32) {
    %c0_i32 = arith.constant 0 : i32
    %c0_i32_0 = arith.constant 0 : i32
    return %arg0, %c0_i32 : i32, i32
  }
}

module attributes {stable_mosaic.version = 11 : i64} {
  func.func @_matmul_bias_relu_kernel(%arg0: i32, %arg1: memref<32x2048xf32, #tpu.memory_space<vmem>>, %arg2: memref<2048x64xbf16, #tpu.memory_space<vmem>>, %arg3: memref<1x64xf32, #tpu.memory_space<vmem>>, %arg4: memref<32x64xf32, #tpu.memory_space<vmem>>) attributes {dimension_semantics = [#tpu.dimension_semantics<parallel>], iteration_bounds = array<i64: 1>, scalar_prefetch = 0 : i64, scratch_operands = 0 : i64, tpu.core_type = #tpu.core_type<tc>, window_params = [{transform_indices = @transform_0, window_bounds = array<i64: 32, 2048>}, {pipeline_mode = #tpu.pipeline_mode<synchronous>, transform_indices = @transform_1, window_bounds = array<i64: 2048, 64>}, {pipeline_mode = #tpu.pipeline_mode<synchronous>, transform_indices = @transform_2, window_bounds = array<i64: 1, 64>}, {transform_indices = @transform_3, window_bounds = array<i64: 32, 64>}]} {
    %c0 = arith.constant 0 : index
    %c0_0 = arith.constant 0 : index
    %0 = vector.load %arg2[%c0, %c0_0] : memref<2048x64xbf16, #tpu.memory_space<vmem>>, vector<2048x64xbf16>
    %c0_1 = arith.constant 0 : index
    %c0_2 = arith.constant 0 : index
    %1 = vector.load %arg1[%c0_1, %c0_2] : memref<32x2048xf32, #tpu.memory_space<vmem>>, vector<32x2048xf32>
    %2 = arith.truncf %1 : vector<32x2048xf32> to vector<32x2048xbf16>
    %cst = arith.constant dense<0.000000e+00> : vector<32x64xf32>
    %3 = tpu.matmul %2, %0, %cst {dimension_numbers = #tpu.dot_dimension_numbers<[1], [0], [0], [1], [0, 0, 1, 1], [], []>} : vector<32x2048xbf16>, vector<2048x64xbf16>, vector<32x64xf32> -> vector<32x64xf32>
    %c0_3 = arith.constant 0 : index
    %c0_4 = arith.constant 0 : index
    %4 = vector.load %arg3[%c0_3, %c0_4] : memref<1x64xf32, #tpu.memory_space<vmem>>, vector<1x64xf32>
    %5 = vector.broadcast %4 : vector<1x64xf32> to vector<32x64xf32>
    %6 = arith.addf %3, %5 : vector<32x64xf32>
    %cst_5 = arith.constant 0.000000e+00 : f32
    %7 = vector.broadcast %cst_5 : f32 to vector<32x64xf32>
    %8 = arith.maximumf %6, %7 : vector<32x64xf32>
    %c0_6 = arith.constant 0 : index
    %c0_7 = arith.constant 0 : index
    %9 = vector.load %arg4[%c0_6, %c0_7] : memref<32x64xf32, #tpu.memory_space<vmem>>, vector<32x64xf32>
    tpu.vector_store %arg4[%c0_6, %c0_7], %8 {strides = array<i32>} : memref<32x64xf32, #tpu.memory_space<vmem>>, vector<32x64xf32>,
    return
  }
  func.func @transform_0(%arg0: i32) -> (i32, i32) {
    %c0_i32 = arith.constant 0 : i32
    %c0_i32_0 = arith.constant 0 : i32
    return %arg0, %c0_i32 : i32, i32
  }
  func.func @transform_1(%arg0: i32) -> (i32, i32) {
    %c0_i32 = arith.constant 0 : i32
    %c0_i32_0 = arith.constant 0 : i32
    %c0_i32_1 = arith.constant 0 : i32
    return %c0_i32, %c0_i32_0 : i32, i32
  }
  func.func @transform_2(%arg0: i32) -> (i32, i32) {
    %c0_i32 = arith.constant 0 : i32
    %c0_i32_0 = arith.constant 0 : i32
    %c0_i32_1 = arith.constant 0 : i32
    return %c0_i32, %c0_i32_0 : i32, i32
  }
  func.func @transform_3(%arg0: i32) -> (i32, i32) {
    %c0_i32 = arith.constant 0 : i32
    %c0_i32_0 = arith.constant 0 : i32
    return %arg0, %c0_i32 : i32, i32
  }
}

module attributes {stable_mosaic.version = 11 : i64} {
  func.func @_fused_lstm_head_kernel(%arg0: i32, %arg1: memref<2x1024xf32, #tpu.memory_space<vmem>>, %arg2: memref<1024x512xbf16, #tpu.memory_space<vmem>>, %arg3: memref<1x512xf32, #tpu.memory_space<vmem>>, %arg4: memref<128x512xbf16, #tpu.memory_space<vmem>>, %arg5: memref<1x512xf32, #tpu.memory_space<vmem>>, %arg6: memref<128x32xbf16, #tpu.memory_space<vmem>>, %arg7: memref<1x32xf32, #tpu.memory_space<vmem>>, %arg8: memref<32x8xbf16, #tpu.memory_space<vmem>>, %arg9: memref<1x8xf32, #tpu.memory_space<vmem>>, %arg10: memref<2x8xf32, #tpu.memory_space<vmem>>, %arg11: memref<2x512xf32, #tpu.memory_space<vmem>>) attributes {dimension_semantics = [#tpu.dimension_semantics<arbitrary>], iteration_bounds = array<i64: 1>, scalar_prefetch = 0 : i64, scratch_operands = 1 : i64, tpu.core_type = #tpu.core_type<tc>, window_params = [{transform_indices = @transform_0, window_bounds = array<i64: 2, 1024>}, {transform_indices = @transform_1, window_bounds = array<i64: 1024, 512>}, {pipeline_mode = #tpu.pipeline_mode<synchronous>, transform_indices = @transform_2, window_bounds = array<i64: 1, 512>}, {pipeline_mode = #tpu.pipeline_mode<synchronous>, transform_indices = @transform_3, window_bounds = array<i64: 128, 512>}, {pipeline_mode = #tpu.pipeline_mode<synchronous>, transform_indices = @transform_4, window_bounds = array<i64: 1, 512>}, {pipeline_mode = #tpu.pipeline_mode<synchronous>, transform_indices = @transform_5, window_bounds = array<i64: 128, 32>}, {pipeline_mode = #tpu.pipeline_mode<synchronous>, transform_indices = @transform_6, window_bounds = array<i64: 1, 32>}, {pipeline_mode = #tpu.pipeline_mode<synchronous>, transform_indices = @transform_7, window_bounds = array<i64: 32, 8>}, {pipeline_mode = #tpu.pipeline_mode<synchronous>, transform_indices = @transform_8, window_bounds = array<i64: 1, 8>}, {pipeline_mode = #tpu.pipeline_mode<synchronous>, transform_indices = @transform_9, window_bounds = array<i64: 2, 8>}]} {
    %c0_i32 = arith.constant 0 : i32
    %0 = arith.cmpi eq, %arg0, %c0_i32 : i32
    %1 = arith.extui %0 : i1 to i32
    %c0_i32_0 = arith.constant 0 : i32
    %2 = arith.cmpi ne, %1, %c0_i32_0 : i32
    scf.if %2 {
      %cst_10 = arith.constant 0.000000e+00 : f32
      %13 = vector.broadcast %cst_10 : f32 to vector<2x512xf32>
      %c0_11 = arith.constant 0 : index
      %c0_12 = arith.constant 0 : index
      %14 = vector.load %arg11[%c0_11, %c0_12] : memref<2x512xf32, #tpu.memory_space<vmem>>, vector<2x512xf32>
      tpu.vector_store %arg11[%c0_11, %c0_12], %13 {strides = array<i32>} : memref<2x512xf32, #tpu.memory_space<vmem>>, vector<2x512xf32>,
    } else {
    }
    %c0 = arith.constant 0 : index
    %c0_1 = arith.constant 0 : index
    %3 = vector.load %arg2[%c0, %c0_1] : memref<1024x512xbf16, #tpu.memory_space<vmem>>, vector<1024x512xbf16>
    %c0_2 = arith.constant 0 : index
    %c0_3 = arith.constant 0 : index
    %4 = vector.load %arg11[%c0_2, %c0_3] : memref<2x512xf32, #tpu.memory_space<vmem>>, vector<2x512xf32>
    %c0_4 = arith.constant 0 : index
    %c0_5 = arith.constant 0 : index
    %5 = vector.load %arg1[%c0_4, %c0_5] : memref<2x1024xf32, #tpu.memory_space<vmem>>, vector<2x1024xf32>
    %6 = arith.truncf %5 : vector<2x1024xf32> to vector<2x1024xbf16>
    %cst = arith.constant dense<0.000000e+00> : vector<2x512xf32>
    %7 = tpu.matmul %6, %3, %cst {dimension_numbers = #tpu.dot_dimension_numbers<[1], [0], [0], [1], [0, 0, 1, 1], [], []>} : vector<2x1024xbf16>, vector<1024x512xbf16>, vector<2x512xf32> -> vector<2x512xf32>
    %8 = arith.addf %4, %7 : vector<2x512xf32>
    %c0_6 = arith.constant 0 : index
    %c0_7 = arith.constant 0 : index
    %9 = vector.load %arg11[%c0_6, %c0_7] : memref<2x512xf32, #tpu.memory_space<vmem>>, vector<2x512xf32>
    tpu.vector_store %arg11[%c0_6, %c0_7], %8 {strides = array<i32>} : memref<2x512xf32, #tpu.memory_space<vmem>>, vector<2x512xf32>,
    %c0_i32_8 = arith.constant 0 : i32
    %10 = arith.cmpi eq, %arg0, %c0_i32_8 : i32
    %11 = arith.extui %10 : i1 to i32
    %c0_i32_9 = arith.constant 0 : i32
    %12 = arith.cmpi ne, %11, %c0_i32_9 : i32
    scf.if %12 {
      %c0_10 = arith.constant 0 : index
      %c0_11 = arith.constant 0 : index
      %13 = vector.load %arg11[%c0_10, %c0_11] : memref<2x512xf32, #tpu.memory_space<vmem>>, vector<2x512xf32>
      %c0_12 = arith.constant 0 : index
      %c0_13 = arith.constant 0 : index
      %14 = vector.load %arg3[%c0_12, %c0_13] : memref<1x512xf32, #tpu.memory_space<vmem>>, vector<1x512xf32>
      %15 = vector.broadcast %14 : vector<1x512xf32> to vector<2x512xf32>
      %16 = arith.addf %13, %15 : vector<2x512xf32>
      %17 = vector.extract_strided_slice %16 {offsets = [0, 0], sizes = [2, 128], strides = [1, 1]} : vector<2x512xf32> to vector<2x128xf32>
      %18 = arith.negf %17 : vector<2x128xf32>
      %19 = math.exp %18 : vector<2x128xf32>
      %cst_14 = arith.constant 1.000000e+00 : f32
      %20 = vector.broadcast %cst_14 : f32 to vector<2x128xf32>
      %21 = arith.addf %20, %19 : vector<2x128xf32>
      %22 = arith.divf %20, %21 : vector<2x128xf32>
      %23 = vector.extract_strided_slice %16 {offsets = [0, 256], sizes = [2, 128], strides = [1, 1]} : vector<2x512xf32> to vector<2x128xf32>
      %24 = math.tanh %23 : vector<2x128xf32>
      %25 = vector.extract_strided_slice %16 {offsets = [0, 384], sizes = [2, 128], strides = [1, 1]} : vector<2x512xf32> to vector<2x128xf32>
      %26 = arith.negf %25 : vector<2x128xf32>
      %27 = math.exp %26 : vector<2x128xf32>
      %cst_15 = arith.constant 1.000000e+00 : f32
      %28 = vector.broadcast %cst_15 : f32 to vector<2x128xf32>
      %29 = arith.addf %28, %27 : vector<2x128xf32>
      %30 = arith.divf %28, %29 : vector<2x128xf32>
      %31 = arith.mulf %22, %24 : vector<2x128xf32>
      %32 = math.tanh %31 : vector<2x128xf32>
      %33 = arith.mulf %30, %32 : vector<2x128xf32>
      %c0_16 = arith.constant 0 : index
      %c0_17 = arith.constant 0 : index
      %34 = vector.load %arg4[%c0_16, %c0_17] : memref<128x512xbf16, #tpu.memory_space<vmem>>, vector<128x512xbf16>
      %35 = arith.truncf %33 : vector<2x128xf32> to vector<2x128xbf16>
      %cst_18 = arith.constant dense<0.000000e+00> : vector<2x512xf32>
      %36 = tpu.matmul %35, %34, %cst_18 {dimension_numbers = #tpu.dot_dimension_numbers<[1], [0], [0], [1], [0, 0, 1, 1], [], []>} : vector<2x128xbf16>, vector<128x512xbf16>, vector<2x512xf32> -> vector<2x512xf32>
      %c0_19 = arith.constant 0 : index
      %c0_20 = arith.constant 0 : index
      %37 = vector.load %arg5[%c0_19, %c0_20] : memref<1x512xf32, #tpu.memory_space<vmem>>, vector<1x512xf32>
      %38 = vector.broadcast %37 : vector<1x512xf32> to vector<2x512xf32>
      %39 = arith.addf %36, %38 : vector<2x512xf32>
      %40 = vector.extract_strided_slice %39 {offsets = [0, 0], sizes = [2, 128], strides = [1, 1]} : vector<2x512xf32> to vector<2x128xf32>
      %41 = arith.negf %40 : vector<2x128xf32>
      %42 = math.exp %41 : vector<2x128xf32>
      %cst_21 = arith.constant 1.000000e+00 : f32
      %43 = vector.broadcast %cst_21 : f32 to vector<2x128xf32>
      %44 = arith.addf %43, %42 : vector<2x128xf32>
      %45 = arith.divf %43, %44 : vector<2x128xf32>
      %46 = vector.extract_strided_slice %39 {offsets = [0, 256], sizes = [2, 128], strides = [1, 1]} : vector<2x512xf32> to vector<2x128xf32>
      %47 = math.tanh %46 : vector<2x128xf32>
      %48 = vector.extract_strided_slice %39 {offsets = [0, 384], sizes = [2, 128], strides = [1, 1]} : vector<2x512xf32> to vector<2x128xf32>
      %49 = arith.negf %48 : vector<2x128xf32>
      %50 = math.exp %49 : vector<2x128xf32>
      %cst_22 = arith.constant 1.000000e+00 : f32
      %51 = vector.broadcast %cst_22 : f32 to vector<2x128xf32>
      %52 = arith.addf %51, %50 : vector<2x128xf32>
      %53 = arith.divf %51, %52 : vector<2x128xf32>
      %54 = arith.mulf %45, %47 : vector<2x128xf32>
      %55 = math.tanh %54 : vector<2x128xf32>
      %56 = arith.mulf %53, %55 : vector<2x128xf32>
      %cst_23 = arith.constant 0.000000e+00 : f32
      %57 = vector.broadcast %cst_23 : f32 to vector<2x128xf32>
      %58 = arith.maximumf %56, %57 : vector<2x128xf32>
      %c0_24 = arith.constant 0 : index
      %c0_25 = arith.constant 0 : index
      %59 = vector.load %arg6[%c0_24, %c0_25] : memref<128x32xbf16, #tpu.memory_space<vmem>>, vector<128x32xbf16>
      %60 = arith.truncf %58 : vector<2x128xf32> to vector<2x128xbf16>
      %cst_26 = arith.constant dense<0.000000e+00> : vector<2x32xf32>
      %61 = tpu.matmul %60, %59, %cst_26 {dimension_numbers = #tpu.dot_dimension_numbers<[1], [0], [0], [1], [0, 0, 1, 1], [], []>} : vector<2x128xbf16>, vector<128x32xbf16>, vector<2x32xf32> -> vector<2x32xf32>
      %c0_27 = arith.constant 0 : index
      %c0_28 = arith.constant 0 : index
      %62 = vector.load %arg7[%c0_27, %c0_28] : memref<1x32xf32, #tpu.memory_space<vmem>>, vector<1x32xf32>
      %63 = vector.broadcast %62 : vector<1x32xf32> to vector<2x32xf32>
      %64 = arith.addf %61, %63 : vector<2x32xf32>
      %cst_29 = arith.constant 0.000000e+00 : f32
      %65 = vector.broadcast %cst_29 : f32 to vector<2x32xf32>
      %66 = arith.maximumf %64, %65 : vector<2x32xf32>
      %c0_30 = arith.constant 0 : index
      %c0_31 = arith.constant 0 : index
      %67 = vector.load %arg8[%c0_30, %c0_31] : memref<32x8xbf16, #tpu.memory_space<vmem>>, vector<32x8xbf16>
      %68 = arith.truncf %66 : vector<2x32xf32> to vector<2x32xbf16>
      %cst_32 = arith.constant dense<0.000000e+00> : vector<2x8xf32>
      %69 = tpu.matmul %68, %67, %cst_32 {dimension_numbers = #tpu.dot_dimension_numbers<[1], [0], [0], [1], [0, 0, 1, 1], [], []>} : vector<2x32xbf16>, vector<32x8xbf16>, vector<2x8xf32> -> vector<2x8xf32>
      %c0_33 = arith.constant 0 : index
      %c0_34 = arith.constant 0 : index
      %70 = vector.load %arg9[%c0_33, %c0_34] : memref<1x8xf32, #tpu.memory_space<vmem>>, vector<1x8xf32>
      %71 = vector.broadcast %70 : vector<1x8xf32> to vector<2x8xf32>
      %72 = arith.addf %69, %71 : vector<2x8xf32>
      %cst_35 = arith.constant dense<0xFF800000> : vector<8xf32>
      %73 = vector.multi_reduction <maximumf>, %72, %cst_35 [0] : vector<2x8xf32> to vector<8xf32>
      %74 = vector.shape_cast %73 : vector<8xf32> to vector<1x8xf32>
      %75 = vector.broadcast %74 : vector<1x8xf32> to vector<2x8xf32>
      %76 = arith.subf %72, %75 : vector<2x8xf32>
      %77 = math.exp %76 : vector<2x8xf32>
      %cst_36 = arith.constant dense<0.000000e+00> : vector<8xf32>
      %78 = vector.multi_reduction <add>, %77, %cst_36 [0] : vector<2x8xf32> to vector<8xf32>
      %79 = vector.shape_cast %78 : vector<8xf32> to vector<1x8xf32>
      %80 = tpu.reciprocal %79 : vector<1x8xf32> -> vector<1x8xf32>
      %81 = vector.broadcast %80 : vector<1x8xf32> to vector<2x8xf32>
      %82 = arith.mulf %77, %81 : vector<2x8xf32>
      %c0_37 = arith.constant 0 : index
      %c0_38 = arith.constant 0 : index
      %83 = vector.load %arg10[%c0_37, %c0_38] : memref<2x8xf32, #tpu.memory_space<vmem>>, vector<2x8xf32>
      tpu.vector_store %arg10[%c0_37, %c0_38], %82 {strides = array<i32>} : memref<2x8xf32, #tpu.memory_space<vmem>>, vector<2x8xf32>,
    } else {
    }
    return
  }
  func.func @transform_0(%arg0: i32) -> (i32, i32) {
    %c0_i32 = arith.constant 0 : i32
    %c0_i32_0 = arith.constant 0 : i32
    return %c0_i32, %arg0 : i32, i32
  }
  func.func @transform_1(%arg0: i32) -> (i32, i32) {
    %c0_i32 = arith.constant 0 : i32
    %c0_i32_0 = arith.constant 0 : i32
    return %arg0, %c0_i32 : i32, i32
  }
  func.func @transform_2(%arg0: i32) -> (i32, i32) {
    %c0_i32 = arith.constant 0 : i32
    %c0_i32_0 = arith.constant 0 : i32
    %c0_i32_1 = arith.constant 0 : i32
    return %c0_i32, %c0_i32_0 : i32, i32
  }
  func.func @transform_3(%arg0: i32) -> (i32, i32) {
    %c0_i32 = arith.constant 0 : i32
    %c0_i32_0 = arith.constant 0 : i32
    %c0_i32_1 = arith.constant 0 : i32
    return %c0_i32, %c0_i32_0 : i32, i32
  }
  func.func @transform_4(%arg0: i32) -> (i32, i32) {
    %c0_i32 = arith.constant 0 : i32
    %c0_i32_0 = arith.constant 0 : i32
    %c0_i32_1 = arith.constant 0 : i32
    return %c0_i32, %c0_i32_0 : i32, i32
  }
  func.func @transform_5(%arg0: i32) -> (i32, i32) {
    %c0_i32 = arith.constant 0 : i32
    %c0_i32_0 = arith.constant 0 : i32
    %c0_i32_1 = arith.constant 0 : i32
    return %c0_i32, %c0_i32_0 : i32, i32
  }
  func.func @transform_6(%arg0: i32) -> (i32, i32) {
    %c0_i32 = arith.constant 0 : i32
    %c0_i32_0 = arith.constant 0 : i32
    %c0_i32_1 = arith.constant 0 : i32
    return %c0_i32, %c0_i32_0 : i32, i32
  }
  func.func @transform_7(%arg0: i32) -> (i32, i32) {
    %c0_i32 = arith.constant 0 : i32
    %c0_i32_0 = arith.constant 0 : i32
    %c0_i32_1 = arith.constant 0 : i32
    return %c0_i32, %c0_i32_0 : i32, i32
  }
  func.func @transform_8(%arg0: i32) -> (i32, i32) {
    %c0_i32 = arith.constant 0 : i32
    %c0_i32_0 = arith.constant 0 : i32
    %c0_i32_1 = arith.constant 0 : i32
    return %c0_i32, %c0_i32_0 : i32, i32
  }
  func.func @transform_9(%arg0: i32) -> (i32, i32) {
    %c0_i32 = arith.constant 0 : i32
    %c0_i32_0 = arith.constant 0 : i32
    %c0_i32_1 = arith.constant 0 : i32
    return %c0_i32, %c0_i32_0 : i32, i32
  }
}

</mosaic_0001>

<llo_original>
// kernel: smol_actor_forward.3
$region0: #{smol_actor_forward.3}
  #allocation0 [shape = 'u32[]', space=smem, size = 0x4, offset = 0x4, fixed_abs, tag = 'smem constant byte address 0x4 - core index']
  #allocation1 [shape = 'u32[144,128]{1,0:T(1,128)}', space=vmem, size = 0x12000, scoped, tag = 'internal scratch']
  %s0 = inlined_call_operand.vmem [shape: f32[128,64], index: 0, kind: input, shape index: {}]
  %s1 = inlined_call_operand.vmem [shape: bf16[64,128], index: 1, kind: input, shape index: {}]
  %s2 = inlined_call_operand.vmem [shape: f32[1,128], index: 2, kind: input, shape index: {}]
  %s3 = inlined_call_operand.vmem [shape: f32[128,128], index: 3, kind: output, shape index: {}]
  %s4 = sld [smem:[#allocation0]]
  $region22: #{smol_actor_forward.3} parent=0
    _
  %s6 = ssub.s32 1, %s4
  %s7 = scalar_select 0, %s6, %s4
  // Predicated region
  $region2: #{smol_actor_forward.3} parent=0 // pred_check
    _
  $region3: #{smol_actor_forward.3} parent=0 // pred_check_branch
    %9 = sbr.rel (0) target = $region5
  $region4: #{smol_actor_forward.3} parent=0 // pred_region
    _
  $region5: #{smol_actor_forward.3} parent=0 // pred_fallthru
    _
  // Predicated region
  $region6: #{smol_actor_forward.3} parent=0 // pred_check
    _
  $region7: #{smol_actor_forward.3} parent=0 // pred_check_branch
    %11 = sbr.rel (0) target = $region9
  $region8: #{smol_actor_forward.3} parent=0 // pred_region
    _
  $region9: #{smol_actor_forward.3} parent=0 // pred_fallthru
    _
  // Predicated region
  $region10: #{smol_actor_forward.3} parent=0 // pred_check
    _
  $region11: #{smol_actor_forward.3} parent=0 // pred_check_branch
    %13 = sbr.rel (0) target = $region13
  $region12: #{smol_actor_forward.3} parent=0 // pred_region
    _
  $region13: #{smol_actor_forward.3} parent=0 // pred_fallthru
    _
  %v15 = vld [vmem:[%s1] sm:$0xf]
  %v16 = vld [vmem:[%s1 + $0x4] sm:$0xf]
  %v17 = vld [vmem:[%s1 + $0x8] sm:$0xf]
  %v18 = vld [vmem:[%s1 + $0xc] sm:$0xf]
  %v19 = vld [vmem:[%s1 + $0x10] sm:$0xf]
  %v20 = vld [vmem:[%s1 + $0x14] sm:$0xf]
  %v21 = vld [vmem:[%s1 + $0x18] sm:$0xf]
  %v22 = vld [vmem:[%s1 + $0x1c] sm:$0xf]
  %v23 = vld [vmem:[%s0] sm:$0xff]
  %v24 = vld [vmem:[%s0 + $0x8] sm:$0xff]
  %v25 = vld [vmem:[%s0 + $0x10] sm:$0xff]
  %v26 = vld [vmem:[%s0 + $0x18] sm:$0xff]
  %v27 = vld [vmem:[%s0 + $0x20] sm:$0xff]
  %v28 = vld [vmem:[%s0 + $0x28] sm:$0xff]
  %v29 = vld [vmem:[%s0 + $0x30] sm:$0xff]
  %v30 = vld [vmem:[%s0 + $0x38] sm:$0xff]
  %v31 = vld [vmem:[%s0 + $0x40] sm:$0xff]
  %v32 = vld [vmem:[%s0 + $0x48] sm:$0xff]
  %v33 = vld [vmem:[%s0 + $0x50] sm:$0xff]
  %v34 = vld [vmem:[%s0 + $0x58] sm:$0xff]
  %v35 = vld [vmem:[%s0 + $0x60] sm:$0xff]
  %v36 = vld [vmem:[%s0 + $0x68] sm:$0xff]
  %v37 = vld [vmem:[%s0 + $0x70] sm:$0xff]
  %v38 = vld [vmem:[%s0 + $0x78] sm:$0xff]
  %v39 = vpack.c.bf16 %v24, %v23
  %v40 = vpack.c.bf16 %v26, %v25
  %v41 = vpack.c.bf16 %v28, %v27
  %v42 = vpack.c.bf16 %v30, %v29
  %v43 = vpack.c.bf16 %v32, %v31
  %v44 = vpack.c.bf16 %v34, %v33
  %v45 = vpack.c.bf16 %v36, %v35
  %v46 = vpack.c.bf16 %v38, %v37
  %v47 = vld [vmem:[%s2] sm:$0x1]
  %v49 = vlaneseq
  %v50 = vshrl.u32 %v49, 7
  %v51 = vsub.s32 0, %v50
  %v52 = vrot.slane %v47, %v51
  %v62 = vunpack.c.l.b16 %v15
  %v63 = vunpack.c.l.b16 %v16
  %v64 = vunpack.c.l.b16 %v17
  %v65 = vunpack.c.l.b16 %v18
  %v66 = vunpack.c.l.b16 %v19
  %v67 = vunpack.c.l.b16 %v20
  %v68 = vunpack.c.l.b16 %v21
  %v69 = vunpack.c.l.b16 %v22
  %v70 = vpack.c.b16 %v63, %v62
  %v71 = vpack.c.b16 %v65, %v64
  %v72 = vpack.c.b16 %v67, %v66
  %v73 = vpack.c.b16 %v69, %v68
  %vm78 = vcmask 523264
  %v80 = vsel %vm78, %v39, 0
  %v83 = vsel %vm78, %v40, 0
  %v86 = vsel %vm78, %v41, 0
  %v89 = vsel %vm78, %v42, 0
  %v92 = vsel %vm78, %v43, 0
  %v95 = vsel %vm78, %v44, 0
  %v98 = vsel %vm78, %v45, 0
  %v101 = vsel %vm78, %v46, 0
  %103 = vmatprep.subr.bf16.mxu0 0
  %104 = vmatpush1.bf16.msra.mxu0 %v70
  %105 = vmatprep.subr.bf16.mxu0 0
  %106 = vmatpush1.bf16.msra.mxu0 %v71
  %107 = vmatprep.subr.bf16.mxu0 0
  %108 = vmatpush1.bf16.msra.mxu0 %v72
  %109 = vmatprep.subr.bf16.mxu0 0
  %110 = vmatpush1.bf16.msra.mxu0 %v73
  %111 = vmatprep.subr.bf16.mxu0 0
  %112 = vmatpush1.bf16.msra.mxu0 0
  %113 = vmatprep.subr.bf16.mxu0 0
  %114 = vmatpush1.bf16.msra.mxu0 0
  %115 = vmatprep.subr.bf16.mxu0 0
  %116 = vmatpush1.bf16.msra.mxu0 0
  %117 = vmatprep.subr.bf16.mxu0 0
  %118 = vmatpush1.bf16.msra.mxu0 0
  %119 = vmatprep.subr.bf16.mxu0 0
  %120 = vmatpush1.bf16.msra.mxu0 0
  %121 = vmatprep.subr.bf16.mxu0 0
  %122 = vmatpush1.bf16.msra.mxu0 0
  %123 = vmatprep.subr.bf16.mxu0 0
  %124 = vmatpush1.bf16.msra.mxu0 0
  %125 = vmatprep.subr.bf16.mxu0 0
  %126 = vmatpush1.bf16.msra.mxu0 0
  %127 = vmatprep.subr.bf16.mxu0 0
  %128 = vmatpush1.bf16.msra.mxu0 0
  %129 = vmatprep.subr.bf16.mxu0 0
  %130 = vmatpush1.bf16.msra.mxu0 0
  %131 = vmatprep.subr.bf16.mxu0 0
  %132 = vmatpush1.bf16.msra.mxu0 0
  %133 = vmatprep.subr.bf16.mxu0 0
  %134 = vmatpush1.bf16.msra.mxu0 0
  %135 = vmatprep.mubr.bf16.mxu0 0
  %136 = vmatmul.mubr.bf16.gmra.mrb[0].mxu0 %v80
  %v137 = vpop.f32.mrb[0].mxu0
  %v138 = vadd.f32 %v52, %v137
  %v139 = vpop.f32.mrb[0].mxu0
  %v140 = vpop.f32.mrb[0].mxu0
  %v141 = vadd.f32 %v52, %v140
  %v142 = vpop.f32.mrb[0].mxu0
  %143 = vmatprep.mubr.bf16.mxu0 0
  %144 = vmatmul.mubr.bf16.gmra.mrb[0].mxu0 %v83
  %v145 = vpop.f32.mrb[0].mxu0
  %v146 = vadd.f32 %v52, %v145
  %v147 = vpop.f32.mrb[0].mxu0
  %v148 = vpop.f32.mrb[0].mxu0
  %v149 = vadd.f32 %v52, %v148
  %v150 = vpop.f32.mrb[0].mxu0
  %151 = vmatprep.mubr.bf16.mxu0 0
  %152 = vmatmul.mubr.bf16.gmra.mrb[0].mxu0 %v86
  %v153 = vpop.f32.mrb[0].mxu0
  %v154 = vadd.f32 %v52, %v153
  %v155 = vpop.f32.mrb[0].mxu0
  %v156 = vpop.f32.mrb[0].mxu0
  %v157 = vadd.f32 %v52, %v156
  %v158 = vpop.f32.mrb[0].mxu0
  %159 = vmatprep.mubr.bf16.mxu0 0
  %160 = vmatmul.mubr.bf16.gmra.mrb[0].mxu0 %v89
  %v161 = vpop.f32.mrb[0].mxu0
  %v162 = vadd.f32 %v52, %v161
  %v163 = vpop.f32.mrb[0].mxu0
  %v164 = vpop.f32.mrb[0].mxu0
  %v165 = vadd.f32 %v52, %v164
  %v166 = vpop.f32.mrb[0].mxu0
  %167 = vmatprep.mubr.bf16.mxu0 0
  %168 = vmatmul.mubr.bf16.gmra.mrb[0].mxu0 %v92
  %v169 = vpop.f32.mrb[0].mxu0
  %v170 = vadd.f32 %v52, %v169
  %v171 = vpop.f32.mrb[0].mxu0
  %v172 = vpop.f32.mrb[0].mxu0
  %v173 = vadd.f32 %v52, %v172
  %v174 = vpop.f32.mrb[0].mxu0
  %175 = vmatprep.mubr.bf16.mxu0 0
  %176 = vmatmul.mubr.bf16.gmra.mrb[0].mxu0 %v95
  %v177 = vpop.f32.mrb[0].mxu0
  %v178 = vadd.f32 %v52, %v177
  %v179 = vpop.f32.mrb[0].mxu0
  %v180 = vpop.f32.mrb[0].mxu0
  %v181 = vadd.f32 %v52, %v180
  %v182 = vpop.f32.mrb[0].mxu0
  %183 = vmatprep.mubr.bf16.mxu0 0
  %184 = vmatmul.mubr.bf16.gmra.mrb[0].mxu0 %v98
  %v185 = vpop.f32.mrb[0].mxu0
  %v186 = vadd.f32 %v52, %v185
  %v187 = vpop.f32.mrb[0].mxu0
  %v188 = vpop.f32.mrb[0].mxu0
  %v189 = vadd.f32 %v52, %v188
  %v190 = vpop.f32.mrb[0].mxu0
  %191 = vmatprep.mubr.bf16.mxu0 0
  %192 = vmatmul.mubr.bf16.gmra.mrb[0].mxu0 %v101
  %v193 = vpop.f32.mrb[0].mxu0
  %v194 = vadd.f32 %v52, %v193
  %v195 = vpop.f32.mrb[0].mxu0
  %v196 = vpop.f32.mrb[0].mxu0
  %v197 = vadd.f32 %v52, %v196
  %v198 = vpop.f32.mrb[0].mxu0
  %199 = vdwg.mxu0
  %v200 = vmax.f32 %v138, 0.0
  %v201 = vmax.f32 %v141, 0.0
  %v202 = vmax.f32 %v146, 0.0
  %v203 = vmax.f32 %v149, 0.0
  %v204 = vmax.f32 %v154, 0.0
  %v205 = vmax.f32 %v157, 0.0
  %v206 = vmax.f32 %v162, 0.0
  %v207 = vmax.f32 %v165, 0.0
  %v208 = vmax.f32 %v170, 0.0
  %v209 = vmax.f32 %v173, 0.0
  %v210 = vmax.f32 %v178, 0.0
  %v211 = vmax.f32 %v181, 0.0
  %v212 = vmax.f32 %v186, 0.0
  %v213 = vmax.f32 %v189, 0.0
  %v214 = vmax.f32 %v194, 0.0
  %v215 = vmax.f32 %v197, 0.0
  %216 = vst [vmem:[%s3] sm:$0xff] %v200
  %217 = vst [vmem:[%s3 + $0x8] sm:$0xff] %v201
  %218 = vst [vmem:[%s3 + $0x10] sm:$0xff] %v202
  %219 = vst [vmem:[%s3 + $0x18] sm:$0xff] %v203
  %220 = vst [vmem:[%s3 + $0x20] sm:$0xff] %v204
  %221 = vst [vmem:[%s3 + $0x28] sm:$0xff] %v205
  %222 = vst [vmem:[%s3 + $0x30] sm:$0xff] %v206
  %223 = vst [vmem:[%s3 + $0x38] sm:$0xff] %v207
  %224 = vst [vmem:[%s3 + $0x40] sm:$0xff] %v208
  %225 = vst [vmem:[%s3 + $0x48] sm:$0xff] %v209
  %226 = vst [vmem:[%s3 + $0x50] sm:$0xff] %v210
  %227 = vst [vmem:[%s3 + $0x58] sm:$0xff] %v211
  %228 = vst [vmem:[%s3 + $0x60] sm:$0xff] %v212
  %229 = vst [vmem:[%s3 + $0x68] sm:$0xff] %v213
  %230 = vst [vmem:[%s3 + $0x70] sm:$0xff] %v214
  %231 = vst [vmem:[%s3 + $0x78] sm:$0xff] %v215
  // Predicated region
  $region14: #{smol_actor_forward.3} parent=0 // pred_check
    _
  $region15: #{smol_actor_forward.3} parent=0 // pred_check_branch
    %233 = sbr.rel (0) target = $region17
  $region16: #{smol_actor_forward.3} parent=0 // pred_region
    _
  $region17: #{smol_actor_forward.3} parent=0 // pred_fallthru
    _
  // Predicated region
  $region18: #{smol_actor_forward.3} parent=0 // pred_check
    _
  $region19: #{smol_actor_forward.3} parent=0 // pred_check_branch
    %235 = sbr.rel (0) target = $region21
  $region20: #{smol_actor_forward.3} parent=0 // pred_region
    _
  $region21: #{smol_actor_forward.3} parent=0 // pred_fallthru
    _

// kernel: smol_actor_forward.4
$region0: #{smol_actor_forward.4}
  #allocation0 [shape = 'u32[]', space=smem, size = 0x4, offset = 0x4, fixed_abs, tag = 'smem constant byte address 0x4 - core index']
  #allocation1 [shape = 'u32[144,128]{1,0:T(1,128)}', space=vmem, size = 0x12000, scoped, tag = 'internal scratch']
  %s0 = inlined_call_operand.vmem [shape: f32[32,2048], index: 0, kind: input, shape index: {}]
  %s1 = inlined_call_operand.vmem [shape: bf16[2048,64], index: 1, kind: input, shape index: {}]
  %s2 = inlined_call_operand.vmem [shape: f32[1,64], index: 2, kind: input, shape index: {}]
  %s3 = inlined_call_operand.vmem [shape: f32[32,64], index: 3, kind: output, shape index: {}]
  %s4 = sld [smem:[#allocation0]]
  $region22: #{smol_actor_forward.4} parent=0
    _
  %s6 = ssub.s32 1, %s4
  %s7 = scalar_select 0, %s6, %s4
  // Predicated region
  $region2: #{smol_actor_forward.4} parent=0 // pred_check
    _
  $region3: #{smol_actor_forward.4} parent=0 // pred_check_branch
    %9 = sbr.rel (0) target = $region5
  $region4: #{smol_actor_forward.4} parent=0 // pred_region
    _
  $region5: #{smol_actor_forward.4} parent=0 // pred_fallthru
    _
  // Predicated region
  $region6: #{smol_actor_forward.4} parent=0 // pred_check
    _
  $region7: #{smol_actor_forward.4} parent=0 // pred_check_branch
    %11 = sbr.rel (0) target = $region9
  $region8: #{smol_actor_forward.4} parent=0 // pred_region
    _
  $region9: #{smol_actor_forward.4} parent=0 // pred_fallthru
    _
  // Predicated region
  $region10: #{smol_actor_forward.4} parent=0 // pred_check
    _
  $region11: #{smol_actor_forward.4} parent=0 // pred_check_branch
    %13 = sbr.rel (0) target = $region13
  $region12: #{smol_actor_forward.4} parent=0 // pred_region
    _
  $region13: #{smol_actor_forward.4} parent=0 // pred_fallthru
    _
  %v15 = vld [vmem:[%s1] sm:$0xf]
  %v16 = vld [vmem:[%s1 + $0x4] sm:$0xf]
  %v17 = vld [vmem:[%s1 + $0x8] sm:$0xf]
  %v18 = vld [vmem:[%s1 + $0xc] sm:$0xf]
  %v19 = vld [vmem:[%s1 + $0x10] sm:$0xf]
  %v20 = vld [vmem:[%s1 + $0x14] sm:$0xf]
  %v21 = vld [vmem:[%s1 + $0x18] sm:$0xf]
  %v22 = vld [vmem:[%s1 + $0x1c] sm:$0xf]
  %v23 = vld [vmem:[%s1 + $0x20] sm:$0xf]
  %v24 = vld [vmem:[%s1 + $0x24] sm:$0xf]
  %v25 = vld [vmem:[%s1 + $0x28] sm:$0xf]
  %v26 = vld [vmem:[%s1 + $0x2c] sm:$0xf]
  %v27 = vld [vmem:[%s1 + $0x30] sm:$0xf]
  %v28 = vld [vmem:[%s1 + $0x34] sm:$0xf]
  %v29 = vld [vmem:[%s1 + $0x38] sm:$0xf]
  %v30 = vld [vmem:[%s1 + $0x3c] sm:$0xf]
  %v31 = vld [vmem:[%s1 + $0x40] sm:$0xf]
  %v32 = vld [vmem:[%s1 + $0x44] sm:$0xf]
  %v33 = vld [vmem:[%s1 + $0x48] sm:$0xf]
  %v34 = vld [vmem:[%s1 + $0x4c] sm:$0xf]
  %v35 = vld [vmem:[%s1 + $0x50] sm:$0xf]
  %v36 = vld [vmem:[%s1 + $0x54] sm:$0xf]
  %v37 = vld [vmem:[%s1 + $0x58] sm:$0xf]
  %v38 = vld [vmem:[%s1 + $0x5c] sm:$0xf]
  %v39 = vld [vmem:[%s1 + $0x60] sm:$0xf]
  %v40 = vld [vmem:[%s1 + $0x64] sm:$0xf]
  %v41 = vld [vmem:[%s1 + $0x68] sm:$0xf]
  %v42 = vld [vmem:[%s1 + $0x6c] sm:$0xf]
  %v43 = vld [vmem:[%s1 + $0x70] sm:$0xf]
  %v44 = vld [vmem:[%s1 + $0x74] sm:$0xf]
  %v45 = vld [vmem:[%s1 + $0x78] sm:$0xf]
  %v46 = vld [vmem:[%s1 + $0x7c] sm:$0xf]
  %v47 = vld [vmem:[%s1 + $0x80] sm:$0xf]
  %v48 = vld [vmem:[%s1 + $0x84] sm:$0xf]
  %v49 = vld [vmem:[%s1 + $0x88] sm:$0xf]
  %v50 = vld [vmem:[%s1 + $0x8c] sm:$0xf]
  %v51 = vld [vmem:[%s1 + $0x90] sm:$0xf]
  %v52 = vld [vmem:[%s1 + $0x94] sm:$0xf]
  %v53 = vld [vmem:[%s1 + $0x98] sm:$0xf]
  %v54 = vld [vmem:[%s1 + $0x9c] sm:$0xf]
  %v55 = vld [vmem:[%s1 + $0xa0] sm:$0xf]
  %v56 = vld [vmem:[%s1 + $0xa4] sm:$0xf]
  %v57 = vld [vmem:[%s1 + $0xa8] sm:$0xf]
  %v58 = vld [vmem:[%s1 + $0xac] sm:$0xf]
  %v59 = vld [vmem:[%s1 + $0xb0] sm:$0xf]
  %v60 = vld [vmem:[%s1 + $0xb4] sm:$0xf]
  %v61 = vld [vmem:[%s1 + $0xb8] sm:$0xf]
  %v62 = vld [vmem:[%s1 + $0xbc] sm:$0xf]
  %v63 = vld [vmem:[%s1 + $0xc0] sm:$0xf]
  %v64 = vld [vmem:[%s1 + $0xc4] sm:$0xf]
  %v65 = vld [vmem:[%s1 + $0xc8] sm:$0xf]
  %v66 = vld [vmem:[%s1 + $0xcc] sm:$0xf]
  %v67 = vld [vmem:[%s1 + $0xd0] sm:$0xf]
  %v68 = vld [vmem:[%s1 + $0xd4] sm:$0xf]
  %v69 = vld [vmem:[%s1 + $0xd8] sm:$0xf]
  %v70 = vld [vmem:[%s1 + $0xdc] sm:$0xf]
  %v71 = vld [vmem:[%s1 + $0xe0] sm:$0xf]
  %v72 = vld [vmem:[%s1 + $0xe4] sm:$0xf]
  %v73 = vld [vmem:[%s1 + $0xe8] sm:$0xf]
  %v74 = vld [vmem:[%s1 + $0xec] sm:$0xf]
  %v75 = vld [vmem:[%s1 + $0xf0] sm:$0xf]
  %v76 = vld [vmem:[%s1 + $0xf4] sm:$0xf]
  %v77 = vld [vmem:[%s1 + $0xf8] sm:$0xf]
  %v78 = vld [vmem:[%s1 + $0xfc] sm:$0xf]
  %v79 = vld [vmem:[%s1 + $0x100] sm:$0xf]
  %v80 = vld [vmem:[%s1 + $0x104] sm:$0xf]
  %v81 = vld [vmem:[%s1 + $0x108] sm:$0xf]
  %v82 = vld [vmem:[%s1 + $0x10c] sm:$0xf]
  %v83 = vld [vmem:[%s1 + $0x110] sm:$0xf]
  %v84 = vld [vmem:[%s1 + $0x114] sm:$0xf]
  %v85 = vld [vmem:[%s1 + $0x118] sm:$0xf]
  %v86 = vld [vmem:[%s1 + $0x11c] sm:$0xf]
  %v87 = vld [vmem:[%s1 + $0x120] sm:$0xf]
  %v88 = vld [vmem:[%s1 + $0x124] sm:$0xf]
  %v89 = vld [vmem:[%s1 + $0x128] sm:$0xf]
  %v90 = vld [vmem:[%s1 + $0x12c] sm:$0xf]
  %v91 = vld [vmem:[%s1 + $0x130] sm:$0xf]
  %v92 = vld [vmem:[%s1 + $0x134] sm:$0xf]
  %v93 = vld [vmem:[%s1 + $0x138] sm:$0xf]
  %v94 = vld [vmem:[%s1 + $0x13c] sm:$0xf]
  %v95 = vld [vmem:[%s1 + $0x140] sm:$0xf]
  %v96 = vld [vmem:[%s1 + $0x144] sm:$0xf]
  %v97 = vld [vmem:[%s1 + $0x148] sm:$0xf]
  %v98 = vld [vmem:[%s1 + $0x14c] sm:$0xf]
  %v99 = vld [vmem:[%s1 + $0x150] sm:$0xf]
  %v100 = vld [vmem:[%s1 + $0x154] sm:$0xf]
  %v101 = vld [vmem:[%s1 + $0x158] sm:$0xf]
  %v102 = vld [vmem:[%s1 + $0x15c] sm:$0xf]
  %v103 = vld [vmem:[%s1 + $0x160] sm:$0xf]
  %v104 = vld [vmem:[%s1 + $0x164] sm:$0xf]
  %v105 = vld [vmem:[%s1 + $0x168] sm:$0xf]
  %v106 = vld [vmem:[%s1 + $0x16c] sm:$0xf]
  %v107 = vld [vmem:[%s1 + $0x170] sm:$0xf]
  %v108 = vld [vmem:[%s1 + $0x174] sm:$0xf]
  %v109 = vld [vmem:[%s1 + $0x178] sm:$0xf]
  %v110 = vld [vmem:[%s1 + $0x17c] sm:$0xf]
  %v111 = vld [vmem:[%s1 + $0x180] sm:$0xf]
  %v112 = vld [vmem:[%s1 + $0x184] sm:$0xf]
  %v113 = vld [vmem:[%s1 + $0x188] sm:$0xf]
  %v114 = vld [vmem:[%s1 + $0x18c] sm:$0xf]
  %v115 = vld [vmem:[%s1 + $0x190] sm:$0xf]
  %v116 = vld [vmem:[%s1 + $0x194] sm:$0xf]
  %v117 = vld [vmem:[%s1 + $0x198] sm:$0xf]
  %v118 = vld [vmem:[%s1 + $0x19c] sm:$0xf]
  %v119 = vld [vmem:[%s1 + $0x1a0] sm:$0xf]
  %v120 = vld [vmem:[%s1 + $0x1a4] sm:$0xf]
  %v121 = vld [vmem:[%s1 + $0x1a8] sm:$0xf]
  %v122 = vld [vmem:[%s1 + $0x1ac] sm:$0xf]
  %v123 = vld [vmem:[%s1 + $0x1b0] sm:$0xf]
  %v124 = vld [vmem:[%s1 + $0x1b4] sm:$0xf]
  %v125 = vld [vmem:[%s1 + $0x1b8] sm:$0xf]
  %v126 = vld [vmem:[%s1 + $0x1bc] sm:$0xf]
  %v127 = vld [vmem:[%s1 + $0x1c0] sm:$0xf]
  %v128 = vld [vmem:[%s1 + $0x1c4] sm:$0xf]
  %v129 = vld [vmem:[%s1 + $0x1c8] sm:$0xf]
  %v130 = vld [vmem:[%s1 + $0x1cc] sm:$0xf]
  %v131 = vld [vmem:[%s1 + $0x1d0] sm:$0xf]
  %v132 = vld [vmem:[%s1 + $0x1d4] sm:$0xf]
  %v133 = vld [vmem:[%s1 + $0x1d8] sm:$0xf]
  %v134 = vld [vmem:[%s1 + $0x1dc] sm:$0xf]
  %v135 = vld [vmem:[%s1 + $0x1e0] sm:$0xf]
  %v136 = vld [vmem:[%s1 + $0x1e4] sm:$0xf]
  %v137 = vld [vmem:[%s1 + $0x1e8] sm:$0xf]
  %v138 = vld [vmem:[%s1 + $0x1ec] sm:$0xf]
  %v139 = vld [vmem:[%s1 + $0x1f0] sm:$0xf]
  %v140 = vld [vmem:[%s1 + $0x1f4] sm:$0xf]
  %v141 = vld [vmem:[%s1 + $0x1f8] sm:$0xf]
  %v142 = vld [vmem:[%s1 + $0x1fc] sm:$0xf]
  %v143 = vld [vmem:[%s1 + $0x200] sm:$0xf]
  %v144 = vld [vmem:[%s1 + $0x204] sm:$0xf]
  %v145 = vld [vmem:[%s1 + $0x208] sm:$0xf]
  %v146 = vld [vmem:[%s1 + $0x20c] sm:$0xf]
  %v147 = vld [vmem:[%s1 + $0x210] sm:$0xf]
  %v148 = vld [vmem:[%s1 + $0x214] sm:$0xf]
  %v149 = vld [vmem:[%s1 + $0x218] sm:$0xf]
  %v150 = vld [vmem:[%s1 + $0x21c] sm:$0xf]
  %v151 = vld [vmem:[%s1 + $0x220] sm:$0xf]
  %v152 = vld [vmem:[%s1 + $0x224] sm:$0xf]
  %v153 = vld [vmem:[%s1 + $0x228] sm:$0xf]
  %v154 = vld [vmem:[%s1 + $0x22c] sm:$0xf]
  %v155 = vld [vmem:[%s1 + $0x230] sm:$0xf]
  %v156 = vld [vmem:[%s1 + $0x234] sm:$0xf]
  %v157 = vld [vmem:[%s1 + $0x238] sm:$0xf]
  %v158 = vld [vmem:[%s1 + $0x23c] sm:$0xf]
  %v159 = vld [vmem:[%s1 + $0x240] sm:$0xf]
  %v160 = vld [vmem:[%s1 + $0x244] sm:$0xf]
  %v161 = vld [vmem:[%s1 + $0x248] sm:$0xf]
  %v162 = vld [vmem:[%s1 + $0x24c] sm:$0xf]
  %v163 = vld [vmem:[%s1 + $0x250] sm:$0xf]
  %v164 = vld [vmem:[%s1 + $0x254] sm:$0xf]
  %v165 = vld [vmem:[%s1 + $0x258] sm:$0xf]
  %v166 = vld [vmem:[%s1 + $0x25c] sm:$0xf]
  %v167 = vld [vmem:[%s1 + $0x260] sm:$0xf]
  %v168 = vld [vmem:[%s1 + $0x264] sm:$0xf]
  %v169 = vld [vmem:[%s1 + $0x268] sm:$0xf]
  %v170 = vld [vmem:[%s1 + $0x26c] sm:$0xf]
  %v171 = vld [vmem:[%s1 + $0x270] sm:$0xf]
  %v172 = vld [vmem:[%s1 + $0x274] sm:$0xf]
  %v173 = vld [vmem:[%s1 + $0x278] sm:$0xf]
  %v174 = vld [vmem:[%s1 + $0x27c] sm:$0xf]
  %v175 = vld [vmem:[%s1 + $0x280] sm:$0xf]
  %v176 = vld [vmem:[%s1 + $0x284] sm:$0xf]
  %v177 = vld [vmem:[%s1 + $0x288] sm:$0xf]
  %v178 = vld [vmem:[%s1 + $0x28c] sm:$0xf]
  %v179 = vld [vmem:[%s1 + $0x290] sm:$0xf]
  %v180 = vld [vmem:[%s1 + $0x294] sm:$0xf]
  %v181 = vld [vmem:[%s1 + $0x298] sm:$0xf]
  %v182 = vld [vmem:[%s1 + $0x29c] sm:$0xf]
  %v183 = vld [vmem:[%s1 + $0x2a0] sm:$0xf]
  %v184 = vld [vmem:[%s1 + $0x2a4] sm:$0xf]
  %v185 = vld [vmem:[%s1 + $0x2a8] sm:$0xf]
  %v186 = vld [vmem:[%s1 + $0x2ac] sm:$0xf]
  %v187 = vld [vmem:[%s1 + $0x2b0] sm:$0xf]
  %v188 = vld [vmem:[%s1 + $0x2b4] sm:$0xf]
  %v189 = vld [vmem:[%s1 + $0x2b8] sm:$0xf]
  %v190 = vld [vmem:[%s1 + $0x2bc] sm:$0xf]
  %v191 = vld [vmem:[%s1 + $0x2c0] sm:$0xf]
  %v192 = vld [vmem:[%s1 + $0x2c4] sm:$0xf]
  %v193 = vld [vmem:[%s1 + $0x2c8] sm:$0xf]
  %v194 = vld [vmem:[%s1 + $0x2cc] sm:$0xf]
  %v195 = vld [vmem:[%s1 + $0x2d0] sm:$0xf]
  %v196 = vld [vmem:[%s1 + $0x2d4] sm:$0xf]
  %v197 = vld [vmem:[%s1 + $0x2d8] sm:$0xf]
  %v198 = vld [vmem:[%s1 + $0x2dc] sm:$0xf]
  %v199 = vld [vmem:[%s1 + $0x2e0] sm:$0xf]
  %v200 = vld [vmem:[%s1 + $0x2e4] sm:$0xf]
  %v201 = vld [vmem:[%s1 + $0x2e8] sm:$0xf]
  %v202 = vld [vmem:[%s1 + $0x2ec] sm:$0xf]
  %v203 = vld [vmem:[%s1 + $0x2f0] sm:$0xf]
  %v204 = vld [vmem:[%s1 + $0x2f4] sm:$0xf]
  %v205 = vld [vmem:[%s1 + $0x2f8] sm:$0xf]
  %v206 = vld [vmem:[%s1 + $0x2fc] sm:$0xf]
  %v207 = vld [vmem:[%s1 + $0x300] sm:$0xf]
  %v208 = vld [vmem:[%s1 + $0x304] sm:$0xf]
  %v209 = vld [vmem:[%s1 + $0x308] sm:$0xf]
  %v210 = vld [vmem:[%s1 + $0x30c] sm:$0xf]
  %v211 = vld [vmem:[%s1 + $0x310] sm:$0xf]
  %v212 = vld [vmem:[%s1 + $0x314] sm:$0xf]
  %v213 = vld [vmem:[%s1 + $0x318] sm:$0xf]
  %v214 = vld [vmem:[%s1 + $0x31c] sm:$0xf]
  %v215 = vld [vmem:[%s1 + $0x320] sm:$0xf]
  %v216 = vld [vmem:[%s1 + $0x324] sm:$0xf]
  %v217 = vld [vmem:[%s1 + $0x328] sm:$0xf]
  %v218 = vld [vmem:[%s1 + $0x32c] sm:$0xf]
  %v219 = vld [vmem:[%s1 + $0x330] sm:$0xf]
  %v220 = vld [vmem:[%s1 + $0x334] sm:$0xf]
  %v221 = vld [vmem:[%s1 + $0x338] sm:$0xf]
  %v222 = vld [vmem:[%s1 + $0x33c] sm:$0xf]
  %v223 = vld [vmem:[%s1 + $0x340] sm:$0xf]
  %v224 = vld [vmem:[%s1 + $0x344] sm:$0xf]
  %v225 = vld [vmem:[%s1 + $0x348] sm:$0xf]
  %v226 = vld [vmem:[%s1 + $0x34c] sm:$0xf]
  %v227 = vld [vmem:[%s1 + $0x350] sm:$0xf]
  %v228 = vld [vmem:[%s1 + $0x354] sm:$0xf]
  %v229 = vld [vmem:[%s1 + $0x358] sm:$0xf]
  %v230 = vld [vmem:[%s1 + $0x35c] sm:$0xf]
  %v231 = vld [vmem:[%s1 + $0x360] sm:$0xf]
  %v232 = vld [vmem:[%s1 + $0x364] sm:$0xf]
  %v233 = vld [vmem:[%s1 + $0x368] sm:$0xf]
  %v234 = vld [vmem:[%s1 + $0x36c] sm:$0xf]
  %v235 = vld [vmem:[%s1 + $0x370] sm:$0xf]
  %v236 = vld [vmem:[%s1 + $0x374] sm:$0xf]
  %v237 = vld [vmem:[%s1 + $0x378] sm:$0xf]
  %v238 = vld [vmem:[%s1 + $0x37c] sm:$0xf]
  %v239 = vld [vmem:[%s1 + $0x380] sm:$0xf]
  %v240 = vld [vmem:[%s1 + $0x384] sm:$0xf]
  %v241 = vld [vmem:[%s1 + $0x388] sm:$0xf]
  %v242 = vld [vmem:[%s1 + $0x38c] sm:$0xf]
  %v243 = vld [vmem:[%s1 + $0x390] sm:$0xf]
  %v244 = vld [vmem:[%s1 + $0x394] sm:$0xf]
  %v245 = vld [vmem:[%s1 + $0x398] sm:$0xf]
  %v246 = vld [vmem:[%s1 + $0x39c] sm:$0xf]
  %v247 = vld [vmem:[%s1 + $0x3a0] sm:$0xf]
  %v248 = vld [vmem:[%s1 + $0x3a4] sm:$0xf]
  %v249 = vld [vmem:[%s1 + $0x3a8] sm:$0xf]
  %v250 = vld [vmem:[%s1 + $0x3ac] sm:$0xf]
  %v251 = vld [vmem:[%s1 + $0x3b0] sm:$0xf]
  %v252 = vld [vmem:[%s1 + $0x3b4] sm:$0xf]
  %v253 = vld [vmem:[%s1 + $0x3b8] sm:$0xf]
  %v254 = vld [vmem:[%s1 + $0x3bc] sm:$0xf]
  %v255 = vld [vmem:[%s1 + $0x3c0] sm:$0xf]
  %v256 = vld [vmem:[%s1 + $0x3c4] sm:$0xf]
  %v257 = vld [vmem:[%s1 + $0x3c8] sm:$0xf]
  %v258 = vld [vmem:[%s1 + $0x3cc] sm:$0xf]
  %v259 = vld [vmem:[%s1 + $0x3d0] sm:$0xf]
  %v260 = vld [vmem:[%s1 + $0x3d4] sm:$0xf]
  %v261 = vld [vmem:[%s1 + $0x3d8] sm:$0xf]
  %v262 = vld [vmem:[%s1 + $0x3dc] sm:$0xf]
  %v263 = vld [vmem:[%s1 + $0x3e0] sm:$0xf]
  %v264 = vld [vmem:[%s1 + $0x3e4] sm:$0xf]
  %v265 = vld [vmem:[%s1 + $0x3e8] sm:$0xf]
  %v266 = vld [vmem:[%s1 + $0x3ec] sm:$0xf]
  %v267 = vld [vmem:[%s1 + $0x3f0] sm:$0xf]
  %v268 = vld [vmem:[%s1 + $0x3f4] sm:$0xf]
  %v269 = vld [vmem:[%s1 + $0x3f8] sm:$0xf]
  %v270 = vld [vmem:[%s1 + $0x3fc] sm:$0xf]
  %v271 = vld [vmem:[%s0] sm:$0xff]
  %v272 = vld [vmem:[%s0 + $0x8] sm:$0xff]
  %v273 = vld [vmem:[%s0 + $0x10] sm:$0xff]
  %v274 = vld [vmem:[%s0 + $0x18] sm:$0xff]
  %v275 = vld [vmem:[%s0 + $0x20] sm:$0xff]
  %v276 = vld [vmem:[%s0 + $0x28] sm:$0xff]
  %v277 = vld [vmem:[%s0 + $0x30] sm:$0xff]
  %v278 = vld [vmem:[%s0 + $0x38] sm:$0xff]
  %v279 = vld [vmem:[%s0 + $0x40] sm:$0xff]
  %v280 = vld [vmem:[%s0 + $0x48] sm:$0xff]
  %v281 = vld [vmem:[%s0 + $0x50] sm:$0xff]
  %v282 = vld [vmem:[%s0 + $0x58] sm:$0xff]
  %v283 = vld [vmem:[%s0 + $0x60] sm:$0xff]
  %v284 = vld [vmem:[%s0 + $0x68] sm:$0xff]
  %v285 = vld [vmem:[%s0 + $0x70] sm:$0xff]
  %v286 = vld [vmem:[%s0 + $0x78] sm:$0xff]
  %v287 = vld [vmem:[%s0 + $0x80] sm:$0xff]
  %v288 = vld [vmem:[%s0 + $0x88] sm:$0xff]
  %v289 = vld [vmem:[%s0 + $0x90] sm:$0xff]
  %v290 = vld [vmem:[%s0 + $0x98] sm:$0xff]
  %v291 = vld [vmem:[%s0 + $0xa0] sm:$0xff]
  %v292 = vld [vmem:[%s0 + $0xa8] sm:$0xff]
  %v293 = vld [vmem:[%s0 + $0xb0] sm:$0xff]
  %v294 = vld [vmem:[%s0 + $0xb8] sm:$0xff]
  %v295 = vld [vmem:[%s0 + $0xc0] sm:$0xff]
  %v296 = vld [vmem:[%s0 + $0xc8] sm:$0xff]
  %v297 = vld [vmem:[%s0 + $0xd0] sm:$0xff]
  %v298 = vld [vmem:[%s0 + $0xd8] sm:$0xff]
  %v299 = vld [vmem:[%s0 + $0xe0] sm:$0xff]
  %v300 = vld [vmem:[%s0 + $0xe8] sm:$0xff]
  %v301 = vld [vmem:[%s0 + $0xf0] sm:$0xff]
  %v302 = vld [vmem:[%s0 + $0xf8] sm:$0xff]
  %v303 = vld [vmem:[%s0 + $0x100] sm:$0xff]
  %v304 = vld [vmem:[%s0 + $0x108] sm:$0xff]
  %v305 = vld [vmem:[%s0 + $0x110] sm:$0xff]
  %v306 = vld [vmem:[%s0 + $0x118] sm:$0xff]
  %v307 = vld [vmem:[%s0 + $0x120] sm:$0xff]
  %v308 = vld [vmem:[%s0 + $0x128] sm:$0xff]
  %v309 = vld [vmem:[%s0 + $0x130] sm:$0xff]
  %v310 = vld [vmem:[%s0 + $0x138] sm:$0xff]
  %v311 = vld [vmem:[%s0 + $0x140] sm:$0xff]
  %v312 = vld [vmem:[%s0 + $0x148] sm:$0xff]
  %v313 = vld [vmem:[%s0 + $0x150] sm:$0xff]
  %v314 = vld [vmem:[%s0 + $0x158] sm:$0xff]
  %v315 = vld [vmem:[%s0 + $0x160] sm:$0xff]
  %v316 = vld [vmem:[%s0 + $0x168] sm:$0xff]
  %v317 = vld [vmem:[%s0 + $0x170] sm:$0xff]
  %v318 = vld [vmem:[%s0 + $0x178] sm:$0xff]
  %v319 = vld [vmem:[%s0 + $0x180] sm:$0xff]
  %v320 = vld [vmem:[%s0 + $0x188] sm:$0xff]
  %v321 = vld [vmem:[%s0 + $0x190] sm:$0xff]
  %v322 = vld [vmem:[%s0 + $0x198] sm:$0xff]
  %v323 = vld [vmem:[%s0 + $0x1a0] sm:$0xff]
  %v324 = vld [vmem:[%s0 + $0x1a8] sm:$0xff]
  %v325 = vld [vmem:[%s0 + $0x1b0] sm:$0xff]
  %v326 = vld [vmem:[%s0 + $0x1b8] sm:$0xff]
  %v327 = vld [vmem:[%s0 + $0x1c0] sm:$0xff]
  %v328 = vld [vmem:[%s0 + $0x1c8] sm:$0xff]
  %v329 = vld [vmem:[%s0 + $0x1d0] sm:$0xff]
  %v330 = vld [vmem:[%s0 + $0x1d8] sm:$0xff]
  %v331 = vld [vmem:[%s0 + $0x1e0] sm:$0xff]
  %v332 = vld [vmem:[%s0 + $0x1e8] sm:$0xff]
  %v333 = vld [vmem:[%s0 + $0x1f0] sm:$0xff]
  %v334 = vld [vmem:[%s0 + $0x1f8] sm:$0xff]
  %v335 = vpack.c.bf16 %v287, %v271
  %v336 = vpack.c.bf16 %v288, %v272
  %v337 = vpack.c.bf16 %v289, %v273
  %v338 = vpack.c.bf16 %v290, %v274
  %v339 = vpack.c.bf16 %v291, %v275
  %v340 = vpack.c.bf16 %v292, %v276
  %v341 = vpack.c.bf16 %v293, %v277
  %v342 = vpack.c.bf16 %v294, %v278
  %v343 = vpack.c.bf16 %v295, %v279
  %v344 = vpack.c.bf16 %v296, %v280
  %v345 = vpack.c.bf16 %v297, %v281
  %v346 = vpack.c.bf16 %v298, %v282
  %v347 = vpack.c.bf16 %v299, %v283
  %v348 = vpack.c.bf16 %v300, %v284
  %v349 = vpack.c.bf16 %v301, %v285
  %v350 = vpack.c.bf16 %v302, %v286
  %v351 = vpack.c.bf16 %v319, %v303
  %v352 = vpack.c.bf16 %v320, %v304
  %v353 = vpack.c.bf16 %v321, %v305
  %v354 = vpack.c.bf16 %v322, %v306
  %v355 = vpack.c.bf16 %v323, %v307
  %v356 = vpack.c.bf16 %v324, %v308
  %v357 = vpack.c.bf16 %v325, %v309
  %v358 = vpack.c.bf16 %v326, %v310
  %v359 = vpack.c.bf16 %v327, %v311
  %v360 = vpack.c.bf16 %v328, %v312
  %v361 = vpack.c.bf16 %v329, %v313
  %v362 = vpack.c.bf16 %v330, %v314
  %v363 = vpack.c.bf16 %v331, %v315
  %v364 = vpack.c.bf16 %v332, %v316
  %v365 = vpack.c.bf16 %v333, %v317
  %v366 = vpack.c.bf16 %v334, %v318
  %v367 = vld [vmem:[%s2] sm:$0x1]
  %v369 = vlaneseq
  %v370 = vshrl.u32 %v369, 7
  %v371 = vsub.s32 0, %v370
  %v372 = vrot.slane %v367, %v371
  %v630 = vunpack.c.l.b16 %v15
  %v631 = vunpack.c.l.b16 %v16
  %v632 = vunpack.c.l.b16 %v17
  %v633 = vunpack.c.l.b16 %v18
  %v634 = vunpack.c.l.b16 %v19
  %v635 = vunpack.c.l.b16 %v20
  %v636 = vunpack.c.l.b16 %v21
  %v637 = vunpack.c.l.b16 %v22
  %v638 = vunpack.c.l.b16 %v23
  %v639 = vunpack.c.l.b16 %v24
  %v640 = vunpack.c.l.b16 %v25
  %v641 = vunpack.c.l.b16 %v26
  %v642 = vunpack.c.l.b16 %v27
  %v643 = vunpack.c.l.b16 %v28
  %v644 = vunpack.c.l.b16 %v29
  %v645 = vunpack.c.l.b16 %v30
  %v646 = vunpack.c.l.b16 %v31
  %v647 = vunpack.c.l.b16 %v32
  %v648 = vunpack.c.l.b16 %v33
  %v649 = vunpack.c.l.b16 %v34
  %v650 = vunpack.c.l.b16 %v35
  %v651 = vunpack.c.l.b16 %v36
  %v652 = vunpack.c.l.b16 %v37
  %v653 = vunpack.c.l.b16 %v38
  %v654 = vunpack.c.l.b16 %v39
  %v655 = vunpack.c.l.b16 %v40
  %v656 = vunpack.c.l.b16 %v41
  %v657 = vunpack.c.l.b16 %v42
  %v658 = vunpack.c.l.b16 %v43
  %v659 = vunpack.c.l.b16 %v44
  %v660 = vunpack.c.l.b16 %v45
  %v661 = vunpack.c.l.b16 %v46
  %v662 = vunpack.c.l.b16 %v47
  %v663 = vunpack.c.l.b16 %v48
  %v664 = vunpack.c.l.b16 %v49
  %v665 = vunpack.c.l.b16 %v50
  %v666 = vunpack.c.l.b16 %v51
  %v667 = vunpack.c.l.b16 %v52
  %v668 = vunpack.c.l.b16 %v53
  %v669 = vunpack.c.l.b16 %v54
  %v670 = vunpack.c.l.b16 %v55
  %v671 = vunpack.c.l.b16 %v56
  %v672 = vunpack.c.l.b16 %v57
  %v673 = vunpack.c.l.b16 %v58
  %v674 = vunpack.c.l.b16 %v59
  %v675 = vunpack.c.l.b16 %v60
  %v676 = vunpack.c.l.b16 %v61
  %v677 = vunpack.c.l.b16 %v62
  %v678 = vunpack.c.l.b16 %v63
  %v679 = vunpack.c.l.b16 %v64
  %v680 = vunpack.c.l.b16 %v65
  %v681 = vunpack.c.l.b16 %v66
  %v682 = vunpack.c.l.b16 %v67
  %v683 = vunpack.c.l.b16 %v68
  %v684 = vunpack.c.l.b16 %v69
  %v685 = vunpack.c.l.b16 %v70
  %v686 = vunpack.c.l.b16 %v71
  %v687 = vunpack.c.l.b16 %v72
  %v688 = vunpack.c.l.b16 %v73
  %v689 = vunpack.c.l.b16 %v74
  %v690 = vunpack.c.l.b16 %v75
  %v691 = vunpack.c.l.b16 %v76
  %v692 = vunpack.c.l.b16 %v77
  %v693 = vunpack.c.l.b16 %v78
  %v694 = vunpack.c.l.b16 %v79
  %v695 = vunpack.c.l.b16 %v80
  %v696 = vunpack.c.l.b16 %v81
  %v697 = vunpack.c.l.b16 %v82
  %v698 = vunpack.c.l.b16 %v83
  %v699 = vunpack.c.l.b16 %v84
  %v700 = vunpack.c.l.b16 %v85
  %v701 = vunpack.c.l.b16 %v86
  %v702 = vunpack.c.l.b16 %v87
  %v703 = vunpack.c.l.b16 %v88
  %v704 = vunpack.c.l.b16 %v89
  %v705 = vunpack.c.l.b16 %v90
  %v706 = vunpack.c.l.b16 %v91
  %v707 = vunpack.c.l.b16 %v92
  %v708 = vunpack.c.l.b16 %v93
  %v709 = vunpack.c.l.b16 %v94
  %v710 = vunpack.c.l.b16 %v95
  %v711 = vunpack.c.l.b16 %v96
  %v712 = vunpack.c.l.b16 %v97
  %v713 = vunpack.c.l.b16 %v98
  %v714 = vunpack.c.l.b16 %v99
  %v715 = vunpack.c.l.b16 %v100
  %v716 = vunpack.c.l.b16 %v101
  %v717 = vunpack.c.l.b16 %v102
  %v718 = vunpack.c.l.b16 %v103
  %v719 = vunpack.c.l.b16 %v104
  %v720 = vunpack.c.l.b16 %v105
  %v721 = vunpack.c.l.b16 %v106
  %v722 = vunpack.c.l.b16 %v107
  %v723 = vunpack.c.l.b16 %v108
  %v724 = vunpack.c.l.b16 %v109
  %v725 = vunpack.c.l.b16 %v110
  %v726 = vunpack.c.l.b16 %v111
  %v727 = vunpack.c.l.b16 %v112
  %v728 = vunpack.c.l.b16 %v113
  %v729 = vunpack.c.l.b16 %v114
  %v730 = vunpack.c.l.b16 %v115
  %v731 = vunpack.c.l.b16 %v116
  %v732 = vunpack.c.l.b16 %v117
  %v733 = vunpack.c.l.b16 %v118
  %v734 = vunpack.c.l.b16 %v119
  %v735 = vunpack.c.l.b16 %v120
  %v736 = vunpack.c.l.b16 %v121
  %v737 = vunpack.c.l.b16 %v122
  %v738 = vunpack.c.l.b16 %v123
  %v739 = vunpack.c.l.b16 %v124
  %v740 = vunpack.c.l.b16 %v125
  %v741 = vunpack.c.l.b16 %v126
  %v742 = vunpack.c.l.b16 %v127
  %v743 = vunpack.c.l.b16 %v128
  %v744 = vunpack.c.l.b16 %v129
  %v745 = vunpack.c.l.b16 %v130
  %v746 = vunpack.c.l.b16 %v131
  %v747 = vunpack.c.l.b16 %v132
  %v748 = vunpack.c.l.b16 %v133
  %v749 = vunpack.c.l.b16 %v134
  %v750 = vunpack.c.l.b16 %v135
  %v751 = vunpack.c.l.b16 %v136
  %v752 = vunpack.c.l.b16 %v137
  %v753 = vunpack.c.l.b16 %v138
  %v754 = vunpack.c.l.b16 %v139
  %v755 = vunpack.c.l.b16 %v140
  %v756 = vunpack.c.l.b16 %v141
  %v757 = vunpack.c.l.b16 %v142
  %v758 = vunpack.c.l.b16 %v143
  %v759 = vunpack.c.l.b16 %v144
  %v760 = vunpack.c.l.b16 %v145
  %v761 = vunpack.c.l.b16 %v146
  %v762 = vunpack.c.l.b16 %v147
  %v763 = vunpack.c.l.b16 %v148
  %v764 = vunpack.c.l.b16 %v149
  %v765 = vunpack.c.l.b16 %v150
  %v766 = vunpack.c.l.b16 %v151
  %v767 = vunpack.c.l.b16 %v152
  %v768 = vunpack.c.l.b16 %v153
  %v769 = vunpack.c.l.b16 %v154
  %v770 = vunpack.c.l.b16 %v155
  %v771 = vunpack.c.l.b16 %v156
  %v772 = vunpack.c.l.b16 %v157
  %v773 = vunpack.c.l.b16 %v158
  %v774 = vunpack.c.l.b16 %v159
  %v775 = vunpack.c.l.b16 %v160
  %v776 = vunpack.c.l.b16 %v161
  %v777 = vunpack.c.l.b16 %v162
  %v778 = vunpack.c.l.b16 %v163
  %v779 = vunpack.c.l.b16 %v164
  %v780 = vunpack.c.l.b16 %v165
  %v781 = vunpack.c.l.b16 %v166
  %v782 = vunpack.c.l.b16 %v167
  %v783 = vunpack.c.l.b16 %v168
  %v784 = vunpack.c.l.b16 %v169
  %v785 = vunpack.c.l.b16 %v170
  %v786 = vunpack.c.l.b16 %v171
  %v787 = vunpack.c.l.b16 %v172
  %v788 = vunpack.c.l.b16 %v173
  %v789 = vunpack.c.l.b16 %v174
  %v790 = vunpack.c.l.b16 %v175
  %v791 = vunpack.c.l.b16 %v176
  %v792 = vunpack.c.l.b16 %v177
  %v793 = vunpack.c.l.b16 %v178
  %v794 = vunpack.c.l.b16 %v179
  %v795 = vunpack.c.l.b16 %v180
  %v796 = vunpack.c.l.b16 %v181
  %v797 = vunpack.c.l.b16 %v182
  %v798 = vunpack.c.l.b16 %v183
  %v799 = vunpack.c.l.b16 %v184
  %v800 = vunpack.c.l.b16 %v185
  %v801 = vunpack.c.l.b16 %v186
  %v802 = vunpack.c.l.b16 %v187
  %v803 = vunpack.c.l.b16 %v188
  %v804 = vunpack.c.l.b16 %v189
  %v805 = vunpack.c.l.b16 %v190
  %v806 = vunpack.c.l.b16 %v191
  %v807 = vunpack.c.l.b16 %v192
  %v808 = vunpack.c.l.b16 %v193
  %v809 = vunpack.c.l.b16 %v194
  %v810 = vunpack.c.l.b16 %v195
  %v811 = vunpack.c.l.b16 %v196
  %v812 = vunpack.c.l.b16 %v197
  %v813 = vunpack.c.l.b16 %v198
  %v814 = vunpack.c.l.b16 %v199
  %v815 = vunpack.c.l.b16 %v200
  %v816 = vunpack.c.l.b16 %v201
  %v817 = vunpack.c.l.b16 %v202
  %v818 = vunpack.c.l.b16 %v203
  %v819 = vunpack.c.l.b16 %v204
  %v820 = vunpack.c.l.b16 %v205
  %v821 = vunpack.c.l.b16 %v206
  %v822 = vunpack.c.l.b16 %v207
  %v823 = vunpack.c.l.b16 %v208
  %v824 = vunpack.c.l.b16 %v209
  %v825 = vunpack.c.l.b16 %v210
  %v826 = vunpack.c.l.b16 %v211
  %v827 = vunpack.c.l.b16 %v212
  %v828 = vunpack.c.l.b16 %v213
  %v829 = vunpack.c.l.b16 %v214
  %v830 = vunpack.c.l.b16 %v215
  %v831 = vunpack.c.l.b16 %v216
  %v832 = vunpack.c.l.b16 %v217
  %v833 = vunpack.c.l.b16 %v218
  %v834 = vunpack.c.l.b16 %v219
  %v835 = vunpack.c.l.b16 %v220
  %v836 = vunpack.c.l.b16 %v221
  %v837 = vunpack.c.l.b16 %v222
  %v838 = vunpack.c.l.b16 %v223
  %v839 = vunpack.c.l.b16 %v224
  %v840 = vunpack.c.l.b16 %v225
  %v841 = vunpack.c.l.b16 %v226
  %v842 = vunpack.c.l.b16 %v227
  %v843 = vunpack.c.l.b16 %v228
  %v844 = vunpack.c.l.b16 %v229
  %v845 = vunpack.c.l.b16 %v230
  %v846 = vunpack.c.l.b16 %v231
  %v847 = vunpack.c.l.b16 %v232
  %v848 = vunpack.c.l.b16 %v233
  %v849 = vunpack.c.l.b16 %v234
  %v850 = vunpack.c.l.b16 %v235
  %v851 = vunpack.c.l.b16 %v236
  %v852 = vunpack.c.l.b16 %v237
  %v853 = vunpack.c.l.b16 %v238
  %v854 = vunpack.c.l.b16 %v239
  %v855 = vunpack.c.l.b16 %v240
  %v856 = vunpack.c.l.b16 %v241
  %v857 = vunpack.c.l.b16 %v242
  %v858 = vunpack.c.l.b16 %v243
  %v859 = vunpack.c.l.b16 %v244
  %v860 = vunpack.c.l.b16 %v245
  %v861 = vunpack.c.l.b16 %v246
  %v862 = vunpack.c.l.b16 %v247
  %v863 = vunpack.c.l.b16 %v248
  %v864 = vunpack.c.l.b16 %v249
  %v865 = vunpack.c.l.b16 %v250
  %v866 = vunpack.c.l.b16 %v251
  %v867 = vunpack.c.l.b16 %v252
  %v868 = vunpack.c.l.b16 %v253
  %v869 = vunpack.c.l.b16 %v254
  %v870 = vunpack.c.l.b16 %v255
  %v871 = vunpack.c.l.b16 %v256
  %v872 = vunpack.c.l.b16 %v257
  %v873 = vunpack.c.l.b16 %v258
  %v874 = vunpack.c.l.b16 %v259
  %v875 = vunpack.c.l.b16 %v260
  %v876 = vunpack.c.l.b16 %v261
  %v877 = vunpack.c.l.b16 %v262
  %v878 = vunpack.c.l.b16 %v263
  %v879 = vunpack.c.l.b16 %v264
  %v880 = vunpack.c.l.b16 %v265
  %v881 = vunpack.c.l.b16 %v266
  %v882 = vunpack.c.l.b16 %v267
  %v883 = vunpack.c.l.b16 %v268
  %v884 = vunpack.c.l.b16 %v269
  %v885 = vunpack.c.l.b16 %v270
  %v886 = vpack.c.b16 %v631, %v630
  %v887 = vpack.c.b16 %v633, %v632
  %v888 = vpack.c.b16 %v635, %v634
  %v889 = vpack.c.b16 %v637, %v636
  %v890 = vpack.c.b16 %v639, %v638
  %v891 = vpack.c.b16 %v641, %v640
  %v892 = vpack.c.b16 %v643, %v642
  %v893 = vpack.c.b16 %v645, %v644
  %v894 = vpack.c.b16 %v647, %v646
  %v895 = vpack.c.b16 %v649, %v648
  %v896 = vpack.c.b16 %v651, %v650
  %v897 = vpack.c.b16 %v653, %v652
  %v898 = vpack.c.b16 %v655, %v654
  %v899 = vpack.c.b16 %v657, %v656
  %v900 = vpack.c.b16 %v659, %v658
  %v901 = vpack.c.b16 %v661, %v660
  %v902 = vpack.c.b16 %v663, %v662
  %v903 = vpack.c.b16 %v665, %v664
  %v904 = vpack.c.b16 %v667, %v666
  %v905 = vpack.c.b16 %v669, %v668
  %v906 = vpack.c.b16 %v671, %v670
  %v907 = vpack.c.b16 %v673, %v672
  %v908 = vpack.c.b16 %v675, %v674
  %v909 = vpack.c.b16 %v677, %v676
  %v910 = vpack.c.b16 %v679, %v678
  %v911 = vpack.c.b16 %v681, %v680
  %v912 = vpack.c.b16 %v683, %v682
  %v913 = vpack.c.b16 %v685, %v684
  %v914 = vpack.c.b16 %v687, %v686
  %v915 = vpack.c.b16 %v689, %v688
  %v916 = vpack.c.b16 %v691, %v690
  %v917 = vpack.c.b16 %v693, %v692
  %v918 = vpack.c.b16 %v695, %v694
  %v919 = vpack.c.b16 %v697, %v696
  %v920 = vpack.c.b16 %v699, %v698
  %v921 = vpack.c.b16 %v701, %v700
  %v922 = vpack.c.b16 %v703, %v702
  %v923 = vpack.c.b16 %v705, %v704
  %v924 = vpack.c.b16 %v707, %v706
  %v925 = vpack.c.b16 %v709, %v708
  %v926 = vpack.c.b16 %v711, %v710
  %v927 = vpack.c.b16 %v713, %v712
  %v928 = vpack.c.b16 %v715, %v714
  %v929 = vpack.c.b16 %v717, %v716
  %v930 = vpack.c.b16 %v719, %v718
  %v931 = vpack.c.b16 %v721, %v720
  %v932 = vpack.c.b16 %v723, %v722
  %v933 = vpack.c.b16 %v725, %v724
  %v934 = vpack.c.b16 %v727, %v726
  %v935 = vpack.c.b16 %v729, %v728
  %v936 = vpack.c.b16 %v731, %v730
  %v937 = vpack.c.b16 %v733, %v732
  %v938 = vpack.c.b16 %v735, %v734
  %v939 = vpack.c.b16 %v737, %v736
  %v940 = vpack.c.b16 %v739, %v738
  %v941 = vpack.c.b16 %v741, %v740
  %v942 = vpack.c.b16 %v743, %v742
  %v943 = vpack.c.b16 %v745, %v744
  %v944 = vpack.c.b16 %v747, %v746
  %v945 = vpack.c.b16 %v749, %v748
  %v946 = vpack.c.b16 %v751, %v750
  %v947 = vpack.c.b16 %v753, %v752
  %v948 = vpack.c.b16 %v755, %v754
  %v949 = vpack.c.b16 %v757, %v756
  %v950 = vpack.c.b16 %v759, %v758
  %v951 = vpack.c.b16 %v761, %v760
  %v952 = vpack.c.b16 %v763, %v762
  %v953 = vpack.c.b16 %v765, %v764
  %v954 = vpack.c.b16 %v767, %v766
  %v955 = vpack.c.b16 %v769, %v768
  %v956 = vpack.c.b16 %v771, %v770
  %v957 = vpack.c.b16 %v773, %v772
  %v958 = vpack.c.b16 %v775, %v774
  %v959 = vpack.c.b16 %v777, %v776
  %v960 = vpack.c.b16 %v779, %v778
  %v961 = vpack.c.b16 %v781, %v780
  %v962 = vpack.c.b16 %v783, %v782
  %v963 = vpack.c.b16 %v785, %v784
  %v964 = vpack.c.b16 %v787, %v786
  %v965 = vpack.c.b16 %v789, %v788
  %v966 = vpack.c.b16 %v791, %v790
  %v967 = vpack.c.b16 %v793, %v792
  %v968 = vpack.c.b16 %v795, %v794
  %v969 = vpack.c.b16 %v797, %v796
  %v970 = vpack.c.b16 %v799, %v798
  %v971 = vpack.c.b16 %v801, %v800
  %v972 = vpack.c.b16 %v803, %v802
  %v973 = vpack.c.b16 %v805, %v804
  %v974 = vpack.c.b16 %v807, %v806
  %v975 = vpack.c.b16 %v809, %v808
  %v976 = vpack.c.b16 %v811, %v810
  %v977 = vpack.c.b16 %v813, %v812
  %v978 = vpack.c.b16 %v815, %v814
  %v979 = vpack.c.b16 %v817, %v816
  %v980 = vpack.c.b16 %v819, %v818
  %v981 = vpack.c.b16 %v821, %v820
  %v982 = vpack.c.b16 %v823, %v822
  %v983 = vpack.c.b16 %v825, %v824
  %v984 = vpack.c.b16 %v827, %v826
  %v985 = vpack.c.b16 %v829, %v828
  %v986 = vpack.c.b16 %v831, %v830
  %v987 = vpack.c.b16 %v833, %v832
  %v988 = vpack.c.b16 %v835, %v834
  %v989 = vpack.c.b16 %v837, %v836
  %v990 = vpack.c.b16 %v839, %v838
  %v991 = vpack.c.b16 %v841, %v840
  %v992 = vpack.c.b16 %v843, %v842
  %v993 = vpack.c.b16 %v845, %v844
  %v994 = vpack.c.b16 %v847, %v846
  %v995 = vpack.c.b16 %v849, %v848
  %v996 = vpack.c.b16 %v851, %v850
  %v997 = vpack.c.b16 %v853, %v852
  %v998 = vpack.c.b16 %v855, %v854
  %v999 = vpack.c.b16 %v857, %v856
  %v1000 = vpack.c.b16 %v859, %v858
  %v1001 = vpack.c.b16 %v861, %v860
  %v1002 = vpack.c.b16 %v863, %v862
  %v1003 = vpack.c.b16 %v865, %v864
  %v1004 = vpack.c.b16 %v867, %v866
  %v1005 = vpack.c.b16 %v869, %v868
  %v1006 = vpack.c.b16 %v871, %v870
  %v1007 = vpack.c.b16 %v873, %v872
  %v1008 = vpack.c.b16 %v875, %v874
  %v1009 = vpack.c.b16 %v877, %v876
  %v1010 = vpack.c.b16 %v879, %v878
  %v1011 = vpack.c.b16 %v881, %v880
  %v1012 = vpack.c.b16 %v883, %v882
  %v1013 = vpack.c.b16 %v885, %v884
  %1142 = vmatprep.subr.bf16.mxu0 0
  %1143 = vmatpush1.bf16.msra.mxu0 %v886
  %1144 = vmatprep.subr.bf16.mxu0 0
  %1145 = vmatpush1.bf16.msra.mxu0 %v887
  %1146 = vmatprep.subr.bf16.mxu0 0
  %1147 = vmatpush1.bf16.msra.mxu0 %v888
  %1148 = vmatprep.subr.bf16.mxu0 0
  %1149 = vmatpush1.bf16.msra.mxu0 %v889
  %1150 = vmatprep.subr.bf16.mxu0 0
  %1151 = vmatpush1.bf16.msra.mxu0 %v890
  %1152 = vmatprep.subr.bf16.mxu0 0
  %1153 = vmatpush1.bf16.msra.mxu0 %v891
  %1154 = vmatprep.subr.bf16.mxu0 0
  %1155 = vmatpush1.bf16.msra.mxu0 %v892
  %1156 = vmatprep.subr.bf16.mxu0 0
  %1157 = vmatpush1.bf16.msra.mxu0 %v893
  %1158 = vmatprep.subr.bf16.mxu0 0
  %1159 = vmatpush1.bf16.msra.mxu0 %v894
  %1160 = vmatprep.subr.bf16.mxu0 0
  %1161 = vmatpush1.bf16.msra.mxu0 %v895
  %1162 = vmatprep.subr.bf16.mxu0 0
  %1163 = vmatpush1.bf16.msra.mxu0 %v896
  %1164 = vmatprep.subr.bf16.mxu0 0
  %1165 = vmatpush1.bf16.msra.mxu0 %v897
  %1166 = vmatprep.subr.bf16.mxu0 0
  %1167 = vmatpush1.bf16.msra.mxu0 %v898
  %1168 = vmatprep.subr.bf16.mxu0 0
  %1169 = vmatpush1.bf16.msra.mxu0 %v899
  %1170 = vmatprep.subr.bf16.mxu0 0
  %1171 = vmatpush1.bf16.msra.mxu0 %v900
  %1172 = vmatprep.subr.bf16.mxu0 0
  %1173 = vmatpush1.bf16.msra.mxu0 %v901
  %1174 = vmatprep.mubr.bf16.mxu0 %v336
  %1175 = vmatmul.mubr.bf16.gmra.mrb[0].mxu0 %v335
  %v1176 = vpop.f32.mrb[0].mxu0
  %v1177 = vadd.f32 %v372, %v1176
  %v1178 = vpop.f32.mrb[0].mxu0
  %v1179 = vpop.f32.mrb[0].mxu0
  %v1180 = vadd.f32 %v372, %v1179
  %v1181 = vpop.f32.mrb[0].mxu0
  %1182 = vmatprep.mubr.bf16.mxu0 %v352
  %1183 = vmatmul.mubr.bf16.gmra.mrb[0].mxu0 %v351
  %v1184 = vpop.f32.mrb[0].mxu0
  %v1185 = vadd.f32 %v372, %v1184
  %v1186 = vpop.f32.mrb[0].mxu0
  %v1187 = vpop.f32.mrb[0].mxu0
  %v1188 = vadd.f32 %v372, %v1187
  %v1189 = vpop.f32.mrb[0].mxu0
  %1190 = vdwg.mxu0
  %1191 = vmatprep.subr.bf16.mxu0 0
  %1192 = vmatpush1.bf16.msra.mxu0 %v902
  %1193 = vmatprep.subr.bf16.mxu0 0
  %1194 = vmatpush1.bf16.msra.mxu0 %v903
  %1195 = vmatprep.subr.bf16.mxu0 0
  %1196 = vmatpush1.bf16.msra.mxu0 %v904
  %1197 = vmatprep.subr.bf16.mxu0 0
  %1198 = vmatpush1.bf16.msra.mxu0 %v905
  %1199 = vmatprep.subr.bf16.mxu0 0
  %1200 = vmatpush1.bf16.msra.mxu0 %v906
  %1201 = vmatprep.subr.bf16.mxu0 0
  %1202 = vmatpush1.bf16.msra.mxu0 %v907
  %1203 = vmatprep.subr.bf16.mxu0 0
  %1204 = vmatpush1.bf16.msra.mxu0 %v908
  %1205 = vmatprep.subr.bf16.mxu0 0
  %1206 = vmatpush1.bf16.msra.mxu0 %v909
  %1207 = vmatprep.subr.bf16.mxu0 0
  %1208 = vmatpush1.bf16.msra.mxu0 %v910
  %1209 = vmatprep.subr.bf16.mxu0 0
  %1210 = vmatpush1.bf16.msra.mxu0 %v911
  %1211 = vmatprep.subr.bf16.mxu0 0
  %1212 = vmatpush1.bf16.msra.mxu0 %v912
  %1213 = vmatprep.subr.bf16.mxu0 0
  %1214 = vmatpush1.bf16.msra.mxu0 %v913
  %1215 = vmatprep.subr.bf16.mxu0 0
  %1216 = vmatpush1.bf16.msra.mxu0 %v914
  %1217 = vmatprep.subr.bf16.mxu0 0
  %1218 = vmatpush1.bf16.msra.mxu0 %v915
  %1219 = vmatprep.subr.bf16.mxu0 0
  %1220 = vmatpush1.bf16.msra.mxu0 %v916
  %1221 = vmatprep.subr.bf16.mxu0 0
  %1222 = vmatpush1.bf16.msra.mxu0 %v917
  %1223 = vmatprep.mubr.bf16.mxu0 %v338
  %1224 = vmatmul.mubr.bf16.gmra.mrb[0].mxu0 %v337
  %v1225 = vpop.f32.mrb[0].mxu0
  %v1226 = vadd.f32 %v1177, %v1225
  %v1227 = vpop.f32.mrb[0].mxu0
  %v1228 = vpop.f32.mrb[0].mxu0
  %v1229 = vadd.f32 %v1180, %v1228
  %v1230 = vpop.f32.mrb[0].mxu0
  %1231 = vmatprep.mubr.bf16.mxu0 %v354
  %1232 = vmatmul.mubr.bf16.gmra.mrb[0].mxu0 %v353
  %v1233 = vpop.f32.mrb[0].mxu0
  %v1234 = vadd.f32 %v1185, %v1233
  %v1235 = vpop.f32.mrb[0].mxu0
  %v1236 = vpop.f32.mrb[0].mxu0
  %v1237 = vadd.f32 %v1188, %v1236
  %v1238 = vpop.f32.mrb[0].mxu0
  %1239 = vdwg.mxu0
  %1240 = vmatprep.subr.bf16.mxu0 0
  %1241 = vmatpush1.bf16.msra.mxu0 %v918
  %1242 = vmatprep.subr.bf16.mxu0 0
  %1243 = vmatpush1.bf16.msra.mxu0 %v919
  %1244 = vmatprep.subr.bf16.mxu0 0
  %1245 = vmatpush1.bf16.msra.mxu0 %v920
  %1246 = vmatprep.subr.bf16.mxu0 0
  %1247 = vmatpush1.bf16.msra.mxu0 %v921
  %1248 = vmatprep.subr.bf16.mxu0 0
  %1249 = vmatpush1.bf16.msra.mxu0 %v922
  %1250 = vmatprep.subr.bf16.mxu0 0
  %1251 = vmatpush1.bf16.msra.mxu0 %v923
  %1252 = vmatprep.subr.bf16.mxu0 0
  %1253 = vmatpush1.bf16.msra.mxu0 %v924
  %1254 = vmatprep.subr.bf16.mxu0 0
  %1255 = vmatpush1.bf16.msra.mxu0 %v925
  %1256 = vmatprep.subr.bf16.mxu0 0
  %1257 = vmatpush1.bf16.msra.mxu0 %v926
  %1258 = vmatprep.subr.bf16.mxu0 0
  %1259 = vmatpush1.bf16.msra.mxu0 %v927
  %1260 = vmatprep.subr.bf16.mxu0 0
  %1261 = vmatpush1.bf16.msra.mxu0 %v928
  %1262 = vmatprep.subr.bf16.mxu0 0
  %1263 = vmatpush1.bf16.msra.mxu0 %v929
  %1264 = vmatprep.subr.bf16.mxu0 0
  %1265 = vmatpush1.bf16.msra.mxu0 %v930
  %1266 = vmatprep.subr.bf16.mxu0 0
  %1267 = vmatpush1.bf16.msra.mxu0 %v931
  %1268 = vmatprep.subr.bf16.mxu0 0
  %1269 = vmatpush1.bf16.msra.mxu0 %v932
  %1270 = vmatprep.subr.bf16.mxu0 0
  %1271 = vmatpush1.bf16.msra.mxu0 %v933
  %1272 = vmatprep.mubr.bf16.mxu0 %v340
  %1273 = vmatmul.mubr.bf16.gmra.mrb[0].mxu0 %v339
  %v1274 = vpop.f32.mrb[0].mxu0
  %v1275 = vadd.f32 %v1226, %v1274
  %v1276 = vpop.f32.mrb[0].mxu0
  %v1277 = vpop.f32.mrb[0].mxu0
  %v1278 = vadd.f32 %v1229, %v1277
  %v1279 = vpop.f32.mrb[0].mxu0
  %1280 = vmatprep.mubr.bf16.mxu0 %v356
  %1281 = vmatmul.mubr.bf16.gmra.mrb[0].mxu0 %v355
  %v1282 = vpop.f32.mrb[0].mxu0
  %v1283 = vadd.f32 %v1234, %v1282
  %v1284 = vpop.f32.mrb[0].mxu0
  %v1285 = vpop.f32.mrb[0].mxu0
  %v1286 = vadd.f32 %v1237, %v1285
  %v1287 = vpop.f32.mrb[0].mxu0
  %1288 = vdwg.mxu0
  %1289 = vmatprep.subr.bf16.mxu0 0
  %1290 = vmatpush1.bf16.msra.mxu0 %v934
  %1291 = vmatprep.subr.bf16.mxu0 0
  %1292 = vmatpush1.bf16.msra.mxu0 %v935
  %1293 = vmatprep.subr.bf16.mxu0 0
  %1294 = vmatpush1.bf16.msra.mxu0 %v936
  %1295 = vmatprep.subr.bf16.mxu0 0
  %1296 = vmatpush1.bf16.msra.mxu0 %v937
  %1297 = vmatprep.subr.bf16.mxu0 0
  %1298 = vmatpush1.bf16.msra.mxu0 %v938
  %1299 = vmatprep.subr.bf16.mxu0 0
  %1300 = vmatpush1.bf16.msra.mxu0 %v939
  %1301 = vmatprep.subr.bf16.mxu0 0
  %1302 = vmatpush1.bf16.msra.mxu0 %v940
  %1303 = vmatprep.subr.bf16.mxu0 0
  %1304 = vmatpush1.bf16.msra.mxu0 %v941
  %1305 = vmatprep.subr.bf16.mxu0 0
  %1306 = vmatpush1.bf16.msra.mxu0 %v942
  %1307 = vmatprep.subr.bf16.mxu0 0
  %1308 = vmatpush1.bf16.msra.mxu0 %v943
  %1309 = vmatprep.subr.bf16.mxu0 0
  %1310 = vmatpush1.bf16.msra.mxu0 %v944
  %1311 = vmatprep.subr.bf16.mxu0 0
  %1312 = vmatpush1.bf16.msra.mxu0 %v945
  %1313 = vmatprep.subr.bf16.mxu0 0
  %1314 = vmatpush1.bf16.msra.mxu0 %v946
  %1315 = vmatprep.subr.bf16.mxu0 0
  %1316 = vmatpush1.bf16.msra.mxu0 %v947
  %1317 = vmatprep.subr.bf16.mxu0 0
  %1318 = vmatpush1.bf16.msra.mxu0 %v948
  %1319 = vmatprep.subr.bf16.mxu0 0
  %1320 = vmatpush1.bf16.msra.mxu0 %v949
  %1321 = vmatprep.mubr.bf16.mxu0 %v342
  %1322 = vmatmul.mubr.bf16.gmra.mrb[0].mxu0 %v341
  %v1323 = vpop.f32.mrb[0].mxu0
  %v1324 = vadd.f32 %v1275, %v1323
  %v1325 = vpop.f32.mrb[0].mxu0
  %v1326 = vpop.f32.mrb[0].mxu0
  %v1327 = vadd.f32 %v1278, %v1326
  %v1328 = vpop.f32.mrb[0].mxu0
  %1329 = vmatprep.mubr.bf16.mxu0 %v358
  %1330 = vmatmul.mubr.bf16.gmra.mrb[0].mxu0 %v357
  %v1331 = vpop.f32.mrb[0].mxu0
  %v1332 = vadd.f32 %v1283, %v1331
  %v1333 = vpop.f32.mrb[0].mxu0
  %v1334 = vpop.f32.mrb[0].mxu0
  %v1335 = vadd.f32 %v1286, %v1334
  %v1336 = vpop.f32.mrb[0].mxu0
  %1337 = vdwg.mxu0
  %1338 = vmatprep.subr.bf16.mxu0 0
  %1339 = vmatpush1.bf16.msra.mxu0 %v950
  %1340 = vmatprep.subr.bf16.mxu0 0
  %1341 = vmatpush1.bf16.msra.mxu0 %v951
  %1342 = vmatprep.subr.bf16.mxu0 0
  %1343 = vmatpush1.bf16.msra.mxu0 %v952
  %1344 = vmatprep.subr.bf16.mxu0 0
  %1345 = vmatpush1.bf16.msra.mxu0 %v953
  %1346 = vmatprep.subr.bf16.mxu0 0
  %1347 = vmatpush1.bf16.msra.mxu0 %v954
  %1348 = vmatprep.subr.bf16.mxu0 0
  %1349 = vmatpush1.bf16.msra.mxu0 %v955
  %1350 = vmatprep.subr.bf16.mxu0 0
  %1351 = vmatpush1.bf16.msra.mxu0 %v956
  %1352 = vmatprep.subr.bf16.mxu0 0
  %1353 = vmatpush1.bf16.msra.mxu0 %v957
  %1354 = vmatprep.subr.bf16.mxu0 0
  %1355 = vmatpush1.bf16.msra.mxu0 %v958
  %1356 = vmatprep.subr.bf16.mxu0 0
  %1357 = vmatpush1.bf16.msra.mxu0 %v959
  %1358 = vmatprep.subr.bf16.mxu0 0
  %1359 = vmatpush1.bf16.msra.mxu0 %v960
  %1360 = vmatprep.subr.bf16.mxu0 0
  %1361 = vmatpush1.bf16.msra.mxu0 %v961
  %1362 = vmatprep.subr.bf16.mxu0 0
  %1363 = vmatpush1.bf16.msra.mxu0 %v962
  %1364 = vmatprep.subr.bf16.mxu0 0
  %1365 = vmatpush1.bf16.msra.mxu0 %v963
  %1366 = vmatprep.subr.bf16.mxu0 0
  %1367 = vmatpush1.bf16.msra.mxu0 %v964
  %1368 = vmatprep.subr.bf16.mxu0 0
  %1369 = vmatpush1.bf16.msra.mxu0 %v965
  %1370 = vmatprep.mubr.bf16.mxu0 %v344
  %1371 = vmatmul.mubr.bf16.gmra.mrb[0].mxu0 %v343
  %v1372 = vpop.f32.mrb[0].mxu0
  %v1373 = vadd.f32 %v1324, %v1372
  %v1374 = vpop.f32.mrb[0].mxu0
  %v1375 = vpop.f32.mrb[0].mxu0
  %v1376 = vadd.f32 %v1327, %v1375
  %v1377 = vpop.f32.mrb[0].mxu0
  %1378 = vmatprep.mubr.bf16.mxu0 %v360
  %1379 = vmatmul.mubr.bf16.gmra.mrb[0].mxu0 %v359
  %v1380 = vpop.f32.mrb[0].mxu0
  %v1381 = vadd.f32 %v1332, %v1380
  %v1382 = vpop.f32.mrb[0].mxu0
  %v1383 = vpop.f32.mrb[0].mxu0
  %v1384 = vadd.f32 %v1335, %v1383
  %v1385 = vpop.f32.mrb[0].mxu0
  %1386 = vdwg.mxu0
  %1387 = vmatprep.subr.bf16.mxu0 0
  %1388 = vmatpush1.bf16.msra.mxu0 %v966
  %1389 = vmatprep.subr.bf16.mxu0 0
  %1390 = vmatpush1.bf16.msra.mxu0 %v967
  %1391 = vmatprep.subr.bf16.mxu0 0
  %1392 = vmatpush1.bf16.msra.mxu0 %v968
  %1393 = vmatprep.subr.bf16.mxu0 0
  %1394 = vmatpush1.bf16.msra.mxu0 %v969
  %1395 = vmatprep.subr.bf16.mxu0 0
  %1396 = vmatpush1.bf16.msra.mxu0 %v970
  %1397 = vmatprep.subr.bf16.mxu0 0
  %1398 = vmatpush1.bf16.msra.mxu0 %v971
  %1399 = vmatprep.subr.bf16.mxu0 0
  %1400 = vmatpush1.bf16.msra.mxu0 %v972
  %1401 = vmatprep.subr.bf16.mxu0 0
  %1402 = vmatpush1.bf16.msra.mxu0 %v973
  %1403 = vmatprep.subr.bf16.mxu0 0
  %1404 = vmatpush1.bf16.msra.mxu0 %v974
  %1405 = vmatprep.subr.bf16.mxu0 0
  %1406 = vmatpush1.bf16.msra.mxu0 %v975
  %1407 = vmatprep.subr.bf16.mxu0 0
  %1408 = vmatpush1.bf16.msra.mxu0 %v976
  %1409 = vmatprep.subr.bf16.mxu0 0
  %1410 = vmatpush1.bf16.msra.mxu0 %v977
  %1411 = vmatprep.subr.bf16.mxu0 0
  %1412 = vmatpush1.bf16.msra.mxu0 %v978
  %1413 = vmatprep.subr.bf16.mxu0 0
  %1414 = vmatpush1.bf16.msra.mxu0 %v979
  %1415 = vmatprep.subr.bf16.mxu0 0
  %1416 = vmatpush1.bf16.msra.mxu0 %v980
  %1417 = vmatprep.subr.bf16.mxu0 0
  %1418 = vmatpush1.bf16.msra.mxu0 %v981
  %1419 = vmatprep.mubr.bf16.mxu0 %v346
  %1420 = vmatmul.mubr.bf16.gmra.mrb[0].mxu0 %v345
  %v1421 = vpop.f32.mrb[0].mxu0
  %v1422 = vadd.f32 %v1373, %v1421
  %v1423 = vpop.f32.mrb[0].mxu0
  %v1424 = vpop.f32.mrb[0].mxu0
  %v1425 = vadd.f32 %v1376, %v1424
  %v1426 = vpop.f32.mrb[0].mxu0
  %1427 = vmatprep.mubr.bf16.mxu0 %v362
  %1428 = vmatmul.mubr.bf16.gmra.mrb[0].mxu0 %v361
  %v1429 = vpop.f32.mrb[0].mxu0
  %v1430 = vadd.f32 %v1381, %v1429
  %v1431 = vpop.f32.mrb[0].mxu0
  %v1432 = vpop.f32.mrb[0].mxu0
  %v1433 = vadd.f32 %v1384, %v1432
  %v1434 = vpop.f32.mrb[0].mxu0
  %1435 = vdwg.mxu0
  %1436 = vmatprep.subr.bf16.mxu0 0
  %1437 = vmatpush1.bf16.msra.mxu0 %v982
  %1438 = vmatprep.subr.bf16.mxu0 0
  %1439 = vmatpush1.bf16.msra.mxu0 %v983
  %1440 = vmatprep.subr.bf16.mxu0 0
  %1441 = vmatpush1.bf16.msra.mxu0 %v984
  %1442 = vmatprep.subr.bf16.mxu0 0
  %1443 = vmatpush1.bf16.msra.mxu0 %v985
  %1444 = vmatprep.subr.bf16.mxu0 0
  %1445 = vmatpush1.bf16.msra.mxu0 %v986
  %1446 = vmatprep.subr.bf16.mxu0 0
  %1447 = vmatpush1.bf16.msra.mxu0 %v987
  %1448 = vmatprep.subr.bf16.mxu0 0
  %1449 = vmatpush1.bf16.msra.mxu0 %v988
  %1450 = vmatprep.subr.bf16.mxu0 0
  %1451 = vmatpush1.bf16.msra.mxu0 %v989
  %1452 = vmatprep.subr.bf16.mxu0 0
  %1453 = vmatpush1.bf16.msra.mxu0 %v990
  %1454 = vmatprep.subr.bf16.mxu0 0
  %1455 = vmatpush1.bf16.msra.mxu0 %v991
  %1456 = vmatprep.subr.bf16.mxu0 0
  %1457 = vmatpush1.bf16.msra.mxu0 %v992
  %1458 = vmatprep.subr.bf16.mxu0 0
  %1459 = vmatpush1.bf16.msra.mxu0 %v993
  %1460 = vmatprep.subr.bf16.mxu0 0
  %1461 = vmatpush1.bf16.msra.mxu0 %v994
  %1462 = vmatprep.subr.bf16.mxu0 0
  %1463 = vmatpush1.bf16.msra.mxu0 %v995
  %1464 = vmatprep.subr.bf16.mxu0 0
  %1465 = vmatpush1.bf16.msra.mxu0 %v996
  %1466 = vmatprep.subr.bf16.mxu0 0
  %1467 = vmatpush1.bf16.msra.mxu0 %v997
  %1468 = vmatprep.mubr.bf16.mxu0 %v348
  %1469 = vmatmul.mubr.bf16.gmra.mrb[0].mxu0 %v347
  %v1470 = vpop.f32.mrb[0].mxu0
  %v1471 = vadd.f32 %v1422, %v1470
  %v1472 = vpop.f32.mrb[0].mxu0
  %v1473 = vpop.f32.mrb[0].mxu0
  %v1474 = vadd.f32 %v1425, %v1473
  %v1475 = vpop.f32.mrb[0].mxu0
  %1476 = vmatprep.mubr.bf16.mxu0 %v364
  %1477 = vmatmul.mubr.bf16.gmra.mrb[0].mxu0 %v363
  %v1478 = vpop.f32.mrb[0].mxu0
  %v1479 = vadd.f32 %v1430, %v1478
  %v1480 = vpop.f32.mrb[0].mxu0
  %v1481 = vpop.f32.mrb[0].mxu0
  %v1482 = vadd.f32 %v1433, %v1481
  %v1483 = vpop.f32.mrb[0].mxu0
  %1484 = vdwg.mxu0
  %1485 = vmatprep.subr.bf16.mxu0 0
  %1486 = vmatpush1.bf16.msra.mxu0 %v998
  %1487 = vmatprep.subr.bf16.mxu0 0
  %1488 = vmatpush1.bf16.msra.mxu0 %v999
  %1489 = vmatprep.subr.bf16.mxu0 0
  %1490 = vmatpush1.bf16.msra.mxu0 %v1000
  %1491 = vmatprep.subr.bf16.mxu0 0
  %1492 = vmatpush1.bf16.msra.mxu0 %v1001
  %1493 = vmatprep.subr.bf16.mxu0 0
  %1494 = vmatpush1.bf16.msra.mxu0 %v1002
  %1495 = vmatprep.subr.bf16.mxu0 0
  %1496 = vmatpush1.bf16.msra.mxu0 %v1003
  %1497 = vmatprep.subr.bf16.mxu0 0
  %1498 = vmatpush1.bf16.msra.mxu0 %v1004
  %1499 = vmatprep.subr.bf16.mxu0 0
  %1500 = vmatpush1.bf16.msra.mxu0 %v1005
  %1501 = vmatprep.subr.bf16.mxu0 0
  %1502 = vmatpush1.bf16.msra.mxu0 %v1006
  %1503 = vmatprep.subr.bf16.mxu0 0
  %1504 = vmatpush1.bf16.msra.mxu0 %v1007
  %1505 = vmatprep.subr.bf16.mxu0 0
  %1506 = vmatpush1.bf16.msra.mxu0 %v1008
  %1507 = vmatprep.subr.bf16.mxu0 0
  %1508 = vmatpush1.bf16.msra.mxu0 %v1009
  %1509 = vmatprep.subr.bf16.mxu0 0
  %1510 = vmatpush1.bf16.msra.mxu0 %v1010
  %1511 = vmatprep.subr.bf16.mxu0 0
  %1512 = vmatpush1.bf16.msra.mxu0 %v1011
  %1513 = vmatprep.subr.bf16.mxu0 0
  %1514 = vmatpush1.bf16.msra.mxu0 %v1012
  %1515 = vmatprep.subr.bf16.mxu0 0
  %1516 = vmatpush1.bf16.msra.mxu0 %v1013
  %1517 = vmatprep.mubr.bf16.mxu0 %v350
  %1518 = vmatmul.mubr.bf16.gmra.mrb[0].mxu0 %v349
  %v1519 = vpop.f32.mrb[0].mxu0
  %v1520 = vadd.f32 %v1471, %v1519
  %v1521 = vpop.f32.mrb[0].mxu0
  %v1522 = vpop.f32.mrb[0].mxu0
  %v1523 = vadd.f32 %v1474, %v1522
  %v1524 = vpop.f32.mrb[0].mxu0
  %1525 = vmatprep.mubr.bf16.mxu0 %v366
  %1526 = vmatmul.mubr.bf16.gmra.mrb[0].mxu0 %v365
  %v1527 = vpop.f32.mrb[0].mxu0
  %v1528 = vadd.f32 %v1479, %v1527
  %v1529 = vpop.f32.mrb[0].mxu0
  %v1530 = vpop.f32.mrb[0].mxu0
  %v1531 = vadd.f32 %v1482, %v1530
  %v1532 = vpop.f32.mrb[0].mxu0
  %1533 = vdwg.mxu0
  %v1534 = vmax.f32 %v1520, 0.0
  %v1535 = vmax.f32 %v1523, 0.0
  %v1536 = vmax.f32 %v1528, 0.0
  %v1537 = vmax.f32 %v1531, 0.0
  %vm1538 = vcmask 523264
  %1539 = vst.msk [vmem:[%s3] sm:$0xff] %vm1538, %v1534
  %1540 = vst.msk [vmem:[%s3 + $0x8] sm:$0xff] %vm1538, %v1535
  %1541 = vst.msk [vmem:[%s3 + $0x10] sm:$0xff] %vm1538, %v1536
  %1542 = vst.msk [vmem:[%s3 + $0x18] sm:$0xff] %vm1538, %v1537
  // Predicated region
  $region14: #{smol_actor_forward.4} parent=0 // pred_check
    _
  $region15: #{smol_actor_forward.4} parent=0 // pred_check_branch
    %1544 = sbr.rel (0) target = $region17
  $region16: #{smol_actor_forward.4} parent=0 // pred_region
    _
  $region17: #{smol_actor_forward.4} parent=0 // pred_fallthru
    _
  // Predicated region
  $region18: #{smol_actor_forward.4} parent=0 // pred_check
    _
  $region19: #{smol_actor_forward.4} parent=0 // pred_check_branch
    %1546 = sbr.rel (0) target = $region21
  $region20: #{smol_actor_forward.4} parent=0 // pred_region
    _
  $region21: #{smol_actor_forward.4} parent=0 // pred_fallthru
    _

// kernel: smol_actor_forward.5
$region0: #{smol_actor_forward.5}
  #allocation0 [shape = 'u32[]', space=smem, size = 0x4, offset = 0x4, fixed_abs, tag = 'smem constant byte address 0x4 - core index']
  #allocation1 [shape = 'u32[144,128]{1,0:T(1,128)}', space=vmem, size = 0x12000, scoped, tag = 'internal scratch']
  #allocation2 [shape = 'f32[2,512]{1,0:T(2,128)}', space=vmem, size = 0x1000, scoped, tag = 'scratch operand']
  %s0 = inlined_call_operand.vmem [shape: f32[2,1024], index: 0, kind: input, shape index: {}]
  %s1 = inlined_call_operand.vmem [shape: bf16[1024,512], index: 1, kind: input, shape index: {}]
  %s2 = inlined_call_operand.vmem [shape: f32[1,512], index: 2, kind: input, shape index: {}]
  %s3 = inlined_call_operand.vmem [shape: bf16[128,512], index: 3, kind: input, shape index: {}]
  %s4 = inlined_call_operand.vmem [shape: f32[1,512], index: 4, kind: input, shape index: {}]
  %s5 = inlined_call_operand.vmem [shape: bf16[128,32], index: 5, kind: input, shape index: {}]
  %s6 = inlined_call_operand.vmem [shape: f32[1,32], index: 6, kind: input, shape index: {}]
  %s7 = inlined_call_operand.vmem [shape: bf16[32,8], index: 7, kind: input, shape index: {}]
  %s8 = inlined_call_operand.vmem [shape: f32[1,8], index: 8, kind: input, shape index: {}]
  %s9 = inlined_call_operand.hbm [shape: f32[2,8], index: 9, kind: output, shape index: {}]
  %s10 = sld [smem:[#allocation0]]
  $region54: #{smol_actor_forward.5} parent=0
    _
  %s12 = ssub.s32 1, %s10
  %s13 = scalar_select 0, %s12, %s10
  $region1: #{smol_actor_forward.5} parent=0
    #allocation3 [shape = 'u8[1024]{0}', space=vmem, size = 0x400, scoped, tag = 'output window, operand 0, single buffered']
    #allocation4 [shape = 's32[1]{0}', space=sflag, size = 0x4, scoped, tag = 'scoped memory for smol_actor_forward.5']
    %14 = vsyncpa [#allocation4], 0
    // Predicated region
    $region2: #{smol_actor_forward.5} parent=1 // pred_check
      _
    $region3: #{smol_actor_forward.5} parent=1 // pred_check_branch
      %16 = sbr.rel (0) target = $region5
    $region4: #{smol_actor_forward.5} parent=1 // pred_region
      _
    $region5: #{smol_actor_forward.5} parent=1 // pred_fallthru
      _
    // Predicated region
    $region6: #{smol_actor_forward.5} parent=1 // pred_check
      _
    $region7: #{smol_actor_forward.5} parent=1 // pred_check_branch
      %18 = sbr.rel (0) target = $region9
    $region8: #{smol_actor_forward.5} parent=1 // pred_region
      _
    $region9: #{smol_actor_forward.5} parent=1 // pred_fallthru
      _
    // Predicated region
    $region10: #{smol_actor_forward.5} parent=1 // pred_check
      _
    $region11: #{smol_actor_forward.5} parent=1 // pred_check_branch
      %20 = sbr.rel (0) target = $region13
    $region12: #{smol_actor_forward.5} parent=1 // pred_region
      _
    $region13: #{smol_actor_forward.5} parent=1 // pred_fallthru
      _
    // Predicated region
    $region14: #{smol_actor_forward.5} parent=1 // pred_check
      _
    $region15: #{smol_actor_forward.5} parent=1 // pred_check_branch
      %22 = sbr.rel (0) target = $region17
    $region16: #{smol_actor_forward.5} parent=1 // pred_region
      _
    $region17: #{smol_actor_forward.5} parent=1 // pred_fallthru
      _
    // Predicated region
    $region18: #{smol_actor_forward.5} parent=1 // pred_check
      _
    $region19: #{smol_actor_forward.5} parent=1 // pred_check_branch
      %24 = sbr.rel (0) target = $region21
    $region20: #{smol_actor_forward.5} parent=1 // pred_region
      _
    $region21: #{smol_actor_forward.5} parent=1 // pred_fallthru
      _
    // Predicated region
    $region22: #{smol_actor_forward.5} parent=1 // pred_check
      _
    $region23: #{smol_actor_forward.5} parent=1 // pred_check_branch
      %26 = sbr.rel (0) target = $region25
    $region24: #{smol_actor_forward.5} parent=1 // pred_region
      _
    $region25: #{smol_actor_forward.5} parent=1 // pred_fallthru
      _
    // Predicated region
    $region26: #{smol_actor_forward.5} parent=1 // pred_check
      _
    $region27: #{smol_actor_forward.5} parent=1 // pred_check_branch
      %28 = sbr.rel (0) target = $region29
    $region28: #{smol_actor_forward.5} parent=1 // pred_region
      _
    $region29: #{smol_actor_forward.5} parent=1 // pred_fallthru
      _
    // Predicated region
    $region30: #{smol_actor_forward.5} parent=1 // pred_check
      _
    $region31: #{smol_actor_forward.5} parent=1 // pred_check_branch
      %30 = sbr.rel (0) target = $region33
    $region32: #{smol_actor_forward.5} parent=1 // pred_region
      _
    $region33: #{smol_actor_forward.5} parent=1 // pred_fallthru
      _
    // Predicated region
    $region34: #{smol_actor_forward.5} parent=1 // pred_check
      _
    $region35: #{smol_actor_forward.5} parent=1 // pred_check_branch
      %32 = sbr.rel (0) target = $region37
    $region36: #{smol_actor_forward.5} parent=1 // pred_region
      _
    $region37: #{smol_actor_forward.5} parent=1 // pred_fallthru
      _
    %p34 = scmp.eq.s32.totalorder 0, 0
    // Predicated region
    $region38: #{smol_actor_forward.5} parent=1 // pred_check
      %p35 = pneg %p34
    $region39: #{smol_actor_forward.5} parent=1 // pred_check_branch
      %37 = sbr.rel (%p35) target = $region41
    $region40: #{smol_actor_forward.5} parent=1 // pred_region
      %38 = vst [vmem:[#allocation2] sm:$0xff] 0.0
    $region41: #{smol_actor_forward.5} parent=1 // pred_fallthru
      _
    %v39 = vld [vmem:[%s1] sm:$0xff]
    %v40 = vld [vmem:[%s1 + $0x8] sm:$0xff]
    %v41 = vld [vmem:[%s1 + $0x10] sm:$0xff]
    %v42 = vld [vmem:[%s1 + $0x18] sm:$0xff]
    %v43 = vld [vmem:[%s1 + $0x20] sm:$0xff]
    %v44 = vld [vmem:[%s1 + $0x28] sm:$0xff]
    %v45 = vld [vmem:[%s1 + $0x30] sm:$0xff]
    %v46 = vld [vmem:[%s1 + $0x38] sm:$0xff]
    %v47 = vld [vmem:[%s1 + $0x40] sm:$0xff]
    %v48 = vld [vmem:[%s1 + $0x48] sm:$0xff]
    %v49 = vld [vmem:[%s1 + $0x50] sm:$0xff]
    %v50 = vld [vmem:[%s1 + $0x58] sm:$0xff]
    %v51 = vld [vmem:[%s1 + $0x60] sm:$0xff]
    %v52 = vld [vmem:[%s1 + $0x68] sm:$0xff]
    %v53 = vld [vmem:[%s1 + $0x70] sm:$0xff]
    %v54 = vld [vmem:[%s1 + $0x78] sm:$0xff]
    %v55 = vld [vmem:[%s1 + $0x80] sm:$0xff]
    %v56 = vld [vmem:[%s1 + $0x88] sm:$0xff]
    %v57 = vld [vmem:[%s1 + $0x90] sm:$0xff]
    %v58 = vld [vmem:[%s1 + $0x98] sm:$0xff]
    %v59 = vld [vmem:[%s1 + $0xa0] sm:$0xff]
    %v60 = vld [vmem:[%s1 + $0xa8] sm:$0xff]
    %v61 = vld [vmem:[%s1 + $0xb0] sm:$0xff]
    %v62 = vld [vmem:[%s1 + $0xb8] sm:$0xff]
    %v63 = vld [vmem:[%s1 + $0xc0] sm:$0xff]
    %v64 = vld [vmem:[%s1 + $0xc8] sm:$0xff]
    %v65 = vld [vmem:[%s1 + $0xd0] sm:$0xff]
    %v66 = vld [vmem:[%s1 + $0xd8] sm:$0xff]
    %v67 = vld [vmem:[%s1 + $0xe0] sm:$0xff]
    %v68 = vld [vmem:[%s1 + $0xe8] sm:$0xff]
    %v69 = vld [vmem:[%s1 + $0xf0] sm:$0xff]
    %v70 = vld [vmem:[%s1 + $0xf8] sm:$0xff]
    %v71 = vld [vmem:[%s1 + $0x100] sm:$0xff]
    %v72 = vld [vmem:[%s1 + $0x108] sm:$0xff]
    %v73 = vld [vmem:[%s1 + $0x110] sm:$0xff]
    %v74 = vld [vmem:[%s1 + $0x118] sm:$0xff]
    %v75 = vld [vmem:[%s1 + $0x120] sm:$0xff]
    %v76 = vld [vmem:[%s1 + $0x128] sm:$0xff]
    %v77 = vld [vmem:[%s1 + $0x130] sm:$0xff]
    %v78 = vld [vmem:[%s1 + $0x138] sm:$0xff]
    %v79 = vld [vmem:[%s1 + $0x140] sm:$0xff]
    %v80 = vld [vmem:[%s1 + $0x148] sm:$0xff]
    %v81 = vld [vmem:[%s1 + $0x150] sm:$0xff]
    %v82 = vld [vmem:[%s1 + $0x158] sm:$0xff]
    %v83 = vld [vmem:[%s1 + $0x160] sm:$0xff]
    %v84 = vld [vmem:[%s1 + $0x168] sm:$0xff]
    %v85 = vld [vmem:[%s1 + $0x170] sm:$0xff]
    %v86 = vld [vmem:[%s1 + $0x178] sm:$0xff]
    %v87 = vld [vmem:[%s1 + $0x180] sm:$0xff]
    %v88 = vld [vmem:[%s1 + $0x188] sm:$0xff]
    %v89 = vld [vmem:[%s1 + $0x190] sm:$0xff]
    %v90 = vld [vmem:[%s1 + $0x198] sm:$0xff]
    %v91 = vld [vmem:[%s1 + $0x1a0] sm:$0xff]
    %v92 = vld [vmem:[%s1 + $0x1a8] sm:$0xff]
    %v93 = vld [vmem:[%s1 + $0x1b0] sm:$0xff]
    %v94 = vld [vmem:[%s1 + $0x1b8] sm:$0xff]
    %v95 = vld [vmem:[%s1 + $0x1c0] sm:$0xff]
    %v96 = vld [vmem:[%s1 + $0x1c8] sm:$0xff]
    %v97 = vld [vmem:[%s1 + $0x1d0] sm:$0xff]
    %v98 = vld [vmem:[%s1 + $0x1d8] sm:$0xff]
    %v99 = vld [vmem:[%s1 + $0x1e0] sm:$0xff]
    %v100 = vld [vmem:[%s1 + $0x1e8] sm:$0xff]
    %v101 = vld [vmem:[%s1 + $0x1f0] sm:$0xff]
    %v102 = vld [vmem:[%s1 + $0x1f8] sm:$0xff]
    %v103 = vld [vmem:[%s1 + $0x200] sm:$0xff]
    %v104 = vld [vmem:[%s1 + $0x208] sm:$0xff]
    %v105 = vld [vmem:[%s1 + $0x210] sm:$0xff]
    %v106 = vld [vmem:[%s1 + $0x218] sm:$0xff]
    %v107 = vld [vmem:[%s1 + $0x220] sm:$0xff]
    %v108 = vld [vmem:[%s1 + $0x228] sm:$0xff]
    %v109 = vld [vmem:[%s1 + $0x230] sm:$0xff]
    %v110 = vld [vmem:[%s1 + $0x238] sm:$0xff]
    %v111 = vld [vmem:[%s1 + $0x240] sm:$0xff]
    %v112 = vld [vmem:[%s1 + $0x248] sm:$0xff]
    %v113 = vld [vmem:[%s1 + $0x250] sm:$0xff]
    %v114 = vld [vmem:[%s1 + $0x258] sm:$0xff]
    %v115 = vld [vmem:[%s1 + $0x260] sm:$0xff]
    %v116 = vld [vmem:[%s1 + $0x268] sm:$0xff]
    %v117 = vld [vmem:[%s1 + $0x270] sm:$0xff]
    %v118 = vld [vmem:[%s1 + $0x278] sm:$0xff]
    %v119 = vld [vmem:[%s1 + $0x280] sm:$0xff]
    %v120 = vld [vmem:[%s1 + $0x288] sm:$0xff]
    %v121 = vld [vmem:[%s1 + $0x290] sm:$0xff]
    %v122 = vld [vmem:[%s1 + $0x298] sm:$0xff]
    %v123 = vld [vmem:[%s1 + $0x2a0] sm:$0xff]
    %v124 = vld [vmem:[%s1 + $0x2a8] sm:$0xff]
    %v125 = vld [vmem:[%s1 + $0x2b0] sm:$0xff]
    %v126 = vld [vmem:[%s1 + $0x2b8] sm:$0xff]
    %v127 = vld [vmem:[%s1 + $0x2c0] sm:$0xff]
    %v128 = vld [vmem:[%s1 + $0x2c8] sm:$0xff]
    %v129 = vld [vmem:[%s1 + $0x2d0] sm:$0xff]
    %v130 = vld [vmem:[%s1 + $0x2d8] sm:$0xff]
    %v131 = vld [vmem:[%s1 + $0x2e0] sm:$0xff]
    %v132 = vld [vmem:[%s1 + $0x2e8] sm:$0xff]
    %v133 = vld [vmem:[%s1 + $0x2f0] sm:$0xff]
    %v134 = vld [vmem:[%s1 + $0x2f8] sm:$0xff]
    %v135 = vld [vmem:[%s1 + $0x300] sm:$0xff]
    %v136 = vld [vmem:[%s1 + $0x308] sm:$0xff]
    %v137 = vld [vmem:[%s1 + $0x310] sm:$0xff]
    %v138 = vld [vmem:[%s1 + $0x318] sm:$0xff]
    %v139 = vld [vmem:[%s1 + $0x320] sm:$0xff]
    %v140 = vld [vmem:[%s1 + $0x328] sm:$0xff]
    %v141 = vld [vmem:[%s1 + $0x330] sm:$0xff]
    %v142 = vld [vmem:[%s1 + $0x338] sm:$0xff]
    %v143 = vld [vmem:[%s1 + $0x340] sm:$0xff]
    %v144 = vld [vmem:[%s1 + $0x348] sm:$0xff]
    %v145 = vld [vmem:[%s1 + $0x350] sm:$0xff]
    %v146 = vld [vmem:[%s1 + $0x358] sm:$0xff]
    %v147 = vld [vmem:[%s1 + $0x360] sm:$0xff]
    %v148 = vld [vmem:[%s1 + $0x368] sm:$0xff]
    %v149 = vld [vmem:[%s1 + $0x370] sm:$0xff]
    %v150 = vld [vmem:[%s1 + $0x378] sm:$0xff]
    %v151 = vld [vmem:[%s1 + $0x380] sm:$0xff]
    %v152 = vld [vmem:[%s1 + $0x388] sm:$0xff]
    %v153 = vld [vmem:[%s1 + $0x390] sm:$0xff]
    %v154 = vld [vmem:[%s1 + $0x398] sm:$0xff]
    %v155 = vld [vmem:[%s1 + $0x3a0] sm:$0xff]
    %v156 = vld [vmem:[%s1 + $0x3a8] sm:$0xff]
    %v157 = vld [vmem:[%s1 + $0x3b0] sm:$0xff]
    %v158 = vld [vmem:[%s1 + $0x3b8] sm:$0xff]
    %v159 = vld [vmem:[%s1 + $0x3c0] sm:$0xff]
    %v160 = vld [vmem:[%s1 + $0x3c8] sm:$0xff]
    %v161 = vld [vmem:[%s1 + $0x3d0] sm:$0xff]
    %v162 = vld [vmem:[%s1 + $0x3d8] sm:$0xff]
    %v163 = vld [vmem:[%s1 + $0x3e0] sm:$0xff]
    %v164 = vld [vmem:[%s1 + $0x3e8] sm:$0xff]
    %v165 = vld [vmem:[%s1 + $0x3f0] sm:$0xff]
    %v166 = vld [vmem:[%s1 + $0x3f8] sm:$0xff]
    %v167 = vld [vmem:[%s1 + $0x400] sm:$0xff]
    %v168 = vld [vmem:[%s1 + $0x408] sm:$0xff]
    %v169 = vld [vmem:[%s1 + $0x410] sm:$0xff]
    %v170 = vld [vmem:[%s1 + $0x418] sm:$0xff]
    %v171 = vld [vmem:[%s1 + $0x420] sm:$0xff]
    %v172 = vld [vmem:[%s1 + $0x428] sm:$0xff]
    %v173 = vld [vmem:[%s1 + $0x430] sm:$0xff]
    %v174 = vld [vmem:[%s1 + $0x438] sm:$0xff]
    %v175 = vld [vmem:[%s1 + $0x440] sm:$0xff]
    %v176 = vld [vmem:[%s1 + $0x448] sm:$0xff]
    %v177 = vld [vmem:[%s1 + $0x450] sm:$0xff]
    %v178 = vld [vmem:[%s1 + $0x458] sm:$0xff]
    %v179 = vld [vmem:[%s1 + $0x460] sm:$0xff]
    %v180 = vld [vmem:[%s1 + $0x468] sm:$0xff]
    %v181 = vld [vmem:[%s1 + $0x470] sm:$0xff]
    %v182 = vld [vmem:[%s1 + $0x478] sm:$0xff]
    %v183 = vld [vmem:[%s1 + $0x480] sm:$0xff]
    %v184 = vld [vmem:[%s1 + $0x488] sm:$0xff]
    %v185 = vld [vmem:[%s1 + $0x490] sm:$0xff]
    %v186 = vld [vmem:[%s1 + $0x498] sm:$0xff]
    %v187 = vld [vmem:[%s1 + $0x4a0] sm:$0xff]
    %v188 = vld [vmem:[%s1 + $0x4a8] sm:$0xff]
    %v189 = vld [vmem:[%s1 + $0x4b0] sm:$0xff]
    %v190 = vld [vmem:[%s1 + $0x4b8] sm:$0xff]
    %v191 = vld [vmem:[%s1 + $0x4c0] sm:$0xff]
    %v192 = vld [vmem:[%s1 + $0x4c8] sm:$0xff]
    %v193 = vld [vmem:[%s1 + $0x4d0] sm:$0xff]
    %v194 = vld [vmem:[%s1 + $0x4d8] sm:$0xff]
    %v195 = vld [vmem:[%s1 + $0x4e0] sm:$0xff]
    %v196 = vld [vmem:[%s1 + $0x4e8] sm:$0xff]
    %v197 = vld [vmem:[%s1 + $0x4f0] sm:$0xff]
    %v198 = vld [vmem:[%s1 + $0x4f8] sm:$0xff]
    %v199 = vld [vmem:[%s1 + $0x500] sm:$0xff]
    %v200 = vld [vmem:[%s1 + $0x508] sm:$0xff]
    %v201 = vld [vmem:[%s1 + $0x510] sm:$0xff]
    %v202 = vld [vmem:[%s1 + $0x518] sm:$0xff]
    %v203 = vld [vmem:[%s1 + $0x520] sm:$0xff]
    %v204 = vld [vmem:[%s1 + $0x528] sm:$0xff]
    %v205 = vld [vmem:[%s1 + $0x530] sm:$0xff]
    %v206 = vld [vmem:[%s1 + $0x538] sm:$0xff]
    %v207 = vld [vmem:[%s1 + $0x540] sm:$0xff]
    %v208 = vld [vmem:[%s1 + $0x548] sm:$0xff]
    %v209 = vld [vmem:[%s1 + $0x550] sm:$0xff]
    %v210 = vld [vmem:[%s1 + $0x558] sm:$0xff]
    %v211 = vld [vmem:[%s1 + $0x560] sm:$0xff]
    %v212 = vld [vmem:[%s1 + $0x568] sm:$0xff]
    %v213 = vld [vmem:[%s1 + $0x570] sm:$0xff]
    %v214 = vld [vmem:[%s1 + $0x578] sm:$0xff]
    %v215 = vld [vmem:[%s1 + $0x580] sm:$0xff]
    %v216 = vld [vmem:[%s1 + $0x588] sm:$0xff]
    %v217 = vld [vmem:[%s1 + $0x590] sm:$0xff]
    %v218 = vld [vmem:[%s1 + $0x598] sm:$0xff]
    %v219 = vld [vmem:[%s1 + $0x5a0] sm:$0xff]
    %v220 = vld [vmem:[%s1 + $0x5a8] sm:$0xff]
    %v221 = vld [vmem:[%s1 + $0x5b0] sm:$0xff]
    %v222 = vld [vmem:[%s1 + $0x5b8] sm:$0xff]
    %v223 = vld [vmem:[%s1 + $0x5c0] sm:$0xff]
    %v224 = vld [vmem:[%s1 + $0x5c8] sm:$0xff]
    %v225 = vld [vmem:[%s1 + $0x5d0] sm:$0xff]
    %v226 = vld [vmem:[%s1 + $0x5d8] sm:$0xff]
    %v227 = vld [vmem:[%s1 + $0x5e0] sm:$0xff]
    %v228 = vld [vmem:[%s1 + $0x5e8] sm:$0xff]
    %v229 = vld [vmem:[%s1 + $0x5f0] sm:$0xff]
    %v230 = vld [vmem:[%s1 + $0x5f8] sm:$0xff]
    %v231 = vld [vmem:[%s1 + $0x600] sm:$0xff]
    %v232 = vld [vmem:[%s1 + $0x608] sm:$0xff]
    %v233 = vld [vmem:[%s1 + $0x610] sm:$0xff]
    %v234 = vld [vmem:[%s1 + $0x618] sm:$0xff]
    %v235 = vld [vmem:[%s1 + $0x620] sm:$0xff]
    %v236 = vld [vmem:[%s1 + $0x628] sm:$0xff]
    %v237 = vld [vmem:[%s1 + $0x630] sm:$0xff]
    %v238 = vld [vmem:[%s1 + $0x638] sm:$0xff]
    %v239 = vld [vmem:[%s1 + $0x640] sm:$0xff]
    %v240 = vld [vmem:[%s1 + $0x648] sm:$0xff]
    %v241 = vld [vmem:[%s1 + $0x650] sm:$0xff]
    %v242 = vld [vmem:[%s1 + $0x658] sm:$0xff]
    %v243 = vld [vmem:[%s1 + $0x660] sm:$0xff]
    %v244 = vld [vmem:[%s1 + $0x668] sm:$0xff]
    %v245 = vld [vmem:[%s1 + $0x670] sm:$0xff]
    %v246 = vld [vmem:[%s1 + $0x678] sm:$0xff]
    %v247 = vld [vmem:[%s1 + $0x680] sm:$0xff]
    %v248 = vld [vmem:[%s1 + $0x688] sm:$0xff]
    %v249 = vld [vmem:[%s1 + $0x690] sm:$0xff]
    %v250 = vld [vmem:[%s1 + $0x698] sm:$0xff]
    %v251 = vld [vmem:[%s1 + $0x6a0] sm:$0xff]
    %v252 = vld [vmem:[%s1 + $0x6a8] sm:$0xff]
    %v253 = vld [vmem:[%s1 + $0x6b0] sm:$0xff]
    %v254 = vld [vmem:[%s1 + $0x6b8] sm:$0xff]
    %v255 = vld [vmem:[%s1 + $0x6c0] sm:$0xff]
    %v256 = vld [vmem:[%s1 + $0x6c8] sm:$0xff]
    %v257 = vld [vmem:[%s1 + $0x6d0] sm:$0xff]
    %v258 = vld [vmem:[%s1 + $0x6d8] sm:$0xff]
    %v259 = vld [vmem:[%s1 + $0x6e0] sm:$0xff]
    %v260 = vld [vmem:[%s1 + $0x6e8] sm:$0xff]
    %v261 = vld [vmem:[%s1 + $0x6f0] sm:$0xff]
    %v262 = vld [vmem:[%s1 + $0x6f8] sm:$0xff]
    %v263 = vld [vmem:[%s1 + $0x700] sm:$0xff]
    %v264 = vld [vmem:[%s1 + $0x708] sm:$0xff]
    %v265 = vld [vmem:[%s1 + $0x710] sm:$0xff]
    %v266 = vld [vmem:[%s1 + $0x718] sm:$0xff]
    %v267 = vld [vmem:[%s1 + $0x720] sm:$0xff]
    %v268 = vld [vmem:[%s1 + $0x728] sm:$0xff]
    %v269 = vld [vmem:[%s1 + $0x730] sm:$0xff]
    %v270 = vld [vmem:[%s1 + $0x738] sm:$0xff]
    %v271 = vld [vmem:[%s1 + $0x740] sm:$0xff]
    %v272 = vld [vmem:[%s1 + $0x748] sm:$0xff]
    %v273 = vld [vmem:[%s1 + $0x750] sm:$0xff]
    %v274 = vld [vmem:[%s1 + $0x758] sm:$0xff]
    %v275 = vld [vmem:[%s1 + $0x760] sm:$0xff]
    %v276 = vld [vmem:[%s1 + $0x768] sm:$0xff]
    %v277 = vld [vmem:[%s1 + $0x770] sm:$0xff]
    %v278 = vld [vmem:[%s1 + $0x778] sm:$0xff]
    %v279 = vld [vmem:[%s1 + $0x780] sm:$0xff]
    %v280 = vld [vmem:[%s1 + $0x788] sm:$0xff]
    %v281 = vld [vmem:[%s1 + $0x790] sm:$0xff]
    %v282 = vld [vmem:[%s1 + $0x798] sm:$0xff]
    %v283 = vld [vmem:[%s1 + $0x7a0] sm:$0xff]
    %v284 = vld [vmem:[%s1 + $0x7a8] sm:$0xff]
    %v285 = vld [vmem:[%s1 + $0x7b0] sm:$0xff]
    %v286 = vld [vmem:[%s1 + $0x7b8] sm:$0xff]
    %v287 = vld [vmem:[%s1 + $0x7c0] sm:$0xff]
    %v288 = vld [vmem:[%s1 + $0x7c8] sm:$0xff]
    %v289 = vld [vmem:[%s1 + $0x7d0] sm:$0xff]
    %v290 = vld [vmem:[%s1 + $0x7d8] sm:$0xff]
    %v291 = vld [vmem:[%s1 + $0x7e0] sm:$0xff]
    %v292 = vld [vmem:[%s1 + $0x7e8] sm:$0xff]
    %v293 = vld [vmem:[%s1 + $0x7f0] sm:$0xff]
    %v294 = vld [vmem:[%s1 + $0x7f8] sm:$0xff]
    %v295 = vld [vmem:[#allocation2] sm:$0xff]
    %v296 = vld [vmem:[%s0] sm:$0xff]
    %v297 = vld [vmem:[%s0 + $0x8] sm:$0xff]
    %v300 = vcombine.high %v296, %v296
    %v302 = vunpack.c.l.s4 1983009808
    %v303 = vunpack.c.0.s8 %v302
    %v304 = vlaneseq
    %v305 = vshrl.u32 %v304, 7
    %v306 = vsub.s32 %v303, %v305
    %v307 = vrot.slane %v296, %v306
    %v309 = vunpack.c.l.s4 1983009808
    %v310 = vunpack.c.0.s8 %v309
    %v311 = vlaneseq
    %v312 = vshrl.u32 %v311, 7
    %v313 = vsub.s32 %v310, %v312
    %v314 = vrot.slane %v300, %v313
    %v315 = vcombine.high %v307, %v307
    %v316 = vcombine.high %v314, %v314
    %v317 = vcombine.high %v297, %v297
    %v319 = vunpack.c.l.s4 1983009808
    %v320 = vunpack.c.0.s8 %v319
    %v321 = vlaneseq
    %v322 = vshrl.u32 %v321, 7
    %v323 = vsub.s32 %v320, %v322
    %v324 = vrot.slane %v297, %v323
    %v326 = vunpack.c.l.s4 1983009808
    %v327 = vunpack.c.0.s8 %v326
    %v328 = vlaneseq
    %v329 = vshrl.u32 %v328, 7
    %v330 = vsub.s32 %v327, %v329
    %v331 = vrot.slane %v317, %v330
    %v332 = vcombine.high %v324, %v324
    %v333 = vcombine.high %v331, %v331
    %v342 = vpack.c.bf16 %v307, %v307
    %v343 = vpack.c.bf16 %v315, %v315
    %v344 = vpack.c.bf16 %v314, %v314
    %v345 = vpack.c.bf16 %v316, %v316
    %v346 = vpack.c.bf16 %v324, %v324
    %v347 = vpack.c.bf16 %v332, %v332
    %v348 = vpack.c.bf16 %v331, %v331
    %v349 = vpack.c.bf16 %v333, %v333
    %v606 = vunpack.c.l.b16 %v39
    %v607 = vunpack.c.h.b16 %v39
    %v608 = vunpack.c.l.b16 %v40
    %v609 = vunpack.c.h.b16 %v40
    %v610 = vunpack.c.l.b16 %v41
    %v611 = vunpack.c.h.b16 %v41
    %v612 = vunpack.c.l.b16 %v42
    %v613 = vunpack.c.h.b16 %v42
    %v614 = vunpack.c.l.b16 %v43
    %v615 = vunpack.c.h.b16 %v43
    %v616 = vunpack.c.l.b16 %v44
    %v617 = vunpack.c.h.b16 %v44
    %v618 = vunpack.c.l.b16 %v45
    %v619 = vunpack.c.h.b16 %v45
    %v620 = vunpack.c.l.b16 %v46
    %v621 = vunpack.c.h.b16 %v46
    %v622 = vunpack.c.l.b16 %v47
    %v623 = vunpack.c.h.b16 %v47
    %v624 = vunpack.c.l.b16 %v48
    %v625 = vunpack.c.h.b16 %v48
    %v626 = vunpack.c.l.b16 %v49
    %v627 = vunpack.c.h.b16 %v49
    %v628 = vunpack.c.l.b16 %v50
    %v629 = vunpack.c.h.b16 %v50
    %v630 = vunpack.c.l.b16 %v51
    %v631 = vunpack.c.h.b16 %v51
    %v632 = vunpack.c.l.b16 %v52
    %v633 = vunpack.c.h.b16 %v52
    %v634 = vunpack.c.l.b16 %v53
    %v635 = vunpack.c.h.b16 %v53
    %v636 = vunpack.c.l.b16 %v54
    %v637 = vunpack.c.h.b16 %v54
    %v638 = vunpack.c.l.b16 %v55
    %v639 = vunpack.c.h.b16 %v55
    %v640 = vunpack.c.l.b16 %v56
    %v641 = vunpack.c.h.b16 %v56
    %v642 = vunpack.c.l.b16 %v57
    %v643 = vunpack.c.h.b16 %v57
    %v644 = vunpack.c.l.b16 %v58
    %v645 = vunpack.c.h.b16 %v58
    %v646 = vunpack.c.l.b16 %v59
    %v647 = vunpack.c.h.b16 %v59
    %v648 = vunpack.c.l.b16 %v60
    %v649 = vunpack.c.h.b16 %v60
    %v650 = vunpack.c.l.b16 %v61
    %v651 = vunpack.c.h.b16 %v61
    %v652 = vunpack.c.l.b16 %v62
    %v653 = vunpack.c.h.b16 %v62
    %v654 = vunpack.c.l.b16 %v63
    %v655 = vunpack.c.h.b16 %v63
    %v656 = vunpack.c.l.b16 %v64
    %v657 = vunpack.c.h.b16 %v64
    %v658 = vunpack.c.l.b16 %v65
    %v659 = vunpack.c.h.b16 %v65
    %v660 = vunpack.c.l.b16 %v66
    %v661 = vunpack.c.h.b16 %v66
    %v662 = vunpack.c.l.b16 %v67
    %v663 = vunpack.c.h.b16 %v67
    %v664 = vunpack.c.l.b16 %v68
    %v665 = vunpack.c.h.b16 %v68
    %v666 = vunpack.c.l.b16 %v69
    %v667 = vunpack.c.h.b16 %v69
    %v668 = vunpack.c.l.b16 %v70
    %v669 = vunpack.c.h.b16 %v70
    %v670 = vunpack.c.l.b16 %v71
    %v671 = vunpack.c.h.b16 %v71
    %v672 = vunpack.c.l.b16 %v72
    %v673 = vunpack.c.h.b16 %v72
    %v674 = vunpack.c.l.b16 %v73
    %v675 = vunpack.c.h.b16 %v73
    %v676 = vunpack.c.l.b16 %v74
    %v677 = vunpack.c.h.b16 %v74
    %v678 = vunpack.c.l.b16 %v75
    %v679 = vunpack.c.h.b16 %v75
    %v680 = vunpack.c.l.b16 %v76
    %v681 = vunpack.c.h.b16 %v76
    %v682 = vunpack.c.l.b16 %v77
    %v683 = vunpack.c.h.b16 %v77
    %v684 = vunpack.c.l.b16 %v78
    %v685 = vunpack.c.h.b16 %v78
    %v686 = vunpack.c.l.b16 %v79
    %v687 = vunpack.c.h.b16 %v79
    %v688 = vunpack.c.l.b16 %v80
    %v689 = vunpack.c.h.b16 %v80
    %v690 = vunpack.c.l.b16 %v81
    %v691 = vunpack.c.h.b16 %v81
    %v692 = vunpack.c.l.b16 %v82
    %v693 = vunpack.c.h.b16 %v82
    %v694 = vunpack.c.l.b16 %v83
    %v695 = vunpack.c.h.b16 %v83
    %v696 = vunpack.c.l.b16 %v84
    %v697 = vunpack.c.h.b16 %v84
    %v698 = vunpack.c.l.b16 %v85
    %v699 = vunpack.c.h.b16 %v85
    %v700 = vunpack.c.l.b16 %v86
    %v701 = vunpack.c.h.b16 %v86
    %v702 = vunpack.c.l.b16 %v87
    %v703 = vunpack.c.h.b16 %v87
    %v704 = vunpack.c.l.b16 %v88
    %v705 = vunpack.c.h.b16 %v88
    %v706 = vunpack.c.l.b16 %v89
    %v707 = vunpack.c.h.b16 %v89
    %v708 = vunpack.c.l.b16 %v90
    %v709 = vunpack.c.h.b16 %v90
    %v710 = vunpack.c.l.b16 %v91
    %v711 = vunpack.c.h.b16 %v91
    %v712 = vunpack.c.l.b16 %v92
    %v713 = vunpack.c.h.b16 %v92
    %v714 = vunpack.c.l.b16 %v93
    %v715 = vunpack.c.h.b16 %v93
    %v716 = vunpack.c.l.b16 %v94
    %v717 = vunpack.c.h.b16 %v94
    %v718 = vunpack.c.l.b16 %v95
    %v719 = vunpack.c.h.b16 %v95
    %v720 = vunpack.c.l.b16 %v96
    %v721 = vunpack.c.h.b16 %v96
    %v722 = vunpack.c.l.b16 %v97
    %v723 = vunpack.c.h.b16 %v97
    %v724 = vunpack.c.l.b16 %v98
    %v725 = vunpack.c.h.b16 %v98
    %v726 = vunpack.c.l.b16 %v99
    %v727 = vunpack.c.h.b16 %v99
    %v728 = vunpack.c.l.b16 %v100
    %v729 = vunpack.c.h.b16 %v100
    %v730 = vunpack.c.l.b16 %v101
    %v731 = vunpack.c.h.b16 %v101
    %v732 = vunpack.c.l.b16 %v102
    %v733 = vunpack.c.h.b16 %v102
    %v734 = vunpack.c.l.b16 %v103
    %v735 = vunpack.c.h.b16 %v103
    %v736 = vunpack.c.l.b16 %v104
    %v737 = vunpack.c.h.b16 %v104
    %v738 = vunpack.c.l.b16 %v105
    %v739 = vunpack.c.h.b16 %v105
    %v740 = vunpack.c.l.b16 %v106
    %v741 = vunpack.c.h.b16 %v106
    %v742 = vunpack.c.l.b16 %v107
    %v743 = vunpack.c.h.b16 %v107
    %v744 = vunpack.c.l.b16 %v108
    %v745 = vunpack.c.h.b16 %v108
    %v746 = vunpack.c.l.b16 %v109
    %v747 = vunpack.c.h.b16 %v109
    %v748 = vunpack.c.l.b16 %v110
    %v749 = vunpack.c.h.b16 %v110
    %v750 = vunpack.c.l.b16 %v111
    %v751 = vunpack.c.h.b16 %v111
    %v752 = vunpack.c.l.b16 %v112
    %v753 = vunpack.c.h.b16 %v112
    %v754 = vunpack.c.l.b16 %v113
    %v755 = vunpack.c.h.b16 %v113
    %v756 = vunpack.c.l.b16 %v114
    %v757 = vunpack.c.h.b16 %v114
    %v758 = vunpack.c.l.b16 %v115
    %v759 = vunpack.c.h.b16 %v115
    %v760 = vunpack.c.l.b16 %v116
    %v761 = vunpack.c.h.b16 %v116
    %v762 = vunpack.c.l.b16 %v117
    %v763 = vunpack.c.h.b16 %v117
    %v764 = vunpack.c.l.b16 %v118
    %v765 = vunpack.c.h.b16 %v118
    %v766 = vunpack.c.l.b16 %v119
    %v767 = vunpack.c.h.b16 %v119
    %v768 = vunpack.c.l.b16 %v120
    %v769 = vunpack.c.h.b16 %v120
    %v770 = vunpack.c.l.b16 %v121
    %v771 = vunpack.c.h.b16 %v121
    %v772 = vunpack.c.l.b16 %v122
    %v773 = vunpack.c.h.b16 %v122
    %v774 = vunpack.c.l.b16 %v123
    %v775 = vunpack.c.h.b16 %v123
    %v776 = vunpack.c.l.b16 %v124
    %v777 = vunpack.c.h.b16 %v124
    %v778 = vunpack.c.l.b16 %v125
    %v779 = vunpack.c.h.b16 %v125
    %v780 = vunpack.c.l.b16 %v126
    %v781 = vunpack.c.h.b16 %v126
    %v782 = vunpack.c.l.b16 %v127
    %v783 = vunpack.c.h.b16 %v127
    %v784 = vunpack.c.l.b16 %v128
    %v785 = vunpack.c.h.b16 %v128
    %v786 = vunpack.c.l.b16 %v129
    %v787 = vunpack.c.h.b16 %v129
    %v788 = vunpack.c.l.b16 %v130
    %v789 = vunpack.c.h.b16 %v130
    %v790 = vunpack.c.l.b16 %v131
    %v791 = vunpack.c.h.b16 %v131
    %v792 = vunpack.c.l.b16 %v132
    %v793 = vunpack.c.h.b16 %v132
    %v794 = vunpack.c.l.b16 %v133
    %v795 = vunpack.c.h.b16 %v133
    %v796 = vunpack.c.l.b16 %v134
    %v797 = vunpack.c.h.b16 %v134
    %v798 = vunpack.c.l.b16 %v135
    %v799 = vunpack.c.h.b16 %v135
    %v800 = vunpack.c.l.b16 %v136
    %v801 = vunpack.c.h.b16 %v136
    %v802 = vunpack.c.l.b16 %v137
    %v803 = vunpack.c.h.b16 %v137
    %v804 = vunpack.c.l.b16 %v138
    %v805 = vunpack.c.h.b16 %v138
    %v806 = vunpack.c.l.b16 %v139
    %v807 = vunpack.c.h.b16 %v139
    %v808 = vunpack.c.l.b16 %v140
    %v809 = vunpack.c.h.b16 %v140
    %v810 = vunpack.c.l.b16 %v141
    %v811 = vunpack.c.h.b16 %v141
    %v812 = vunpack.c.l.b16 %v142
    %v813 = vunpack.c.h.b16 %v142
    %v814 = vunpack.c.l.b16 %v143
    %v815 = vunpack.c.h.b16 %v143
    %v816 = vunpack.c.l.b16 %v144
    %v817 = vunpack.c.h.b16 %v144
    %v818 = vunpack.c.l.b16 %v145
    %v819 = vunpack.c.h.b16 %v145
    %v820 = vunpack.c.l.b16 %v146
    %v821 = vunpack.c.h.b16 %v146
    %v822 = vunpack.c.l.b16 %v147
    %v823 = vunpack.c.h.b16 %v147
    %v824 = vunpack.c.l.b16 %v148
    %v825 = vunpack.c.h.b16 %v148
    %v826 = vunpack.c.l.b16 %v149
    %v827 = vunpack.c.h.b16 %v149
    %v828 = vunpack.c.l.b16 %v150
    %v829 = vunpack.c.h.b16 %v150
    %v830 = vunpack.c.l.b16 %v151
    %v831 = vunpack.c.h.b16 %v151
    %v832 = vunpack.c.l.b16 %v152
    %v833 = vunpack.c.h.b16 %v152
    %v834 = vunpack.c.l.b16 %v153
    %v835 = vunpack.c.h.b16 %v153
    %v836 = vunpack.c.l.b16 %v154
    %v837 = vunpack.c.h.b16 %v154
    %v838 = vunpack.c.l.b16 %v155
    %v839 = vunpack.c.h.b16 %v155
    %v840 = vunpack.c.l.b16 %v156
    %v841 = vunpack.c.h.b16 %v156
    %v842 = vunpack.c.l.b16 %v157
    %v843 = vunpack.c.h.b16 %v157
    %v844 = vunpack.c.l.b16 %v158
    %v845 = vunpack.c.h.b16 %v158
    %v846 = vunpack.c.l.b16 %v159
    %v847 = vunpack.c.h.b16 %v159
    %v848 = vunpack.c.l.b16 %v160
    %v849 = vunpack.c.h.b16 %v160
    %v850 = vunpack.c.l.b16 %v161
    %v851 = vunpack.c.h.b16 %v161
    %v852 = vunpack.c.l.b16 %v162
    %v853 = vunpack.c.h.b16 %v162
    %v854 = vunpack.c.l.b16 %v163
    %v855 = vunpack.c.h.b16 %v163
    %v856 = vunpack.c.l.b16 %v164
    %v857 = vunpack.c.h.b16 %v164
    %v858 = vunpack.c.l.b16 %v165
    %v859 = vunpack.c.h.b16 %v165
    %v860 = vunpack.c.l.b16 %v166
    %v861 = vunpack.c.h.b16 %v166
    %v862 = vunpack.c.l.b16 %v167
    %v863 = vunpack.c.h.b16 %v167
    %v864 = vunpack.c.l.b16 %v168
    %v865 = vunpack.c.h.b16 %v168
    %v866 = vunpack.c.l.b16 %v169
    %v867 = vunpack.c.h.b16 %v169
    %v868 = vunpack.c.l.b16 %v170
    %v869 = vunpack.c.h.b16 %v170
    %v870 = vunpack.c.l.b16 %v171
    %v871 = vunpack.c.h.b16 %v171
    %v872 = vunpack.c.l.b16 %v172
    %v873 = vunpack.c.h.b16 %v172
    %v874 = vunpack.c.l.b16 %v173
    %v875 = vunpack.c.h.b16 %v173
    %v876 = vunpack.c.l.b16 %v174
    %v877 = vunpack.c.h.b16 %v174
    %v878 = vunpack.c.l.b16 %v175
    %v879 = vunpack.c.h.b16 %v175
    %v880 = vunpack.c.l.b16 %v176
    %v881 = vunpack.c.h.b16 %v176
    %v882 = vunpack.c.l.b16 %v177
    %v883 = vunpack.c.h.b16 %v177
    %v884 = vunpack.c.l.b16 %v178
    %v885 = vunpack.c.h.b16 %v178
    %v886 = vunpack.c.l.b16 %v179
    %v887 = vunpack.c.h.b16 %v179
    %v888 = vunpack.c.l.b16 %v180
    %v889 = vunpack.c.h.b16 %v180
    %v890 = vunpack.c.l.b16 %v181
    %v891 = vunpack.c.h.b16 %v181
    %v892 = vunpack.c.l.b16 %v182
    %v893 = vunpack.c.h.b16 %v182
    %v894 = vunpack.c.l.b16 %v183
    %v895 = vunpack.c.h.b16 %v183
    %v896 = vunpack.c.l.b16 %v184
    %v897 = vunpack.c.h.b16 %v184
    %v898 = vunpack.c.l.b16 %v185
    %v899 = vunpack.c.h.b16 %v185
    %v900 = vunpack.c.l.b16 %v186
    %v901 = vunpack.c.h.b16 %v186
    %v902 = vunpack.c.l.b16 %v187
    %v903 = vunpack.c.h.b16 %v187
    %v904 = vunpack.c.l.b16 %v188
    %v905 = vunpack.c.h.b16 %v188
    %v906 = vunpack.c.l.b16 %v189
    %v907 = vunpack.c.h.b16 %v189
    %v908 = vunpack.c.l.b16 %v190
    %v909 = vunpack.c.h.b16 %v190
    %v910 = vunpack.c.l.b16 %v191
    %v911 = vunpack.c.h.b16 %v191
    %v912 = vunpack.c.l.b16 %v192
    %v913 = vunpack.c.h.b16 %v192
    %v914 = vunpack.c.l.b16 %v193
    %v915 = vunpack.c.h.b16 %v193
    %v916 = vunpack.c.l.b16 %v194
    %v917 = vunpack.c.h.b16 %v194
    %v918 = vunpack.c.l.b16 %v195
    %v919 = vunpack.c.h.b16 %v195
    %v920 = vunpack.c.l.b16 %v196
    %v921 = vunpack.c.h.b16 %v196
    %v922 = vunpack.c.l.b16 %v197
    %v923 = vunpack.c.h.b16 %v197
    %v924 = vunpack.c.l.b16 %v198
    %v925 = vunpack.c.h.b16 %v198
    %v926 = vunpack.c.l.b16 %v199
    %v927 = vunpack.c.h.b16 %v199
    %v928 = vunpack.c.l.b16 %v200
    %v929 = vunpack.c.h.b16 %v200
    %v930 = vunpack.c.l.b16 %v201
    %v931 = vunpack.c.h.b16 %v201
    %v932 = vunpack.c.l.b16 %v202
    %v933 = vunpack.c.h.b16 %v202
    %v934 = vunpack.c.l.b16 %v203
    %v935 = vunpack.c.h.b16 %v203
    %v936 = vunpack.c.l.b16 %v204
    %v937 = vunpack.c.h.b16 %v204
    %v938 = vunpack.c.l.b16 %v205
    %v939 = vunpack.c.h.b16 %v205
    %v940 = vunpack.c.l.b16 %v206
    %v941 = vunpack.c.h.b16 %v206
    %v942 = vunpack.c.l.b16 %v207
    %v943 = vunpack.c.h.b16 %v207
    %v944 = vunpack.c.l.b16 %v208
    %v945 = vunpack.c.h.b16 %v208
    %v946 = vunpack.c.l.b16 %v209
    %v947 = vunpack.c.h.b16 %v209
    %v948 = vunpack.c.l.b16 %v210
    %v949 = vunpack.c.h.b16 %v210
    %v950 = vunpack.c.l.b16 %v211
    %v951 = vunpack.c.h.b16 %v211
    %v952 = vunpack.c.l.b16 %v212
    %v953 = vunpack.c.h.b16 %v212
    %v954 = vunpack.c.l.b16 %v213
    %v955 = vunpack.c.h.b16 %v213
    %v956 = vunpack.c.l.b16 %v214
    %v957 = vunpack.c.h.b16 %v214
    %v958 = vunpack.c.l.b16 %v215
    %v959 = vunpack.c.h.b16 %v215
    %v960 = vunpack.c.l.b16 %v216
    %v961 = vunpack.c.h.b16 %v216
    %v962 = vunpack.c.l.b16 %v217
    %v963 = vunpack.c.h.b16 %v217
    %v964 = vunpack.c.l.b16 %v218
    %v965 = vunpack.c.h.b16 %v218
    %v966 = vunpack.c.l.b16 %v219
    %v967 = vunpack.c.h.b16 %v219
    %v968 = vunpack.c.l.b16 %v220
    %v969 = vunpack.c.h.b16 %v220
    %v970 = vunpack.c.l.b16 %v221
    %v971 = vunpack.c.h.b16 %v221
    %v972 = vunpack.c.l.b16 %v222
    %v973 = vunpack.c.h.b16 %v222
    %v974 = vunpack.c.l.b16 %v223
    %v975 = vunpack.c.h.b16 %v223
    %v976 = vunpack.c.l.b16 %v224
    %v977 = vunpack.c.h.b16 %v224
    %v978 = vunpack.c.l.b16 %v225
    %v979 = vunpack.c.h.b16 %v225
    %v980 = vunpack.c.l.b16 %v226
    %v981 = vunpack.c.h.b16 %v226
    %v982 = vunpack.c.l.b16 %v227
    %v983 = vunpack.c.h.b16 %v227
    %v984 = vunpack.c.l.b16 %v228
    %v985 = vunpack.c.h.b16 %v228
    %v986 = vunpack.c.l.b16 %v229
    %v987 = vunpack.c.h.b16 %v229
    %v988 = vunpack.c.l.b16 %v230
    %v989 = vunpack.c.h.b16 %v230
    %v990 = vunpack.c.l.b16 %v231
    %v991 = vunpack.c.h.b16 %v231
    %v992 = vunpack.c.l.b16 %v232
    %v993 = vunpack.c.h.b16 %v232
    %v994 = vunpack.c.l.b16 %v233
    %v995 = vunpack.c.h.b16 %v233
    %v996 = vunpack.c.l.b16 %v234
    %v997 = vunpack.c.h.b16 %v234
    %v998 = vunpack.c.l.b16 %v235
    %v999 = vunpack.c.h.b16 %v235
    %v1000 = vunpack.c.l.b16 %v236
    %v1001 = vunpack.c.h.b16 %v236
    %v1002 = vunpack.c.l.b16 %v237
    %v1003 = vunpack.c.h.b16 %v237
    %v1004 = vunpack.c.l.b16 %v238
    %v1005 = vunpack.c.h.b16 %v238
    %v1006 = vunpack.c.l.b16 %v239
    %v1007 = vunpack.c.h.b16 %v239
    %v1008 = vunpack.c.l.b16 %v240
    %v1009 = vunpack.c.h.b16 %v240
    %v1010 = vunpack.c.l.b16 %v241
    %v1011 = vunpack.c.h.b16 %v241
    %v1012 = vunpack.c.l.b16 %v242
    %v1013 = vunpack.c.h.b16 %v242
    %v1014 = vunpack.c.l.b16 %v243
    %v1015 = vunpack.c.h.b16 %v243
    %v1016 = vunpack.c.l.b16 %v244
    %v1017 = vunpack.c.h.b16 %v244
    %v1018 = vunpack.c.l.b16 %v245
    %v1019 = vunpack.c.h.b16 %v245
    %v1020 = vunpack.c.l.b16 %v246
    %v1021 = vunpack.c.h.b16 %v246
    %v1022 = vunpack.c.l.b16 %v247
    %v1023 = vunpack.c.h.b16 %v247
    %v1024 = vunpack.c.l.b16 %v248
    %v1025 = vunpack.c.h.b16 %v248
    %v1026 = vunpack.c.l.b16 %v249
    %v1027 = vunpack.c.h.b16 %v249
    %v1028 = vunpack.c.l.b16 %v250
    %v1029 = vunpack.c.h.b16 %v250
    %v1030 = vunpack.c.l.b16 %v251
    %v1031 = vunpack.c.h.b16 %v251
    %v1032 = vunpack.c.l.b16 %v252
    %v1033 = vunpack.c.h.b16 %v252
    %v1034 = vunpack.c.l.b16 %v253
    %v1035 = vunpack.c.h.b16 %v253
    %v1036 = vunpack.c.l.b16 %v254
    %v1037 = vunpack.c.h.b16 %v254
    %v1038 = vunpack.c.l.b16 %v255
    %v1039 = vunpack.c.h.b16 %v255
    %v1040 = vunpack.c.l.b16 %v256
    %v1041 = vunpack.c.h.b16 %v256
    %v1042 = vunpack.c.l.b16 %v257
    %v1043 = vunpack.c.h.b16 %v257
    %v1044 = vunpack.c.l.b16 %v258
    %v1045 = vunpack.c.h.b16 %v258
    %v1046 = vunpack.c.l.b16 %v259
    %v1047 = vunpack.c.h.b16 %v259
    %v1048 = vunpack.c.l.b16 %v260
    %v1049 = vunpack.c.h.b16 %v260
    %v1050 = vunpack.c.l.b16 %v261
    %v1051 = vunpack.c.h.b16 %v261
    %v1052 = vunpack.c.l.b16 %v262
    %v1053 = vunpack.c.h.b16 %v262
    %v1054 = vunpack.c.l.b16 %v263
    %v1055 = vunpack.c.h.b16 %v263
    %v1056 = vunpack.c.l.b16 %v264
    %v1057 = vunpack.c.h.b16 %v264
    %v1058 = vunpack.c.l.b16 %v265
    %v1059 = vunpack.c.h.b16 %v265
    %v1060 = vunpack.c.l.b16 %v266
    %v1061 = vunpack.c.h.b16 %v266
    %v1062 = vunpack.c.l.b16 %v267
    %v1063 = vunpack.c.h.b16 %v267
    %v1064 = vunpack.c.l.b16 %v268
    %v1065 = vunpack.c.h.b16 %v268
    %v1066 = vunpack.c.l.b16 %v269
    %v1067 = vunpack.c.h.b16 %v269
    %v1068 = vunpack.c.l.b16 %v270
    %v1069 = vunpack.c.h.b16 %v270
    %v1070 = vunpack.c.l.b16 %v271
    %v1071 = vunpack.c.h.b16 %v271
    %v1072 = vunpack.c.l.b16 %v272
    %v1073 = vunpack.c.h.b16 %v272
    %v1074 = vunpack.c.l.b16 %v273
    %v1075 = vunpack.c.h.b16 %v273
    %v1076 = vunpack.c.l.b16 %v274
    %v1077 = vunpack.c.h.b16 %v274
    %v1078 = vunpack.c.l.b16 %v275
    %v1079 = vunpack.c.h.b16 %v275
    %v1080 = vunpack.c.l.b16 %v276
    %v1081 = vunpack.c.h.b16 %v276
    %v1082 = vunpack.c.l.b16 %v277
    %v1083 = vunpack.c.h.b16 %v277
    %v1084 = vunpack.c.l.b16 %v278
    %v1085 = vunpack.c.h.b16 %v278
    %v1086 = vunpack.c.l.b16 %v279
    %v1087 = vunpack.c.h.b16 %v279
    %v1088 = vunpack.c.l.b16 %v280
    %v1089 = vunpack.c.h.b16 %v280
    %v1090 = vunpack.c.l.b16 %v281
    %v1091 = vunpack.c.h.b16 %v281
    %v1092 = vunpack.c.l.b16 %v282
    %v1093 = vunpack.c.h.b16 %v282
    %v1094 = vunpack.c.l.b16 %v283
    %v1095 = vunpack.c.h.b16 %v283
    %v1096 = vunpack.c.l.b16 %v284
    %v1097 = vunpack.c.h.b16 %v284
    %v1098 = vunpack.c.l.b16 %v285
    %v1099 = vunpack.c.h.b16 %v285
    %v1100 = vunpack.c.l.b16 %v286
    %v1101 = vunpack.c.h.b16 %v286
    %v1102 = vunpack.c.l.b16 %v287
    %v1103 = vunpack.c.h.b16 %v287
    %v1104 = vunpack.c.l.b16 %v288
    %v1105 = vunpack.c.h.b16 %v288
    %v1106 = vunpack.c.l.b16 %v289
    %v1107 = vunpack.c.h.b16 %v289
    %v1108 = vunpack.c.l.b16 %v290
    %v1109 = vunpack.c.h.b16 %v290
    %v1110 = vunpack.c.l.b16 %v291
    %v1111 = vunpack.c.h.b16 %v291
    %v1112 = vunpack.c.l.b16 %v292
    %v1113 = vunpack.c.h.b16 %v292
    %v1114 = vunpack.c.l.b16 %v293
    %v1115 = vunpack.c.h.b16 %v293
    %v1116 = vunpack.c.l.b16 %v294
    %v1117 = vunpack.c.h.b16 %v294
    %v1118 = vpack.c.b16 %v610, %v606
    %v1119 = vpack.c.b16 %v611, %v607
    %v1120 = vpack.c.b16 %v612, %v608
    %v1121 = vpack.c.b16 %v613, %v609
    %v1122 = vpack.c.b16 %v618, %v614
    %v1123 = vpack.c.b16 %v619, %v615
    %v1124 = vpack.c.b16 %v620, %v616
    %v1125 = vpack.c.b16 %v621, %v617
    %v1126 = vpack.c.b16 %v626, %v622
    %v1127 = vpack.c.b16 %v627, %v623
    %v1128 = vpack.c.b16 %v628, %v624
    %v1129 = vpack.c.b16 %v629, %v625
    %v1130 = vpack.c.b16 %v634, %v630
    %v1131 = vpack.c.b16 %v635, %v631
    %v1132 = vpack.c.b16 %v636, %v632
    %v1133 = vpack.c.b16 %v637, %v633
    %v1134 = vpack.c.b16 %v642, %v638
    %v1135 = vpack.c.b16 %v643, %v639
    %v1136 = vpack.c.b16 %v644, %v640
    %v1137 = vpack.c.b16 %v645, %v641
    %v1138 = vpack.c.b16 %v650, %v646
    %v1139 = vpack.c.b16 %v651, %v647
    %v1140 = vpack.c.b16 %v652, %v648
    %v1141 = vpack.c.b16 %v653, %v649
    %v1142 = vpack.c.b16 %v658, %v654
    %v1143 = vpack.c.b16 %v659, %v655
    %v1144 = vpack.c.b16 %v660, %v656
    %v1145 = vpack.c.b16 %v661, %v657
    %v1146 = vpack.c.b16 %v666, %v662
    %v1147 = vpack.c.b16 %v667, %v663
    %v1148 = vpack.c.b16 %v668, %v664
    %v1149 = vpack.c.b16 %v669, %v665
    %v1150 = vpack.c.b16 %v674, %v670
    %v1151 = vpack.c.b16 %v675, %v671
    %v1152 = vpack.c.b16 %v676, %v672
    %v1153 = vpack.c.b16 %v677, %v673
    %v1154 = vpack.c.b16 %v682, %v678
    %v1155 = vpack.c.b16 %v683, %v679
    %v1156 = vpack.c.b16 %v684, %v680
    %v1157 = vpack.c.b16 %v685, %v681
    %v1158 = vpack.c.b16 %v690, %v686
    %v1159 = vpack.c.b16 %v691, %v687
    %v1160 = vpack.c.b16 %v692, %v688
    %v1161 = vpack.c.b16 %v693, %v689
    %v1162 = vpack.c.b16 %v698, %v694
    %v1163 = vpack.c.b16 %v699, %v695
    %v1164 = vpack.c.b16 %v700, %v696
    %v1165 = vpack.c.b16 %v701, %v697
    %v1166 = vpack.c.b16 %v706, %v702
    %v1167 = vpack.c.b16 %v707, %v703
    %v1168 = vpack.c.b16 %v708, %v704
    %v1169 = vpack.c.b16 %v709, %v705
    %v1170 = vpack.c.b16 %v714, %v710
    %v1171 = vpack.c.b16 %v715, %v711
    %v1172 = vpack.c.b16 %v716, %v712
    %v1173 = vpack.c.b16 %v717, %v713
    %v1174 = vpack.c.b16 %v722, %v718
    %v1175 = vpack.c.b16 %v723, %v719
    %v1176 = vpack.c.b16 %v724, %v720
    %v1177 = vpack.c.b16 %v725, %v721
    %v1178 = vpack.c.b16 %v730, %v726
    %v1179 = vpack.c.b16 %v731, %v727
    %v1180 = vpack.c.b16 %v732, %v728
    %v1181 = vpack.c.b16 %v733, %v729
    %v1182 = vpack.c.b16 %v738, %v734
    %v1183 = vpack.c.b16 %v739, %v735
    %v1184 = vpack.c.b16 %v740, %v736
    %v1185 = vpack.c.b16 %v741, %v737
    %v1186 = vpack.c.b16 %v746, %v742
    %v1187 = vpack.c.b16 %v747, %v743
    %v1188 = vpack.c.b16 %v748, %v744
    %v1189 = vpack.c.b16 %v749, %v745
    %v1190 = vpack.c.b16 %v754, %v750
    %v1191 = vpack.c.b16 %v755, %v751
    %v1192 = vpack.c.b16 %v756, %v752
    %v1193 = vpack.c.b16 %v757, %v753
    %v1194 = vpack.c.b16 %v762, %v758
    %v1195 = vpack.c.b16 %v763, %v759
    %v1196 = vpack.c.b16 %v764, %v760
    %v1197 = vpack.c.b16 %v765, %v761
    %v1198 = vpack.c.b16 %v770, %v766
    %v1199 = vpack.c.b16 %v771, %v767
    %v1200 = vpack.c.b16 %v772, %v768
    %v1201 = vpack.c.b16 %v773, %v769
    %v1202 = vpack.c.b16 %v778, %v774
    %v1203 = vpack.c.b16 %v779, %v775
    %v1204 = vpack.c.b16 %v780, %v776
    %v1205 = vpack.c.b16 %v781, %v777
    %v1206 = vpack.c.b16 %v786, %v782
    %v1207 = vpack.c.b16 %v787, %v783
    %v1208 = vpack.c.b16 %v788, %v784
    %v1209 = vpack.c.b16 %v789, %v785
    %v1210 = vpack.c.b16 %v794, %v790
    %v1211 = vpack.c.b16 %v795, %v791
    %v1212 = vpack.c.b16 %v796, %v792
    %v1213 = vpack.c.b16 %v797, %v793
    %v1214 = vpack.c.b16 %v802, %v798
    %v1215 = vpack.c.b16 %v803, %v799
    %v1216 = vpack.c.b16 %v804, %v800
    %v1217 = vpack.c.b16 %v805, %v801
    %v1218 = vpack.c.b16 %v810, %v806
    %v1219 = vpack.c.b16 %v811, %v807
    %v1220 = vpack.c.b16 %v812, %v808
    %v1221 = vpack.c.b16 %v813, %v809
    %v1222 = vpack.c.b16 %v818, %v814
    %v1223 = vpack.c.b16 %v819, %v815
    %v1224 = vpack.c.b16 %v820, %v816
    %v1225 = vpack.c.b16 %v821, %v817
    %v1226 = vpack.c.b16 %v826, %v822
    %v1227 = vpack.c.b16 %v827, %v823
    %v1228 = vpack.c.b16 %v828, %v824
    %v1229 = vpack.c.b16 %v829, %v825
    %v1230 = vpack.c.b16 %v834, %v830
    %v1231 = vpack.c.b16 %v835, %v831
    %v1232 = vpack.c.b16 %v836, %v832
    %v1233 = vpack.c.b16 %v837, %v833
    %v1234 = vpack.c.b16 %v842, %v838
    %v1235 = vpack.c.b16 %v843, %v839
    %v1236 = vpack.c.b16 %v844, %v840
    %v1237 = vpack.c.b16 %v845, %v841
    %v1238 = vpack.c.b16 %v850, %v846
    %v1239 = vpack.c.b16 %v851, %v847
    %v1240 = vpack.c.b16 %v852, %v848
    %v1241 = vpack.c.b16 %v853, %v849
    %v1242 = vpack.c.b16 %v858, %v854
    %v1243 = vpack.c.b16 %v859, %v855
    %v1244 = vpack.c.b16 %v860, %v856
    %v1245 = vpack.c.b16 %v861, %v857
    %v1246 = vpack.c.b16 %v866, %v862
    %v1247 = vpack.c.b16 %v867, %v863
    %v1248 = vpack.c.b16 %v868, %v864
    %v1249 = vpack.c.b16 %v869, %v865
    %v1250 = vpack.c.b16 %v874, %v870
    %v1251 = vpack.c.b16 %v875, %v871
    %v1252 = vpack.c.b16 %v876, %v872
    %v1253 = vpack.c.b16 %v877, %v873
    %v1254 = vpack.c.b16 %v882, %v878
    %v1255 = vpack.c.b16 %v883, %v879
    %v1256 = vpack.c.b16 %v884, %v880
    %v1257 = vpack.c.b16 %v885, %v881
    %v1258 = vpack.c.b16 %v890, %v886
    %v1259 = vpack.c.b16 %v891, %v887
    %v1260 = vpack.c.b16 %v892, %v888
    %v1261 = vpack.c.b16 %v893, %v889
    %v1262 = vpack.c.b16 %v898, %v894
    %v1263 = vpack.c.b16 %v899, %v895
    %v1264 = vpack.c.b16 %v900, %v896
    %v1265 = vpack.c.b16 %v901, %v897
    %v1266 = vpack.c.b16 %v906, %v902
    %v1267 = vpack.c.b16 %v907, %v903
    %v1268 = vpack.c.b16 %v908, %v904
    %v1269 = vpack.c.b16 %v909, %v905
    %v1270 = vpack.c.b16 %v914, %v910
    %v1271 = vpack.c.b16 %v915, %v911
    %v1272 = vpack.c.b16 %v916, %v912
    %v1273 = vpack.c.b16 %v917, %v913
    %v1274 = vpack.c.b16 %v922, %v918
    %v1275 = vpack.c.b16 %v923, %v919
    %v1276 = vpack.c.b16 %v924, %v920
    %v1277 = vpack.c.b16 %v925, %v921
    %v1278 = vpack.c.b16 %v930, %v926
    %v1279 = vpack.c.b16 %v931, %v927
    %v1280 = vpack.c.b16 %v932, %v928
    %v1281 = vpack.c.b16 %v933, %v929
    %v1282 = vpack.c.b16 %v938, %v934
    %v1283 = vpack.c.b16 %v939, %v935
    %v1284 = vpack.c.b16 %v940, %v936
    %v1285 = vpack.c.b16 %v941, %v937
    %v1286 = vpack.c.b16 %v946, %v942
    %v1287 = vpack.c.b16 %v947, %v943
    %v1288 = vpack.c.b16 %v948, %v944
    %v1289 = vpack.c.b16 %v949, %v945
    %v1290 = vpack.c.b16 %v954, %v950
    %v1291 = vpack.c.b16 %v955, %v951
    %v1292 = vpack.c.b16 %v956, %v952
    %v1293 = vpack.c.b16 %v957, %v953
    %v1294 = vpack.c.b16 %v962, %v958
    %v1295 = vpack.c.b16 %v963, %v959
    %v1296 = vpack.c.b16 %v964, %v960
    %v1297 = vpack.c.b16 %v965, %v961
    %v1298 = vpack.c.b16 %v970, %v966
    %v1299 = vpack.c.b16 %v971, %v967
    %v1300 = vpack.c.b16 %v972, %v968
    %v1301 = vpack.c.b16 %v973, %v969
    %v1302 = vpack.c.b16 %v978, %v974
    %v1303 = vpack.c.b16 %v979, %v975
    %v1304 = vpack.c.b16 %v980, %v976
    %v1305 = vpack.c.b16 %v981, %v977
    %v1306 = vpack.c.b16 %v986, %v982
    %v1307 = vpack.c.b16 %v987, %v983
    %v1308 = vpack.c.b16 %v988, %v984
    %v1309 = vpack.c.b16 %v989, %v985
    %v1310 = vpack.c.b16 %v994, %v990
    %v1311 = vpack.c.b16 %v995, %v991
    %v1312 = vpack.c.b16 %v996, %v992
    %v1313 = vpack.c.b16 %v997, %v993
    %v1314 = vpack.c.b16 %v1002, %v998
    %v1315 = vpack.c.b16 %v1003, %v999
    %v1316 = vpack.c.b16 %v1004, %v1000
    %v1317 = vpack.c.b16 %v1005, %v1001
    %v1318 = vpack.c.b16 %v1010, %v1006
    %v1319 = vpack.c.b16 %v1011, %v1007
    %v1320 = vpack.c.b16 %v1012, %v1008
    %v1321 = vpack.c.b16 %v1013, %v1009
    %v1322 = vpack.c.b16 %v1018, %v1014
    %v1323 = vpack.c.b16 %v1019, %v1015
    %v1324 = vpack.c.b16 %v1020, %v1016
    %v1325 = vpack.c.b16 %v1021, %v1017
    %v1326 = vpack.c.b16 %v1026, %v1022
    %v1327 = vpack.c.b16 %v1027, %v1023
    %v1328 = vpack.c.b16 %v1028, %v1024
    %v1329 = vpack.c.b16 %v1029, %v1025
    %v1330 = vpack.c.b16 %v1034, %v1030
    %v1331 = vpack.c.b16 %v1035, %v1031
    %v1332 = vpack.c.b16 %v1036, %v1032
    %v1333 = vpack.c.b16 %v1037, %v1033
    %v1334 = vpack.c.b16 %v1042, %v1038
    %v1335 = vpack.c.b16 %v1043, %v1039
    %v1336 = vpack.c.b16 %v1044, %v1040
    %v1337 = vpack.c.b16 %v1045, %v1041
    %v1338 = vpack.c.b16 %v1050, %v1046
    %v1339 = vpack.c.b16 %v1051, %v1047
    %v1340 = vpack.c.b16 %v1052, %v1048
    %v1341 = vpack.c.b16 %v1053, %v1049
    %v1342 = vpack.c.b16 %v1058, %v1054
    %v1343 = vpack.c.b16 %v1059, %v1055
    %v1344 = vpack.c.b16 %v1060, %v1056
    %v1345 = vpack.c.b16 %v1061, %v1057
    %v1346 = vpack.c.b16 %v1066, %v1062
    %v1347 = vpack.c.b16 %v1067, %v1063
    %v1348 = vpack.c.b16 %v1068, %v1064
    %v1349 = vpack.c.b16 %v1069, %v1065
    %v1350 = vpack.c.b16 %v1074, %v1070
    %v1351 = vpack.c.b16 %v1075, %v1071
    %v1352 = vpack.c.b16 %v1076, %v1072
    %v1353 = vpack.c.b16 %v1077, %v1073
    %v1354 = vpack.c.b16 %v1082, %v1078
    %v1355 = vpack.c.b16 %v1083, %v1079
    %v1356 = vpack.c.b16 %v1084, %v1080
    %v1357 = vpack.c.b16 %v1085, %v1081
    %v1358 = vpack.c.b16 %v1090, %v1086
    %v1359 = vpack.c.b16 %v1091, %v1087
    %v1360 = vpack.c.b16 %v1092, %v1088
    %v1361 = vpack.c.b16 %v1093, %v1089
    %v1362 = vpack.c.b16 %v1098, %v1094
    %v1363 = vpack.c.b16 %v1099, %v1095
    %v1364 = vpack.c.b16 %v1100, %v1096
    %v1365 = vpack.c.b16 %v1101, %v1097
    %v1366 = vpack.c.b16 %v1106, %v1102
    %v1367 = vpack.c.b16 %v1107, %v1103
    %v1368 = vpack.c.b16 %v1108, %v1104
    %v1369 = vpack.c.b16 %v1109, %v1105
    %v1370 = vpack.c.b16 %v1114, %v1110
    %v1371 = vpack.c.b16 %v1115, %v1111
    %v1372 = vpack.c.b16 %v1116, %v1112
    %v1373 = vpack.c.b16 %v1117, %v1113
    %1630 = vmatprep.subr.bf16.mxu0 %v1119
    %1631 = vmatpush1.bf16.msra.mxu0 %v1118
    %1632 = vmatprep.subr.bf16.mxu0 %v1123
    %1633 = vmatpush1.bf16.msra.mxu0 %v1122
    %1634 = vmatprep.subr.bf16.mxu0 %v1127
    %1635 = vmatpush1.bf16.msra.mxu0 %v1126
    %1636 = vmatprep.subr.bf16.mxu0 %v1131
    %1637 = vmatpush1.bf16.msra.mxu0 %v1130
    %1638 = vmatprep.subr.bf16.mxu0 %v1135
    %1639 = vmatpush1.bf16.msra.mxu0 %v1134
    %1640 = vmatprep.subr.bf16.mxu0 %v1139
    %1641 = vmatpush1.bf16.msra.mxu0 %v1138
    %1642 = vmatprep.subr.bf16.mxu0 %v1143
    %1643 = vmatpush1.bf16.msra.mxu0 %v1142
    %1644 = vmatprep.subr.bf16.mxu0 %v1147
    %1645 = vmatpush1.bf16.msra.mxu0 %v1146
    %1646 = vmatprep.subr.bf16.mxu0 %v1151
    %1647 = vmatpush1.bf16.msra.mxu0 %v1150
    %1648 = vmatprep.subr.bf16.mxu0 %v1155
    %1649 = vmatpush1.bf16.msra.mxu0 %v1154
    %1650 = vmatprep.subr.bf16.mxu0 %v1159
    %1651 = vmatpush1.bf16.msra.mxu0 %v1158
    %1652 = vmatprep.subr.bf16.mxu0 %v1163
    %1653 = vmatpush1.bf16.msra.mxu0 %v1162
    %1654 = vmatprep.subr.bf16.mxu0 %v1167
    %1655 = vmatpush1.bf16.msra.mxu0 %v1166
    %1656 = vmatprep.subr.bf16.mxu0 %v1171
    %1657 = vmatpush1.bf16.msra.mxu0 %v1170
    %1658 = vmatprep.subr.bf16.mxu0 %v1175
    %1659 = vmatpush1.bf16.msra.mxu0 %v1174
    %1660 = vmatprep.subr.bf16.mxu0 %v1179
    %1661 = vmatpush1.bf16.msra.mxu0 %v1178
    %1662 = vmatprep.mubr.bf16.mxu0 %v343
    %1663 = vmatmul.mubr.bf16.gmra.mrb[0].mxu0 %v342
    %v1664 = vpop.f32.mrb[0].mxu0
    %v1665 = vadd.f32 0.0, %v1664
    %v1666 = vpop.f32.mrb[0].mxu0
    %v1667 = vadd.f32 0.0, %v1666
    %v1668 = vpop.f32.mrb[0].mxu0
    %v1669 = vpop.f32.mrb[0].mxu0
    %1670 = vdwg.mxu0
    %1671 = vmatprep.subr.bf16.mxu0 %v1183
    %1672 = vmatpush1.bf16.msra.mxu0 %v1182
    %1673 = vmatprep.subr.bf16.mxu0 %v1187
    %1674 = vmatpush1.bf16.msra.mxu0 %v1186
    %1675 = vmatprep.subr.bf16.mxu0 %v1191
    %1676 = vmatpush1.bf16.msra.mxu0 %v1190
    %1677 = vmatprep.subr.bf16.mxu0 %v1195
    %1678 = vmatpush1.bf16.msra.mxu0 %v1194
    %1679 = vmatprep.subr.bf16.mxu0 %v1199
    %1680 = vmatpush1.bf16.msra.mxu0 %v1198
    %1681 = vmatprep.subr.bf16.mxu0 %v1203
    %1682 = vmatpush1.bf16.msra.mxu0 %v1202
    %1683 = vmatprep.subr.bf16.mxu0 %v1207
    %1684 = vmatpush1.bf16.msra.mxu0 %v1206
    %1685 = vmatprep.subr.bf16.mxu0 %v1211
    %1686 = vmatpush1.bf16.msra.mxu0 %v1210
    %1687 = vmatprep.subr.bf16.mxu0 %v1215
    %1688 = vmatpush1.bf16.msra.mxu0 %v1214
    %1689 = vmatprep.subr.bf16.mxu0 %v1219
    %1690 = vmatpush1.bf16.msra.mxu0 %v1218
    %1691 = vmatprep.subr.bf16.mxu0 %v1223
    %1692 = vmatpush1.bf16.msra.mxu0 %v1222
    %1693 = vmatprep.subr.bf16.mxu0 %v1227
    %1694 = vmatpush1.bf16.msra.mxu0 %v1226
    %1695 = vmatprep.subr.bf16.mxu0 %v1231
    %1696 = vmatpush1.bf16.msra.mxu0 %v1230
    %1697 = vmatprep.subr.bf16.mxu0 %v1235
    %1698 = vmatpush1.bf16.msra.mxu0 %v1234
    %1699 = vmatprep.subr.bf16.mxu0 %v1239
    %1700 = vmatpush1.bf16.msra.mxu0 %v1238
    %1701 = vmatprep.subr.bf16.mxu0 %v1243
    %1702 = vmatpush1.bf16.msra.mxu0 %v1242
    %1703 = vmatprep.mubr.bf16.mxu0 %v345
    %1704 = vmatmul.mubr.bf16.gmra.mrb[0].mxu0 %v344
    %v1705 = vpop.f32.mrb[0].mxu0
    %v1706 = vadd.f32 %v1665, %v1705
    %v1707 = vpop.f32.mrb[0].mxu0
    %v1708 = vadd.f32 %v1667, %v1707
    %v1709 = vpop.f32.mrb[0].mxu0
    %v1710 = vpop.f32.mrb[0].mxu0
    %1711 = vdwg.mxu0
    %1712 = vmatprep.subr.bf16.mxu0 %v1247
    %1713 = vmatpush1.bf16.msra.mxu0 %v1246
    %1714 = vmatprep.subr.bf16.mxu0 %v1251
    %1715 = vmatpush1.bf16.msra.mxu0 %v1250
    %1716 = vmatprep.subr.bf16.mxu0 %v1255
    %1717 = vmatpush1.bf16.msra.mxu0 %v1254
    %1718 = vmatprep.subr.bf16.mxu0 %v1259
    %1719 = vmatpush1.bf16.msra.mxu0 %v1258
    %1720 = vmatprep.subr.bf16.mxu0 %v1263
    %1721 = vmatpush1.bf16.msra.mxu0 %v1262
    %1722 = vmatprep.subr.bf16.mxu0 %v1267
    %1723 = vmatpush1.bf16.msra.mxu0 %v1266
    %1724 = vmatprep.subr.bf16.mxu0 %v1271
    %1725 = vmatpush1.bf16.msra.mxu0 %v1270
    %1726 = vmatprep.subr.bf16.mxu0 %v1275
    %1727 = vmatpush1.bf16.msra.mxu0 %v1274
    %1728 = vmatprep.subr.bf16.mxu0 %v1279
    %1729 = vmatpush1.bf16.msra.mxu0 %v1278
    %1730 = vmatprep.subr.bf16.mxu0 %v1283
    %1731 = vmatpush1.bf16.msra.mxu0 %v1282
    %1732 = vmatprep.subr.bf16.mxu0 %v1287
    %1733 = vmatpush1.bf16.msra.mxu0 %v1286
    %1734 = vmatprep.subr.bf16.mxu0 %v1291
    %1735 = vmatpush1.bf16.msra.mxu0 %v1290
    %1736 = vmatprep.subr.bf16.mxu0 %v1295
    %1737 = vmatpush1.bf16.msra.mxu0 %v1294
    %1738 = vmatprep.subr.bf16.mxu0 %v1299
    %1739 = vmatpush1.bf16.msra.mxu0 %v1298
    %1740 = vmatprep.subr.bf16.mxu0 %v1303
    %1741 = vmatpush1.bf16.msra.mxu0 %v1302
    %1742 = vmatprep.subr.bf16.mxu0 %v1307
    %1743 = vmatpush1.bf16.msra.mxu0 %v1306
    %1744 = vmatprep.mubr.bf16.mxu0 %v347
    %1745 = vmatmul.mubr.bf16.gmra.mrb[0].mxu0 %v346
    %v1746 = vpop.f32.mrb[0].mxu0
    %v1747 = vadd.f32 %v1706, %v1746
    %v1748 = vpop.f32.mrb[0].mxu0
    %v1749 = vadd.f32 %v1708, %v1748
    %v1750 = vpop.f32.mrb[0].mxu0
    %v1751 = vpop.f32.mrb[0].mxu0
    %1752 = vdwg.mxu0
    %1753 = vmatprep.subr.bf16.mxu0 %v1311
    %1754 = vmatpush1.bf16.msra.mxu0 %v1310
    %1755 = vmatprep.subr.bf16.mxu0 %v1315
    %1756 = vmatpush1.bf16.msra.mxu0 %v1314
    %1757 = vmatprep.subr.bf16.mxu0 %v1319
    %1758 = vmatpush1.bf16.msra.mxu0 %v1318
    %1759 = vmatprep.subr.bf16.mxu0 %v1323
    %1760 = vmatpush1.bf16.msra.mxu0 %v1322
    %1761 = vmatprep.subr.bf16.mxu0 %v1327
    %1762 = vmatpush1.bf16.msra.mxu0 %v1326
    %1763 = vmatprep.subr.bf16.mxu0 %v1331
    %1764 = vmatpush1.bf16.msra.mxu0 %v1330
    %1765 = vmatprep.subr.bf16.mxu0 %v1335
    %1766 = vmatpush1.bf16.msra.mxu0 %v1334
    %1767 = vmatprep.subr.bf16.mxu0 %v1339
    %1768 = vmatpush1.bf16.msra.mxu0 %v1338
    %1769 = vmatprep.subr.bf16.mxu0 %v1343
    %1770 = vmatpush1.bf16.msra.mxu0 %v1342
    %1771 = vmatprep.subr.bf16.mxu0 %v1347
    %1772 = vmatpush1.bf16.msra.mxu0 %v1346
    %1773 = vmatprep.subr.bf16.mxu0 %v1351
    %1774 = vmatpush1.bf16.msra.mxu0 %v1350
    %1775 = vmatprep.subr.bf16.mxu0 %v1355
    %1776 = vmatpush1.bf16.msra.mxu0 %v1354
    %1777 = vmatprep.subr.bf16.mxu0 %v1359
    %1778 = vmatpush1.bf16.msra.mxu0 %v1358
    %1779 = vmatprep.subr.bf16.mxu0 %v1363
    %1780 = vmatpush1.bf16.msra.mxu0 %v1362
    %1781 = vmatprep.subr.bf16.mxu0 %v1367
    %1782 = vmatpush1.bf16.msra.mxu0 %v1366
    %1783 = vmatprep.subr.bf16.mxu0 %v1371
    %1784 = vmatpush1.bf16.msra.mxu0 %v1370
    %1785 = vmatprep.mubr.bf16.mxu0 %v349
    %1786 = vmatmul.mubr.bf16.gmra.mrb[0].mxu0 %v348
    %v1787 = vpop.f32.mrb[0].mxu0
    %v1788 = vadd.f32 %v1747, %v1787
    %v1789 = vpop.f32.mrb[0].mxu0
    %v1790 = vadd.f32 %v1749, %v1789
    %v1791 = vpop.f32.mrb[0].mxu0
    %v1792 = vpop.f32.mrb[0].mxu0
    %1793 = vdwg.mxu0
    %1794 = vmatprep.subr.bf16.mxu0 %v1121
    %1795 = vmatpush1.bf16.msra.mxu0 %v1120
    %1796 = vmatprep.subr.bf16.mxu0 %v1125
    %1797 = vmatpush1.bf16.msra.mxu0 %v1124
    %1798 = vmatprep.subr.bf16.mxu0 %v1129
    %1799 = vmatpush1.bf16.msra.mxu0 %v1128
    %1800 = vmatprep.subr.bf16.mxu0 %v1133
    %1801 = vmatpush1.bf16.msra.mxu0 %v1132
    %1802 = vmatprep.subr.bf16.mxu0 %v1137
    %1803 = vmatpush1.bf16.msra.mxu0 %v1136
    %1804 = vmatprep.subr.bf16.mxu0 %v1141
    %1805 = vmatpush1.bf16.msra.mxu0 %v1140
    %1806 = vmatprep.subr.bf16.mxu0 %v1145
    %1807 = vmatpush1.bf16.msra.mxu0 %v1144
    %1808 = vmatprep.subr.bf16.mxu0 %v1149
    %1809 = vmatpush1.bf16.msra.mxu0 %v1148
    %1810 = vmatprep.subr.bf16.mxu0 %v1153
    %1811 = vmatpush1.bf16.msra.mxu0 %v1152
    %1812 = vmatprep.subr.bf16.mxu0 %v1157
    %1813 = vmatpush1.bf16.msra.mxu0 %v1156
    %1814 = vmatprep.subr.bf16.mxu0 %v1161
    %1815 = vmatpush1.bf16.msra.mxu0 %v1160
    %1816 = vmatprep.subr.bf16.mxu0 %v1165
    %1817 = vmatpush1.bf16.msra.mxu0 %v1164
    %1818 = vmatprep.subr.bf16.mxu0 %v1169
    %1819 = vmatpush1.bf16.msra.mxu0 %v1168
    %1820 = vmatprep.subr.bf16.mxu0 %v1173
    %1821 = vmatpush1.bf16.msra.mxu0 %v1172
    %1822 = vmatprep.subr.bf16.mxu0 %v1177
    %1823 = vmatpush1.bf16.msra.mxu0 %v1176
    %1824 = vmatprep.subr.bf16.mxu0 %v1181
    %1825 = vmatpush1.bf16.msra.mxu0 %v1180
    %1826 = vmatprep.mubr.bf16.mxu0 %v343
    %1827 = vmatmul.mubr.bf16.gmra.mrb[0].mxu0 %v342
    %v1828 = vpop.f32.mrb[0].mxu0
    %v1829 = vadd.f32 0.0, %v1828
    %v1830 = vpop.f32.mrb[0].mxu0
    %v1831 = vadd.f32 0.0, %v1830
    %v1832 = vpop.f32.mrb[0].mxu0
    %v1833 = vpop.f32.mrb[0].mxu0
    %1834 = vdwg.mxu0
    %1835 = vmatprep.subr.bf16.mxu0 %v1185
    %1836 = vmatpush1.bf16.msra.mxu0 %v1184
    %1837 = vmatprep.subr.bf16.mxu0 %v1189
    %1838 = vmatpush1.bf16.msra.mxu0 %v1188
    %1839 = vmatprep.subr.bf16.mxu0 %v1193
    %1840 = vmatpush1.bf16.msra.mxu0 %v1192
    %1841 = vmatprep.subr.bf16.mxu0 %v1197
    %1842 = vmatpush1.bf16.msra.mxu0 %v1196
    %1843 = vmatprep.subr.bf16.mxu0 %v1201
    %1844 = vmatpush1.bf16.msra.mxu0 %v1200
    %1845 = vmatprep.subr.bf16.mxu0 %v1205
    %1846 = vmatpush1.bf16.msra.mxu0 %v1204
    %1847 = vmatprep.subr.bf16.mxu0 %v1209
    %1848 = vmatpush1.bf16.msra.mxu0 %v1208
    %1849 = vmatprep.subr.bf16.mxu0 %v1213
    %1850 = vmatpush1.bf16.msra.mxu0 %v1212
    %1851 = vmatprep.subr.bf16.mxu0 %v1217
    %1852 = vmatpush1.bf16.msra.mxu0 %v1216
    %1853 = vmatprep.subr.bf16.mxu0 %v1221
    %1854 = vmatpush1.bf16.msra.mxu0 %v1220
    %1855 = vmatprep.subr.bf16.mxu0 %v1225
    %1856 = vmatpush1.bf16.msra.mxu0 %v1224
    %1857 = vmatprep.subr.bf16.mxu0 %v1229
    %1858 = vmatpush1.bf16.msra.mxu0 %v1228
    %1859 = vmatprep.subr.bf16.mxu0 %v1233
    %1860 = vmatpush1.bf16.msra.mxu0 %v1232
    %1861 = vmatprep.subr.bf16.mxu0 %v1237
    %1862 = vmatpush1.bf16.msra.mxu0 %v1236
    %1863 = vmatprep.subr.bf16.mxu0 %v1241
    %1864 = vmatpush1.bf16.msra.mxu0 %v1240
    %1865 = vmatprep.subr.bf16.mxu0 %v1245
    %1866 = vmatpush1.bf16.msra.mxu0 %v1244
    %1867 = vmatprep.mubr.bf16.mxu0 %v345
    %1868 = vmatmul.mubr.bf16.gmra.mrb[0].mxu0 %v344
    %v1869 = vpop.f32.mrb[0].mxu0
    %v1870 = vadd.f32 %v1829, %v1869
    %v1871 = vpop.f32.mrb[0].mxu0
    %v1872 = vadd.f32 %v1831, %v1871
    %v1873 = vpop.f32.mrb[0].mxu0
    %v1874 = vpop.f32.mrb[0].mxu0
    %1875 = vdwg.mxu0
    %1876 = vmatprep.subr.bf16.mxu0 %v1249
    %1877 = vmatpush1.bf16.msra.mxu0 %v1248
    %1878 = vmatprep.subr.bf16.mxu0 %v1253
    %1879 = vmatpush1.bf16.msra.mxu0 %v1252
    %1880 = vmatprep.subr.bf16.mxu0 %v1257
    %1881 = vmatpush1.bf16.msra.mxu0 %v1256
    %1882 = vmatprep.subr.bf16.mxu0 %v1261
    %1883 = vmatpush1.bf16.msra.mxu0 %v1260
    %1884 = vmatprep.subr.bf16.mxu0 %v1265
    %1885 = vmatpush1.bf16.msra.mxu0 %v1264
    %1886 = vmatprep.subr.bf16.mxu0 %v1269
    %1887 = vmatpush1.bf16.msra.mxu0 %v1268
    %1888 = vmatprep.subr.bf16.mxu0 %v1273
    %1889 = vmatpush1.bf16.msra.mxu0 %v1272
    %1890 = vmatprep.subr.bf16.mxu0 %v1277
    %1891 = vmatpush1.bf16.msra.mxu0 %v1276
    %1892 = vmatprep.subr.bf16.mxu0 %v1281
    %1893 = vmatpush1.bf16.msra.mxu0 %v1280
    %1894 = vmatprep.subr.bf16.mxu0 %v1285
    %1895 = vmatpush1.bf16.msra.mxu0 %v1284
    %1896 = vmatprep.subr.bf16.mxu0 %v1289
    %1897 = vmatpush1.bf16.msra.mxu0 %v1288
    %1898 = vmatprep.subr.bf16.mxu0 %v1293
    %1899 = vmatpush1.bf16.msra.mxu0 %v1292
    %1900 = vmatprep.subr.bf16.mxu0 %v1297
    %1901 = vmatpush1.bf16.msra.mxu0 %v1296
    %1902 = vmatprep.subr.bf16.mxu0 %v1301
    %1903 = vmatpush1.bf16.msra.mxu0 %v1300
    %1904 = vmatprep.subr.bf16.mxu0 %v1305
    %1905 = vmatpush1.bf16.msra.mxu0 %v1304
    %1906 = vmatprep.subr.bf16.mxu0 %v1309
    %1907 = vmatpush1.bf16.msra.mxu0 %v1308
    %1908 = vmatprep.mubr.bf16.mxu0 %v347
    %1909 = vmatmul.mubr.bf16.gmra.mrb[0].mxu0 %v346
    %v1910 = vpop.f32.mrb[0].mxu0
    %v1911 = vadd.f32 %v1870, %v1910
    %v1912 = vpop.f32.mrb[0].mxu0
    %v1913 = vadd.f32 %v1872, %v1912
    %v1914 = vpop.f32.mrb[0].mxu0
    %v1915 = vpop.f32.mrb[0].mxu0
    %1916 = vdwg.mxu0
    %1917 = vmatprep.subr.bf16.mxu0 %v1313
    %1918 = vmatpush1.bf16.msra.mxu0 %v1312
    %1919 = vmatprep.subr.bf16.mxu0 %v1317
    %1920 = vmatpush1.bf16.msra.mxu0 %v1316
    %1921 = vmatprep.subr.bf16.mxu0 %v1321
    %1922 = vmatpush1.bf16.msra.mxu0 %v1320
    %1923 = vmatprep.subr.bf16.mxu0 %v1325
    %1924 = vmatpush1.bf16.msra.mxu0 %v1324
    %1925 = vmatprep.subr.bf16.mxu0 %v1329
    %1926 = vmatpush1.bf16.msra.mxu0 %v1328
    %1927 = vmatprep.subr.bf16.mxu0 %v1333
    %1928 = vmatpush1.bf16.msra.mxu0 %v1332
    %1929 = vmatprep.subr.bf16.mxu0 %v1337
    %1930 = vmatpush1.bf16.msra.mxu0 %v1336
    %1931 = vmatprep.subr.bf16.mxu0 %v1341
    %1932 = vmatpush1.bf16.msra.mxu0 %v1340
    %1933 = vmatprep.subr.bf16.mxu0 %v1345
    %1934 = vmatpush1.bf16.msra.mxu0 %v1344
    %1935 = vmatprep.subr.bf16.mxu0 %v1349
    %1936 = vmatpush1.bf16.msra.mxu0 %v1348
    %1937 = vmatprep.subr.bf16.mxu0 %v1353
    %1938 = vmatpush1.bf16.msra.mxu0 %v1352
    %1939 = vmatprep.subr.bf16.mxu0 %v1357
    %1940 = vmatpush1.bf16.msra.mxu0 %v1356
    %1941 = vmatprep.subr.bf16.mxu0 %v1361
    %1942 = vmatpush1.bf16.msra.mxu0 %v1360
    %1943 = vmatprep.subr.bf16.mxu0 %v1365
    %1944 = vmatpush1.bf16.msra.mxu0 %v1364
    %1945 = vmatprep.subr.bf16.mxu0 %v1369
    %1946 = vmatpush1.bf16.msra.mxu0 %v1368
    %1947 = vmatprep.subr.bf16.mxu0 %v1373
    %1948 = vmatpush1.bf16.msra.mxu0 %v1372
    %1949 = vmatprep.mubr.bf16.mxu0 %v349
    %1950 = vmatmul.mubr.bf16.gmra.mrb[0].mxu0 %v348
    %v1951 = vpop.f32.mrb[0].mxu0
    %v1952 = vadd.f32 %v1911, %v1951
    %v1953 = vpop.f32.mrb[0].mxu0
    %v1954 = vadd.f32 %v1913, %v1953
    %v1955 = vpop.f32.mrb[0].mxu0
    %v1956 = vpop.f32.mrb[0].mxu0
    %1957 = vdwg.mxu0
    %v1962 = vcombine.low %v1788, %v1790
    %v1963 = vcombine.low %v1952, %v1954
    %v1965 = vunpack.c.l.s4 1983009808
    %v1966 = vunpack.c.0.s8 %v1965
    %v1967 = vlaneseq
    %v1968 = vshrl.u32 %v1967, 7
    %v1969 = vsub.s32 %v1966, %v1968
    %v1970 = vrot.slane %v1962, %v1969
    %v1972 = vunpack.c.l.s4 1983009808
    %v1973 = vunpack.c.0.s8 %v1972
    %v1974 = vlaneseq
    %v1975 = vshrl.u32 %v1974, 7
    %v1976 = vsub.s32 %v1973, %v1975
    %v1977 = vrot.slane %v1963, %v1976
    %v1978 = vcombine.low %v1970, %v1977
    %v1980 = vadd.f32 %v295, %v1978
    %1981 = vst [vmem:[#allocation2] sm:$0xff] %v1980
    // Predicated region
    $region42: #{smol_actor_forward.5} parent=1 // pred_check
      %p1982 = pneg %p34
    $region43: #{smol_actor_forward.5} parent=1 // pred_check_branch
      %1984 = sbr.rel (%p1982) target = $region45
    $region44: #{smol_actor_forward.5} parent=1 // pred_region
      %v1985 = vld [vmem:[#allocation2] sm:$0xff]
      %v1986 = vld [vmem:[%s2] sm:$0xf]
      %v1988 = vlaneseq
      %v1989 = vshrl.u32 %v1988, 7
      %v1990 = vsub.s32 0, %v1989
      %v1991 = vrot.slane %v1986, %v1990
      %v1992 = vlaneseq
      %v1993 = vshrl.u32 %v1992, 7
      %v1994 = vsub.s32 1, %v1993
      %v1995 = vrot.slane %v1986, %v1994
      %v1996 = vlaneseq
      %v1997 = vshrl.u32 %v1996, 7
      %v1998 = vsub.s32 2, %v1997
      %v1999 = vrot.slane %v1986, %v1998
      %v2000 = vlaneseq
      %v2001 = vshrl.u32 %v2000, 7
      %v2002 = vsub.s32 3, %v2001
      %v2003 = vrot.slane %v1986, %v2002
      %v2004 = vcombine.low %v1991, %v1995
      %v2005 = vcombine.low %v1999, %v2003
      %v2007 = vunpack.c.l.s4 1983009808
      %v2008 = vunpack.c.0.s8 %v2007
      %v2009 = vlaneseq
      %v2010 = vshrl.u32 %v2009, 7
      %v2011 = vsub.s32 %v2008, %v2010
      %v2012 = vrot.slane %v2004, %v2011
      %v2014 = vunpack.c.l.s4 1983009808
      %v2015 = vunpack.c.0.s8 %v2014
      %v2016 = vlaneseq
      %v2017 = vshrl.u32 %v2016, 7
      %v2018 = vsub.s32 %v2015, %v2017
      %v2019 = vrot.slane %v2005, %v2018
      %v2020 = vcombine.low %v2012, %v2019
      %v2022 = vadd.f32 %v1985, %v2020
      %v2023 = vxor.u32 %v2022, 2147483648
      %v2024 = vmul.f32 %v2023, 1.442695
      %v2025 = vpow.pop %v2024
      %v2026 = vadd.f32 %v2025, 1.0
      %v2027 = vrcp.pop %v2026
      %v2028 = vmul.f32 1.0, %v2027
      %v2030 = vrot.slane %v2022, 4
      %v2032 = vtanh.pop %v2030
      %v2033 = vrot.slane %v2022, 6
      %v2035 = vxor.u32 %v2033, 2147483648
      %v2036 = vmul.f32 %v2035, 1.442695
      %v2037 = vpow.pop %v2036
      %v2038 = vadd.f32 %v2037, 1.0
      %v2039 = vrcp.pop %v2038
      %v2040 = vmul.f32 1.0, %v2039
      %v2041 = vmul.f32 %v2028, %v2032
      %v2042 = vtanh.pop %v2041
      %v2043 = vmul.f32 %v2040, %v2042
      %v2044 = vld [vmem:[%s3] sm:$0xff]
      %v2045 = vld [vmem:[%s3 + $0x8] sm:$0xff]
      %v2046 = vld [vmem:[%s3 + $0x10] sm:$0xff]
      %v2047 = vld [vmem:[%s3 + $0x18] sm:$0xff]
      %v2048 = vld [vmem:[%s3 + $0x20] sm:$0xff]
      %v2049 = vld [vmem:[%s3 + $0x28] sm:$0xff]
      %v2050 = vld [vmem:[%s3 + $0x30] sm:$0xff]
      %v2051 = vld [vmem:[%s3 + $0x38] sm:$0xff]
      %v2052 = vld [vmem:[%s3 + $0x40] sm:$0xff]
      %v2053 = vld [vmem:[%s3 + $0x48] sm:$0xff]
      %v2054 = vld [vmem:[%s3 + $0x50] sm:$0xff]
      %v2055 = vld [vmem:[%s3 + $0x58] sm:$0xff]
      %v2056 = vld [vmem:[%s3 + $0x60] sm:$0xff]
      %v2057 = vld [vmem:[%s3 + $0x68] sm:$0xff]
      %v2058 = vld [vmem:[%s3 + $0x70] sm:$0xff]
      %v2059 = vld [vmem:[%s3 + $0x78] sm:$0xff]
      %v2060 = vld [vmem:[%s3 + $0x80] sm:$0xff]
      %v2061 = vld [vmem:[%s3 + $0x88] sm:$0xff]
      %v2062 = vld [vmem:[%s3 + $0x90] sm:$0xff]
      %v2063 = vld [vmem:[%s3 + $0x98] sm:$0xff]
      %v2064 = vld [vmem:[%s3 + $0xa0] sm:$0xff]
      %v2065 = vld [vmem:[%s3 + $0xa8] sm:$0xff]
      %v2066 = vld [vmem:[%s3 + $0xb0] sm:$0xff]
      %v2067 = vld [vmem:[%s3 + $0xb8] sm:$0xff]
      %v2068 = vld [vmem:[%s3 + $0xc0] sm:$0xff]
      %v2069 = vld [vmem:[%s3 + $0xc8] sm:$0xff]
      %v2070 = vld [vmem:[%s3 + $0xd0] sm:$0xff]
      %v2071 = vld [vmem:[%s3 + $0xd8] sm:$0xff]
      %v2072 = vld [vmem:[%s3 + $0xe0] sm:$0xff]
      %v2073 = vld [vmem:[%s3 + $0xe8] sm:$0xff]
      %v2074 = vld [vmem:[%s3 + $0xf0] sm:$0xff]
      %v2075 = vld [vmem:[%s3 + $0xf8] sm:$0xff]
      %v2076 = vpack.c.bf16 %v2043, %v2043
      %v2077 = vld [vmem:[%s4] sm:$0xf]
      %v2079 = vlaneseq
      %v2080 = vshrl.u32 %v2079, 7
      %v2081 = vsub.s32 0, %v2080
      %v2082 = vrot.slane %v2077, %v2081
      %v2083 = vlaneseq
      %v2084 = vshrl.u32 %v2083, 7
      %v2085 = vsub.s32 2, %v2084
      %v2086 = vrot.slane %v2077, %v2085
      %v2087 = vlaneseq
      %v2088 = vshrl.u32 %v2087, 7
      %v2089 = vsub.s32 3, %v2088
      %v2090 = vrot.slane %v2077, %v2089
      %v2126 = vunpack.c.l.b16 %v2044
      %v2127 = vunpack.c.h.b16 %v2044
      %v2128 = vunpack.c.l.b16 %v2045
      %v2129 = vunpack.c.h.b16 %v2045
      %v2130 = vunpack.c.l.b16 %v2046
      %v2131 = vunpack.c.h.b16 %v2046
      %v2132 = vunpack.c.l.b16 %v2047
      %v2133 = vunpack.c.h.b16 %v2047
      %v2134 = vunpack.c.l.b16 %v2048
      %v2135 = vunpack.c.h.b16 %v2048
      %v2136 = vunpack.c.l.b16 %v2049
      %v2137 = vunpack.c.h.b16 %v2049
      %v2138 = vunpack.c.l.b16 %v2050
      %v2139 = vunpack.c.h.b16 %v2050
      %v2140 = vunpack.c.l.b16 %v2051
      %v2141 = vunpack.c.h.b16 %v2051
      %v2142 = vunpack.c.l.b16 %v2052
      %v2143 = vunpack.c.h.b16 %v2052
      %v2144 = vunpack.c.l.b16 %v2053
      %v2145 = vunpack.c.h.b16 %v2053
      %v2146 = vunpack.c.l.b16 %v2054
      %v2147 = vunpack.c.h.b16 %v2054
      %v2148 = vunpack.c.l.b16 %v2055
      %v2149 = vunpack.c.h.b16 %v2055
      %v2150 = vunpack.c.l.b16 %v2056
      %v2151 = vunpack.c.h.b16 %v2056
      %v2152 = vunpack.c.l.b16 %v2057
      %v2153 = vunpack.c.h.b16 %v2057
      %v2154 = vunpack.c.l.b16 %v2058
      %v2155 = vunpack.c.h.b16 %v2058
      %v2156 = vunpack.c.l.b16 %v2059
      %v2157 = vunpack.c.h.b16 %v2059
      %v2158 = vunpack.c.l.b16 %v2060
      %v2159 = vunpack.c.h.b16 %v2060
      %v2160 = vunpack.c.l.b16 %v2061
      %v2161 = vunpack.c.h.b16 %v2061
      %v2162 = vunpack.c.l.b16 %v2062
      %v2163 = vunpack.c.h.b16 %v2062
      %v2164 = vunpack.c.l.b16 %v2063
      %v2165 = vunpack.c.h.b16 %v2063
      %v2166 = vunpack.c.l.b16 %v2064
      %v2167 = vunpack.c.h.b16 %v2064
      %v2168 = vunpack.c.l.b16 %v2065
      %v2169 = vunpack.c.h.b16 %v2065
      %v2170 = vunpack.c.l.b16 %v2066
      %v2171 = vunpack.c.h.b16 %v2066
      %v2172 = vunpack.c.l.b16 %v2067
      %v2173 = vunpack.c.h.b16 %v2067
      %v2174 = vunpack.c.l.b16 %v2068
      %v2175 = vunpack.c.h.b16 %v2068
      %v2176 = vunpack.c.l.b16 %v2069
      %v2177 = vunpack.c.h.b16 %v2069
      %v2178 = vunpack.c.l.b16 %v2070
      %v2179 = vunpack.c.h.b16 %v2070
      %v2180 = vunpack.c.l.b16 %v2071
      %v2181 = vunpack.c.h.b16 %v2071
      %v2182 = vunpack.c.l.b16 %v2072
      %v2183 = vunpack.c.h.b16 %v2072
      %v2184 = vunpack.c.l.b16 %v2073
      %v2185 = vunpack.c.h.b16 %v2073
      %v2186 = vunpack.c.l.b16 %v2074
      %v2187 = vunpack.c.h.b16 %v2074
      %v2188 = vunpack.c.l.b16 %v2075
      %v2189 = vunpack.c.h.b16 %v2075
      %v2190 = vpack.c.b16 %v2130, %v2126
      %v2191 = vpack.c.b16 %v2131, %v2127
      %v2192 = vpack.c.b16 %v2132, %v2128
      %v2193 = vpack.c.b16 %v2133, %v2129
      %v2194 = vpack.c.b16 %v2138, %v2134
      %v2195 = vpack.c.b16 %v2139, %v2135
      %v2196 = vpack.c.b16 %v2140, %v2136
      %v2197 = vpack.c.b16 %v2141, %v2137
      %v2198 = vpack.c.b16 %v2146, %v2142
      %v2199 = vpack.c.b16 %v2147, %v2143
      %v2200 = vpack.c.b16 %v2148, %v2144
      %v2201 = vpack.c.b16 %v2149, %v2145
      %v2202 = vpack.c.b16 %v2154, %v2150
      %v2203 = vpack.c.b16 %v2155, %v2151
      %v2204 = vpack.c.b16 %v2156, %v2152
      %v2205 = vpack.c.b16 %v2157, %v2153
      %v2206 = vpack.c.b16 %v2162, %v2158
      %v2207 = vpack.c.b16 %v2163, %v2159
      %v2208 = vpack.c.b16 %v2164, %v2160
      %v2209 = vpack.c.b16 %v2165, %v2161
      %v2210 = vpack.c.b16 %v2170, %v2166
      %v2211 = vpack.c.b16 %v2171, %v2167
      %v2212 = vpack.c.b16 %v2172, %v2168
      %v2213 = vpack.c.b16 %v2173, %v2169
      %v2214 = vpack.c.b16 %v2178, %v2174
      %v2215 = vpack.c.b16 %v2179, %v2175
      %v2216 = vpack.c.b16 %v2180, %v2176
      %v2217 = vpack.c.b16 %v2181, %v2177
      %v2218 = vpack.c.b16 %v2186, %v2182
      %v2219 = vpack.c.b16 %v2187, %v2183
      %v2220 = vpack.c.b16 %v2188, %v2184
      %v2221 = vpack.c.b16 %v2189, %v2185
      %2254 = vmatprep.subr.bf16.mxu0 %v2191
      %2255 = vmatpush1.bf16.msra.mxu0 %v2190
      %2256 = vmatprep.subr.bf16.mxu0 %v2195
      %2257 = vmatpush1.bf16.msra.mxu0 %v2194
      %2258 = vmatprep.subr.bf16.mxu0 %v2199
      %2259 = vmatpush1.bf16.msra.mxu0 %v2198
      %2260 = vmatprep.subr.bf16.mxu0 %v2203
      %2261 = vmatpush1.bf16.msra.mxu0 %v2202
      %2262 = vmatprep.subr.bf16.mxu0 %v2207
      %2263 = vmatpush1.bf16.msra.mxu0 %v2206
      %2264 = vmatprep.subr.bf16.mxu0 %v2211
      %2265 = vmatpush1.bf16.msra.mxu0 %v2210
      %2266 = vmatprep.subr.bf16.mxu0 %v2215
      %2267 = vmatpush1.bf16.msra.mxu0 %v2214
      %2268 = vmatprep.subr.bf16.mxu0 %v2219
      %2269 = vmatpush1.bf16.msra.mxu0 %v2218
      %2270 = vmatprep.subr.bf16.mxu0 0
      %2271 = vmatpush1.bf16.msra.mxu0 0
      %2272 = vmatprep.subr.bf16.mxu0 0
      %2273 = vmatpush1.bf16.msra.mxu0 0
      %2274 = vmatprep.subr.bf16.mxu0 0
      %2275 = vmatpush1.bf16.msra.mxu0 0
      %2276 = vmatprep.subr.bf16.mxu0 0
      %2277 = vmatpush1.bf16.msra.mxu0 0
      %2278 = vmatprep.subr.bf16.mxu0 0
      %2279 = vmatpush1.bf16.msra.mxu0 0
      %2280 = vmatprep.subr.bf16.mxu0 0
      %2281 = vmatpush1.bf16.msra.mxu0 0
      %2282 = vmatprep.subr.bf16.mxu0 0
      %2283 = vmatpush1.bf16.msra.mxu0 0
      %2284 = vmatprep.subr.bf16.mxu0 0
      %2285 = vmatpush1.bf16.msra.mxu0 0
      %2286 = vmatprep.mubr.bf16.mxu0 0
      %2287 = vmatmul.mubr.bf16.gmra.mrb[0].mxu0 %v2076
      %v2288 = vpop.f32.mrb[0].mxu0
      %v2289 = vadd.f32 %v2082, %v2288
      %v2290 = vpop.f32.mrb[0].mxu0
      %v2291 = vpop.f32.mrb[0].mxu0
      %v2292 = vpop.f32.mrb[0].mxu0
      %2293 = vdwg.mxu0
      %2294 = vmatprep.subr.bf16.mxu0 %v2193
      %2295 = vmatpush1.bf16.msra.mxu0 %v2192
      %2296 = vmatprep.subr.bf16.mxu0 %v2197
      %2297 = vmatpush1.bf16.msra.mxu0 %v2196
      %2298 = vmatprep.subr.bf16.mxu0 %v2201
      %2299 = vmatpush1.bf16.msra.mxu0 %v2200
      %2300 = vmatprep.subr.bf16.mxu0 %v2205
      %2301 = vmatpush1.bf16.msra.mxu0 %v2204
      %2302 = vmatprep.subr.bf16.mxu0 %v2209
      %2303 = vmatpush1.bf16.msra.mxu0 %v2208
      %2304 = vmatprep.subr.bf16.mxu0 %v2213
      %2305 = vmatpush1.bf16.msra.mxu0 %v2212
      %2306 = vmatprep.subr.bf16.mxu0 %v2217
      %2307 = vmatpush1.bf16.msra.mxu0 %v2216
      %2308 = vmatprep.subr.bf16.mxu0 %v2221
      %2309 = vmatpush1.bf16.msra.mxu0 %v2220
      %2310 = vmatprep.subr.bf16.mxu0 0
      %2311 = vmatpush1.bf16.msra.mxu0 0
      %2312 = vmatprep.subr.bf16.mxu0 0
      %2313 = vmatpush1.bf16.msra.mxu0 0
      %2314 = vmatprep.subr.bf16.mxu0 0
      %2315 = vmatpush1.bf16.msra.mxu0 0
      %2316 = vmatprep.subr.bf16.mxu0 0
      %2317 = vmatpush1.bf16.msra.mxu0 0
      %2318 = vmatprep.subr.bf16.mxu0 0
      %2319 = vmatpush1.bf16.msra.mxu0 0
      %2320 = vmatprep.subr.bf16.mxu0 0
      %2321 = vmatpush1.bf16.msra.mxu0 0
      %2322 = vmatprep.subr.bf16.mxu0 0
      %2323 = vmatpush1.bf16.msra.mxu0 0
      %2324 = vmatprep.subr.bf16.mxu0 0
      %2325 = vmatpush1.bf16.msra.mxu0 0
      %2326 = vmatprep.mubr.bf16.mxu0 0
      %2327 = vmatmul.mubr.bf16.gmra.mrb[0].mxu0 %v2076
      %v2328 = vpop.f32.mrb[0].mxu0
      %v2329 = vadd.f32 %v2086, %v2328
      %v2330 = vpop.f32.mrb[0].mxu0
      %v2331 = vadd.f32 %v2090, %v2330
      %v2332 = vpop.f32.mrb[0].mxu0
      %v2333 = vpop.f32.mrb[0].mxu0
      %2334 = vdwg.mxu0
      %v2335 = vxor.u32 %v2289, 2147483648
      %v2336 = vmul.f32 %v2335, 1.442695
      %v2337 = vpow.pop %v2336
      %v2338 = vadd.f32 %v2337, 1.0
      %v2339 = vrcp.pop %v2338
      %v2340 = vmul.f32 1.0, %v2339
      %v2341 = vtanh.pop %v2329
      %v2342 = vxor.u32 %v2331, 2147483648
      %v2343 = vmul.f32 %v2342, 1.442695
      %v2344 = vpow.pop %v2343
      %v2345 = vadd.f32 %v2344, 1.0
      %v2346 = vrcp.pop %v2345
      %v2347 = vmul.f32 1.0, %v2346
      %v2348 = vmul.f32 %v2340, %v2341
      %v2349 = vtanh.pop %v2348
      %v2350 = vmul.f32 %v2347, %v2349
      %v2351 = vmax.f32 %v2350, 0.0
      %v2352 = vld [vmem:[%s5] sm:$0xf]
      %v2353 = vld [vmem:[%s5 + $0x4] sm:$0xf]
      %v2354 = vld [vmem:[%s5 + $0x8] sm:$0xf]
      %v2355 = vld [vmem:[%s5 + $0xc] sm:$0xf]
      %v2356 = vld [vmem:[%s5 + $0x10] sm:$0xf]
      %v2357 = vld [vmem:[%s5 + $0x14] sm:$0xf]
      %v2358 = vld [vmem:[%s5 + $0x18] sm:$0xf]
      %v2359 = vld [vmem:[%s5 + $0x1c] sm:$0xf]
      %v2360 = vld [vmem:[%s5 + $0x20] sm:$0xf]
      %v2361 = vld [vmem:[%s5 + $0x24] sm:$0xf]
      %v2362 = vld [vmem:[%s5 + $0x28] sm:$0xf]
      %v2363 = vld [vmem:[%s5 + $0x2c] sm:$0xf]
      %v2364 = vld [vmem:[%s5 + $0x30] sm:$0xf]
      %v2365 = vld [vmem:[%s5 + $0x34] sm:$0xf]
      %v2366 = vld [vmem:[%s5 + $0x38] sm:$0xf]
      %v2367 = vld [vmem:[%s5 + $0x3c] sm:$0xf]
      %v2368 = vpack.c.bf16 %v2351, %v2351
      %v2369 = vld [vmem:[%s6] sm:$0x1]
      %v2371 = vlaneseq
      %v2372 = vshrl.u32 %v2371, 7
      %v2373 = vsub.s32 0, %v2372
      %v2374 = vrot.slane %v2369, %v2373
      %v2392 = vunpack.c.l.b16 %v2352
      %v2393 = vunpack.c.l.b16 %v2353
      %v2394 = vunpack.c.l.b16 %v2354
      %v2395 = vunpack.c.l.b16 %v2355
      %v2396 = vunpack.c.l.b16 %v2356
      %v2397 = vunpack.c.l.b16 %v2357
      %v2398 = vunpack.c.l.b16 %v2358
      %v2399 = vunpack.c.l.b16 %v2359
      %v2400 = vunpack.c.l.b16 %v2360
      %v2401 = vunpack.c.l.b16 %v2361
      %v2402 = vunpack.c.l.b16 %v2362
      %v2403 = vunpack.c.l.b16 %v2363
      %v2404 = vunpack.c.l.b16 %v2364
      %v2405 = vunpack.c.l.b16 %v2365
      %v2406 = vunpack.c.l.b16 %v2366
      %v2407 = vunpack.c.l.b16 %v2367
      %v2408 = vpack.c.b16 %v2393, %v2392
      %v2409 = vpack.c.b16 %v2395, %v2394
      %v2410 = vpack.c.b16 %v2397, %v2396
      %v2411 = vpack.c.b16 %v2399, %v2398
      %v2412 = vpack.c.b16 %v2401, %v2400
      %v2413 = vpack.c.b16 %v2403, %v2402
      %v2414 = vpack.c.b16 %v2405, %v2404
      %v2415 = vpack.c.b16 %v2407, %v2406
      %2424 = vmatprep.subr.bf16.mxu0 0
      %2425 = vmatpush1.bf16.msra.mxu0 %v2408
      %2426 = vmatprep.subr.bf16.mxu0 0
      %2427 = vmatpush1.bf16.msra.mxu0 %v2409
      %2428 = vmatprep.subr.bf16.mxu0 0
      %2429 = vmatpush1.bf16.msra.mxu0 %v2410
      %2430 = vmatprep.subr.bf16.mxu0 0
      %2431 = vmatpush1.bf16.msra.mxu0 %v2411
      %2432 = vmatprep.subr.bf16.mxu0 0
      %2433 = vmatpush1.bf16.msra.mxu0 %v2412
      %2434 = vmatprep.subr.bf16.mxu0 0
      %2435 = vmatpush1.bf16.msra.mxu0 %v2413
      %2436 = vmatprep.subr.bf16.mxu0 0
      %2437 = vmatpush1.bf16.msra.mxu0 %v2414
      %2438 = vmatprep.subr.bf16.mxu0 0
      %2439 = vmatpush1.bf16.msra.mxu0 %v2415
      %2440 = vmatprep.subr.bf16.mxu0 0
      %2441 = vmatpush1.bf16.msra.mxu0 0
      %2442 = vmatprep.subr.bf16.mxu0 0
      %2443 = vmatpush1.bf16.msra.mxu0 0
      %2444 = vmatprep.subr.bf16.mxu0 0
      %2445 = vmatpush1.bf16.msra.mxu0 0
      %2446 = vmatprep.subr.bf16.mxu0 0
      %2447 = vmatpush1.bf16.msra.mxu0 0
      %2448 = vmatprep.subr.bf16.mxu0 0
      %2449 = vmatpush1.bf16.msra.mxu0 0
      %2450 = vmatprep.subr.bf16.mxu0 0
      %2451 = vmatpush1.bf16.msra.mxu0 0
      %2452 = vmatprep.subr.bf16.mxu0 0
      %2453 = vmatpush1.bf16.msra.mxu0 0
      %2454 = vmatprep.subr.bf16.mxu0 0
      %2455 = vmatpush1.bf16.msra.mxu0 0
      %2456 = vmatprep.mubr.bf16.mxu0 0
      %2457 = vmatmul.mubr.bf16.gmra.mrb[0].mxu0 %v2368
      %v2458 = vpop.f32.mrb[0].mxu0
      %v2459 = vadd.f32 %v2374, %v2458
      %v2460 = vpop.f32.mrb[0].mxu0
      %v2461 = vpop.f32.mrb[0].mxu0
      %v2462 = vpop.f32.mrb[0].mxu0
      %2463 = vdwg.mxu0
      %v2464 = vmax.f32 %v2459, 0.0
      %v2465 = vld [vmem:[%s7] sm:$0xf]
      %v2466 = vld [vmem:[%s7 + $0x4] sm:$0xf]
      %v2467 = vld [vmem:[%s7 + $0x8] sm:$0xf]
      %v2468 = vld [vmem:[%s7 + $0xc] sm:$0xf]
      %v2469 = vpack.c.bf16 %v2464, %v2464
      %v2470 = vld [vmem:[%s8] sm:$0x1]
      %v2472 = vlaneseq
      %v2473 = vshrl.u32 %v2472, 7
      %v2474 = vsub.s32 0, %v2473
      %v2475 = vrot.slane %v2470, %v2474
      %v2481 = vunpack.c.l.b16 %v2465
      %v2482 = vunpack.c.l.b16 %v2466
      %v2483 = vunpack.c.l.b16 %v2467
      %v2484 = vunpack.c.l.b16 %v2468
      %v2485 = vpack.c.b16 %v2482, %v2481
      %v2486 = vpack.c.b16 %v2484, %v2483
      %vm2489 = vcmask 261120
      %v2491 = vsel %vm2489, %v2469, 0
      %2493 = vmatprep.subr.bf16.mxu0 0
      %2494 = vmatpush1.bf16.msra.mxu0 %v2485
      %2495 = vmatprep.subr.bf16.mxu0 0
      %2496 = vmatpush1.bf16.msra.mxu0 %v2486
      %2497 = vmatprep.subr.bf16.mxu0 0
      %2498 = vmatpush1.bf16.msra.mxu0 0
      %2499 = vmatprep.subr.bf16.mxu0 0
      %2500 = vmatpush1.bf16.msra.mxu0 0
      %2501 = vmatprep.subr.bf16.mxu0 0
      %2502 = vmatpush1.bf16.msra.mxu0 0
      %2503 = vmatprep.subr.bf16.mxu0 0
      %2504 = vmatpush1.bf16.msra.mxu0 0
      %2505 = vmatprep.subr.bf16.mxu0 0
      %2506 = vmatpush1.bf16.msra.mxu0 0
      %2507 = vmatprep.subr.bf16.mxu0 0
      %2508 = vmatpush1.bf16.msra.mxu0 0
      %2509 = vmatprep.subr.bf16.mxu0 0
      %2510 = vmatpush1.bf16.msra.mxu0 0
      %2511 = vmatprep.subr.bf16.mxu0 0
      %2512 = vmatpush1.bf16.msra.mxu0 0
      %2513 = vmatprep.subr.bf16.mxu0 0
      %2514 = vmatpush1.bf16.msra.mxu0 0
      %2515 = vmatprep.subr.bf16.mxu0 0
      %2516 = vmatpush1.bf16.msra.mxu0 0
      %2517 = vmatprep.subr.bf16.mxu0 0
      %2518 = vmatpush1.bf16.msra.mxu0 0
      %2519 = vmatprep.subr.bf16.mxu0 0
      %2520 = vmatpush1.bf16.msra.mxu0 0
      %2521 = vmatprep.subr.bf16.mxu0 0
      %2522 = vmatpush1.bf16.msra.mxu0 0
      %2523 = vmatprep.subr.bf16.mxu0 0
      %2524 = vmatpush1.bf16.msra.mxu0 0
      %2525 = vmatprep.mubr.bf16.mxu0 0
      %2526 = vmatmul.mubr.bf16.gmra.mrb[0].mxu0 %v2491
      %v2527 = vpop.f32.mrb[0].mxu0
      %v2528 = vadd.f32 %v2475, %v2527
      %v2529 = vpop.f32.mrb[0].mxu0
      %v2530 = vpop.f32.mrb[0].mxu0
      %v2531 = vpop.f32.mrb[0].mxu0
      %2532 = vdwg.mxu0
      %vm2533 = vcmask 58368
      %v2534 = vsel %vm2533, %v2528, -inf
      %v2535 = vrot.slane %v2534, 4
      %v2536 = vmax.f32 %v2534, %v2535
      %v2537 = vrot.slane %v2536, 2
      %v2538 = vmax.f32 %v2536, %v2537
      %v2539 = vrot.slane %v2538, 1
      %v2540 = vmax.f32 %v2538, %v2539
      %v2541 = vsub.f32 %v2528, %v2540
      %v2542 = vmul.f32 %v2541, 1.442695
      %v2543 = vpow.pop %v2542
      %v2544 = vsel %vm2533, %v2543, 0.0
      %v2545 = vrot.slane %v2544, 4
      %v2546 = vadd.f32 %v2544, %v2545
      %v2547 = vrot.slane %v2546, 2
      %v2548 = vadd.f32 %v2546, %v2547
      %v2549 = vrot.slane %v2548, 1
      %v2550 = vadd.f32 %v2548, %v2549
      %v2551 = vrcp.pop %v2550
      %v2552 = vmul.f32 %v2543, %v2551
      %2553 = vst.msk [vmem:[#allocation3] sm:$0x3] %vm2533, %v2552
    $region45: #{smol_actor_forward.5} parent=1 // pred_fallthru
      _
    // Predicated region
    $region46: #{smol_actor_forward.5} parent=1 // pred_check
      _
    $region47: #{smol_actor_forward.5} parent=1 // pred_check_branch
      %2555 = sbr.rel (0) target = $region49
    $region48: #{smol_actor_forward.5} parent=1 // pred_region
      %s2557 = ssub.s32 32, 32
      %2558 = vsyncadd [#allocation4], %s2557
      %s2560 = sshll.u32 [#allocation3], 4
      %s2561 = int_to_ptr.vmem [resolvable:$true] %s2560
      %2563 = dma.vmem_to_hbm [thread:$0]  %s2561, 32, %s9, [#allocation4]
    $region49: #{smol_actor_forward.5} parent=1 // pred_fallthru
      _
    // Predicated region
    $region50: #{smol_actor_forward.5} parent=1 // pred_check
      _
    $region51: #{smol_actor_forward.5} parent=1 // pred_check_branch
      %2565 = sbr.rel (0) target = $region53
    $region52: #{smol_actor_forward.5} parent=1 // pred_region
      %2566 = dma.done [#allocation4], 32
    $region53: #{smol_actor_forward.5} parent=1 // pred_fallthru
      _
    %2567 = vsyncpa [#allocation4], 1

</llo_original>
